<compile_context>
chip_gen: v7x
topology: tpu7x:2x2x1
jax: 0.10.0
libtpu: 0.0.40
codegen_flags: <defaults>
</compile_context>

<pallas_src>
import functools

import numpy as np
import jax
import jax.numpy as jnp
from jax import lax
from jax.experimental import pallas as pl
from jax.experimental.pallas import tpu as pltpu

KSIZE = 7
PAD = 3


def _round_up(x, m):
    return (x + m - 1) // m * m


# ----------------------------------------------------------------------------
# Fused kernel: one (batch, row-strip) tile per grid step.
# ----------------------------------------------------------------------------
def fused_convnext_kernel(xpad_ref, dww_ref, dwb_ref, lnw_ref, lnb_ref,
                          w1_ref, b1_ref, w2_ref, b2_ref, gamma_ref,
                          wf_ref, bf_ref, out_ref, *, eps, c_real, tile_h):
    # xpad_ref: (1, Hq+6, Wpq, Cp) bf16     out_ref: (1, tile_h, Wq, Dp) f32
    _, _, Wq, Dp = out_ref.shape
    Wpq = xpad_ref.shape[2]
    Cp = xpad_ref.shape[3]
    halo_rows = tile_h + 2 * PAD

    # Small parameters, read once per strip.
    dww = dww_ref[...]                                  # (49, Cp) f32
    dwb = dwb_ref[...]                                  # (1, Cp)
    lnw = lnw_ref[...]
    lnb = lnb_ref[...]
    b1 = b1_ref[...]
    b2 = b2_ref[...]
    gamma = gamma_ref[...]
    bf = bf_ref[...]
    inv_c = np.float32(1.0 / c_real)
    inv_sqrt2 = np.float32(1.0 / np.sqrt(2.0))

    # Strip + 3-row halo, loaded once (W start aligned, lane-dense C), f32.
    r0 = pl.multiple_of(pl.program_id(1) * tile_h, tile_h)
    region = xpad_ref[0, pl.ds(r0, halo_rows), :, :].astype(jnp.float32)
    flat = region.reshape(halo_rows * Wpq, Cp)          # layout-free (Wpq % 8 == 0)
    total = halo_rows * Wpq

    # Depthwise 7x7 conv: 7 sublane rolls (one per kw) + free leading-dim row
    # slices for kh; accumulate in f32.
    acc = jnp.zeros((tile_h, Wq, Cp), jnp.float32)
    resid = None
    for kw in range(KSIZE):
        if kw == 0:
            shifted = region
        else:
            # roll by (total - kw) == shift left by kw; columns [0, Wq) never
            # touch wrapped data because Wpq >= Wq + 6.
            shifted = pltpu.roll(flat, total - kw, 0).reshape(halo_rows, Wpq, Cp)
        sub = shifted[:, :Wq, :]                        # aligned slice (start 0)
        for kh in range(KSIZE):
            tap = sub[kh:kh + tile_h, :, :]
            if kh == PAD and kw == PAD:
                resid = tap                             # original input window
            acc = acc + tap * dww[kh * KSIZE + kw]

    xd = acc.reshape(tile_h * Wq, Cp) + dwb             # tokens (T, Cp)

    # LayerNorm over the real C channels (padded channels stay exactly 0).
    mean = jnp.sum(xd, axis=-1, keepdims=True) * inv_c
    ex2 = jnp.sum(xd * xd, axis=-1, keepdims=True) * inv_c
    var = jnp.maximum(ex2 - mean * mean, 0.0)           # biased, like F.layer_norm
    xn = (xd - mean) * lax.rsqrt(var + eps) * lnw + lnb

    # MLP: Linear -> exact GELU -> Linear -> layer scale.
    # bf16 MXU operands, f32 accumulation / adds.
    h = jnp.dot(xn.astype(jnp.bfloat16), w1_ref[...],
                preferred_element_type=jnp.float32) + b1
    h = 0.5 * h * (1.0 + lax.erf(h * inv_sqrt2))
    y = jnp.dot(h.astype(jnp.bfloat16), w2_ref[...],
                preferred_element_type=jnp.float32) + b2
    y = gamma * y

    # Residual with the original input (centre tap window), in f32.
    r = resid.reshape(tile_h * Wq, Cp) + y

    # Final 1x1 conv.
    o = jnp.dot(r.astype(jnp.bfloat16), wf_ref[...],
                preferred_element_type=jnp.float32) + bf
    out_ref[0, :, :, :] = o.reshape(tile_h, Wq, Dp).astype(out_ref.dtype)


# ----------------------------------------------------------------------------
# Wrapper
# ----------------------------------------------------------------------------
def convnext_block(x_nchw, params, *, eps=1e-6, tile_h=8):
    x = jnp.transpose(x_nchw, (0, 2, 3, 1))             # NCHW -> NHWC
    N, H, W, C = x.shape
    Dh = params["w1"].shape[1]
    Dout = params["wf"].shape[1]

    # Lane-dense padded channel dims (no-op for real SEA-RAFT sizes).
    Cp = _round_up(C, 128)
    Dhp = _round_up(Dh, 128)
    Dp = _round_up(Dout, 128)

    Hq = _round_up(H, tile_h)                           # rows, multiple of strip
    Wq = _round_up(W, 8)                                # sublane-aligned width
    Wpq = _round_up(Wq + 2 * PAD, 8)                    # stored padded width
    n_strips = Hq // tile_h

    # bf16 activation stream; single pad = spatial halo + alignment + channels.
    xpad = jnp.pad(x.astype(jnp.bfloat16),
                   ((0, 0), (PAD, Hq - H + PAD),
                    (PAD, Wpq - PAD - W), (0, Cp - C)))

    def padw(a, shape, dtype=jnp.float32):
        return jnp.pad(a, [(0, t - s) for s, t in zip(a.shape, shape)]).astype(dtype)

    dw_w = padw(params["dw_w"].reshape(KSIZE * KSIZE, C), (KSIZE * KSIZE, Cp))
    dw_b = padw(params["dw_b"], (1, Cp))
    ln_w = padw(params["ln_w"], (1, Cp))
    ln_b = padw(params["ln_b"], (1, Cp))
    w1 = padw(params["w1"], (Cp, Dhp), jnp.bfloat16)
    b1 = padw(params["b1"], (1, Dhp))
    w2 = padw(params["w2"], (Dhp, Cp), jnp.bfloat16)
    b2 = padw(params["b2"], (1, Cp))
    gamma = padw(params["gamma"], (1, Cp))
    wf = padw(params["wf"], (Cp, Dp), jnp.bfloat16)
    bf = padw(params["bf"], (1, Dp))

    # Advisory cost estimate + VMEM budget (cap below v7x's 64 MiB).
    tokens = N * Hq * Wq
    flops = tokens * (2 * KSIZE * KSIZE * Cp
                      + 2 * (Cp * Dhp + Dhp * Cp + Cp * Dp) + 12 * Cp)
    transcendentals = tokens * (Dhp + 1)
    weight_bytes = (2 * (Cp * Dhp + Dhp * Cp + Cp * Dp)
                    + 4 * (KSIZE * KSIZE * Cp + 6 * Cp + Dhp + Dp))
    bytes_accessed = (2 * N * (Hq + 2 * PAD) * Wpq * Cp
                      + 4 * N * Hq * Wq * Dp + weight_bytes)
    in_block = (Hq + 2 * PAD) * Wpq * Cp * 2            # bf16 full-image block
    out_block = tile_h * Wq * Dp * 4                    # f32 strip block
    vmem_limit = int(max(min(2 * in_block + 2 * out_block + weight_bytes
                             + (8 << 20), 48 << 20), 32 << 20))

    const2 = lambda n, s: (0, 0)
    kern = functools.partial(fused_convnext_kernel, eps=eps, c_real=C,
                             tile_h=tile_h)

    out = pl.pallas_call(
        kern,
        out_shape=jax.ShapeDtypeStruct((N, Hq, Wq, Dp), jnp.float32),
        grid=(N, n_strips),
        in_specs=[
            # Full padded image per batch element; block index constant across
            # the strip axis -> fetched once per batch element.
            pl.BlockSpec((1, Hq + 2 * PAD, Wpq, Cp), lambda n, s: (n, 0, 0, 0)),
            pl.BlockSpec((KSIZE * KSIZE, Cp), const2),   # dw weight (f32)
            pl.BlockSpec((1, Cp), const2),               # dw bias
            pl.BlockSpec((1, Cp), const2),               # ln weight
            pl.BlockSpec((1, Cp), const2),               # ln bias
            pl.BlockSpec((Cp, Dhp), const2),             # w1 (bf16)
            pl.BlockSpec((1, Dhp), const2),              # b1
            pl.BlockSpec((Dhp, Cp), const2),             # w2 (bf16)
            pl.BlockSpec((1, Cp), const2),               # b2
            pl.BlockSpec((1, Cp), const2),               # gamma
            pl.BlockSpec((Cp, Dp), const2),              # wf (bf16)
            pl.BlockSpec((1, Dp), const2),               # bf
        ],
        out_specs=pl.BlockSpec((1, tile_h, Wq, Dp), lambda n, s: (n, s, 0, 0)),
        compiler_params=pltpu.CompilerParams(
            dimension_semantics=("parallel", "parallel"),
            vmem_limit_bytes=vmem_limit),
        cost_estimate=pl.CostEstimate(flops=flops,
                                      transcendentals=transcendentals,
                                      bytes_accessed=bytes_accessed),
    )(xpad, dw_w, dw_b, ln_w, ln_b, w1, b1, w2, b2, gamma, wf, bf)

    out = out[:, :H, :W, :Dout]
    return jnp.transpose(out, (0, 3, 1, 2))             # NHWC -> NCHW


# ----------------------------------------------------------------------------
# Pure-JAX reference (same semantics as the PyTorch ConvNextBlock.forward)
# ----------------------------------------------------------------------------
def convnext_block_ref(x_nchw, params, eps=1e-6):
    x = jnp.transpose(x_nchw, (0, 2, 3, 1))
    C = x.shape[-1]
    rhs = params["dw_w"].reshape(KSIZE, KSIZE, 1, C)    # HWIO, depthwise
    dw = lax.conv_general_dilated(
        x, rhs, window_strides=(1, 1), padding=((PAD, PAD), (PAD, PAD)),
        dimension_numbers=("NHWC", "HWIO", "NHWC"),
        feature_group_count=C) + params["dw_b"]
    mean = dw.mean(-1, keepdims=True)
    var = ((dw - mean) ** 2).mean(-1, keepdims=True)
    xn = (dw - mean) / jnp.sqrt(var + eps) * params["ln_w"] + params["ln_b"]
    h = xn @ params["w1"] + params["b1"]
    h = 0.5 * h * (1.0 + lax.erf(h / np.sqrt(2.0)))
    y = h @ params["w2"] + params["b2"]
    y = params["gamma"] * y
    r = x + y
    out = r @ params["wf"] + params["bf"]
    return jnp.transpose(out, (0, 3, 1, 2))


def make_params(key, dim, output_dim):
    ks = jax.random.split(key, 11)
    dh = 4 * output_dim
    nrm = lambda k, s, scale=0.1: (scale * jax.random.normal(k, s)).astype(jnp.float32)
    return {
        # nn.Conv2d(dim, dim, 7, groups=dim): weight (dim,1,7,7) stored as (7,7,dim)
        "dw_w": nrm(ks[0], (KSIZE, KSIZE, dim)),
        "dw_b": nrm(ks[1], (1, dim)),
        # LayerNorm(dim)
        "ln_w": (1.0 + nrm(ks[2], (1, dim))).astype(jnp.float32),
        "ln_b": nrm(ks[3], (1, dim)),
        # nn.Linear(dim, 4*output_dim): weight.T stored as (dim, 4*output_dim)
        "w1": nrm(ks[4], (dim, dh)),
        "b1": nrm(ks[5], (1, dh)),
        # nn.Linear(4*output_dim, dim)
        "w2": nrm(ks[6], (dh, dim)),
        "b2": nrm(ks[7], (1, dim)),
        # layer scale gamma (dim,)
        "gamma": nrm(ks[8], (1, dim), scale=1.0),
        # nn.Conv2d(dim, output_dim, 1): weight (output_dim, dim, 1, 1) stored as (dim, output_dim)
        "wf": nrm(ks[9], (dim, output_dim)),
        "bf": nrm(ks[10], (1, output_dim)),
    }


if __name__ == "__main__":
    key = jax.random.PRNGKey(0)
    kx, kp = jax.random.split(key)

    N, dim, H, W = 2, 4, 16, 16
    output_dim = 8

    x = jax.random.normal(kx, (N, dim, H, W), dtype=jnp.float32)   # NCHW like PyTorch
    params = make_params(kp, dim, output_dim)

    out = jax.block_until_ready(convnext_block(x, params))
    assert out.shape == (N, output_dim, H, W), out.shape

    ref = jax.block_until_ready(convnext_block_ref(x, params))
    # bf16 activation feed + bf16 MXU operands (f32 accumulation) -> relaxed tol.
    np.testing.assert_allclose(np.asarray(out), np.asarray(ref), rtol=2e-2, atol=2e-2)

    print("KERNEL_OK")
</pallas_src>

<mosaic_0001>
module attributes {stable_mosaic.version = 11 : i64} {
  func.func @fused_convnext_kernel(%arg0: i32, %arg1: i32, %arg2: memref<1x22x24x128xbf16, #tpu.memory_space<vmem>>, %arg3: memref<49x128xf32, #tpu.memory_space<vmem>>, %arg4: memref<1x128xf32, #tpu.memory_space<vmem>>, %arg5: memref<1x128xf32, #tpu.memory_space<vmem>>, %arg6: memref<1x128xf32, #tpu.memory_space<vmem>>, %arg7: memref<128x128xbf16, #tpu.memory_space<vmem>>, %arg8: memref<1x128xf32, #tpu.memory_space<vmem>>, %arg9: memref<128x128xbf16, #tpu.memory_space<vmem>>, %arg10: memref<1x128xf32, #tpu.memory_space<vmem>>, %arg11: memref<1x128xf32, #tpu.memory_space<vmem>>, %arg12: memref<128x128xbf16, #tpu.memory_space<vmem>>, %arg13: memref<1x128xf32, #tpu.memory_space<vmem>>, %arg14: memref<1x8x16x128xf32, #tpu.memory_space<vmem>>) attributes {dimension_semantics = [#tpu.dimension_semantics<parallel>, #tpu.dimension_semantics<parallel>], iteration_bounds = array<i64: 2, 2>, scalar_prefetch = 0 : i64, scratch_operands = 0 : i64, tpu.core_type = #tpu.core_type<tc>, window_params = [{transform_indices = @transform_0, window_bounds = array<i64: 1, 22, 24, 128>}, {pipeline_mode = #tpu.pipeline_mode<synchronous>, transform_indices = @transform_1, window_bounds = array<i64: 49, 128>}, {pipeline_mode = #tpu.pipeline_mode<synchronous>, transform_indices = @transform_2, window_bounds = array<i64: 1, 128>}, {pipeline_mode = #tpu.pipeline_mode<synchronous>, transform_indices = @transform_3, window_bounds = array<i64: 1, 128>}, {pipeline_mode = #tpu.pipeline_mode<synchronous>, transform_indices = @transform_4, window_bounds = array<i64: 1, 128>}, {pipeline_mode = #tpu.pipeline_mode<synchronous>, transform_indices = @transform_5, window_bounds = array<i64: 128, 128>}, {pipeline_mode = #tpu.pipeline_mode<synchronous>, transform_indices = @transform_6, window_bounds = array<i64: 1, 128>}, {pipeline_mode = #tpu.pipeline_mode<synchronous>, transform_indices = @transform_7, window_bounds = array<i64: 128, 128>}, {pipeline_mode = #tpu.pipeline_mode<synchronous>, transform_indices = @transform_8, window_bounds = array<i64: 1, 128>}, {pipeline_mode = #tpu.pipeline_mode<synchronous>, transform_indices = @transform_9, window_bounds = array<i64: 1, 128>}, {pipeline_mode = #tpu.pipeline_mode<synchronous>, transform_indices = @transform_10, window_bounds = array<i64: 128, 128>}, {pipeline_mode = #tpu.pipeline_mode<synchronous>, transform_indices = @transform_11, window_bounds = array<i64: 1, 128>}, {transform_indices = @transform_12, window_bounds = array<i64: 1, 8, 16, 128>}]} {
    %c0 = arith.constant 0 : index
    %c0_0 = arith.constant 0 : index
    %0 = vector.load %arg3[%c0, %c0_0] : memref<49x128xf32, #tpu.memory_space<vmem>>, vector<49x128xf32>
    %c0_1 = arith.constant 0 : index
    %c0_2 = arith.constant 0 : index
    %1 = vector.load %arg4[%c0_1, %c0_2] : memref<1x128xf32, #tpu.memory_space<vmem>>, vector<1x128xf32>
    %c0_3 = arith.constant 0 : index
    %c0_4 = arith.constant 0 : index
    %2 = vector.load %arg5[%c0_3, %c0_4] : memref<1x128xf32, #tpu.memory_space<vmem>>, vector<1x128xf32>
    %c0_5 = arith.constant 0 : index
    %c0_6 = arith.constant 0 : index
    %3 = vector.load %arg6[%c0_5, %c0_6] : memref<1x128xf32, #tpu.memory_space<vmem>>, vector<1x128xf32>
    %c0_7 = arith.constant 0 : index
    %c0_8 = arith.constant 0 : index
    %4 = vector.load %arg8[%c0_7, %c0_8] : memref<1x128xf32, #tpu.memory_space<vmem>>, vector<1x128xf32>
    %c0_9 = arith.constant 0 : index
    %c0_10 = arith.constant 0 : index
    %5 = vector.load %arg10[%c0_9, %c0_10] : memref<1x128xf32, #tpu.memory_space<vmem>>, vector<1x128xf32>
    %c0_11 = arith.constant 0 : index
    %c0_12 = arith.constant 0 : index
    %6 = vector.load %arg11[%c0_11, %c0_12] : memref<1x128xf32, #tpu.memory_space<vmem>>, vector<1x128xf32>
    %c0_13 = arith.constant 0 : index
    %c0_14 = arith.constant 0 : index
    %7 = vector.load %arg13[%c0_13, %c0_14] : memref<1x128xf32, #tpu.memory_space<vmem>>, vector<1x128xf32>
    %c8_i32 = arith.constant 8 : i32
    %8 = arith.muli %arg1, %c8_i32 : i32
    %9 = tpu.assume_multiple %8, 8 : i32
    %c0_15 = arith.constant 0 : index
    %10 = arith.index_cast %9 : i32 to index
    %c0_16 = arith.constant 0 : index
    %c0_17 = arith.constant 0 : index
    %11 = vector.load %arg2[%c0_15, %10, %c0_16, %c0_17] : memref<1x22x24x128xbf16, #tpu.memory_space<vmem>>, vector<1x14x24x128xbf16>
    %12 = vector.shape_cast %11 : vector<1x14x24x128xbf16> to vector<14x24x128xbf16>
    %13 = arith.extf %12 : vector<14x24x128xbf16> to vector<14x24x128xf32>
    %14 = vector.shape_cast %13 : vector<14x24x128xf32> to vector<336x128xf32>
    %cst = arith.constant 0.000000e+00 : f32
    %15 = vector.broadcast %cst : f32 to vector<8x16x128xf32>
    %16 = vector.extract_strided_slice %13 {offsets = [0, 0, 0], sizes = [14, 16, 128], strides = [1, 1, 1]} : vector<14x24x128xf32> to vector<14x16x128xf32>
    %17 = vector.extract_strided_slice %16 {offsets = [0, 0, 0], sizes = [8, 16, 128], strides = [1, 1, 1]} : vector<14x16x128xf32> to vector<8x16x128xf32>
    %18 = vector.extract_strided_slice %0 {offsets = [0, 0], sizes = [1, 128], strides = [1, 1]} : vector<49x128xf32> to vector<1x128xf32>
    %19 = vector.shape_cast %18 : vector<1x128xf32> to vector<128xf32>
    %20 = vector.shape_cast %19 : vector<128xf32> to vector<1x1x128xf32>
    %21 = vector.broadcast %20 : vector<1x1x128xf32> to vector<8x16x128xf32>
    %22 = arith.mulf %17, %21 : vector<8x16x128xf32>
    %23 = arith.addf %15, %22 : vector<8x16x128xf32>
    %24 = vector.extract_strided_slice %16 {offsets = [1, 0, 0], sizes = [8, 16, 128], strides = [1, 1, 1]} : vector<14x16x128xf32> to vector<8x16x128xf32>
    %25 = vector.extract_strided_slice %0 {offsets = [7, 0], sizes = [1, 128], strides = [1, 1]} : vector<49x128xf32> to vector<1x128xf32>
    %26 = vector.shape_cast %25 : vector<1x128xf32> to vector<128xf32>
    %27 = vector.shape_cast %26 : vector<128xf32> to vector<1x1x128xf32>
    %28 = vector.broadcast %27 : vector<1x1x128xf32> to vector<8x16x128xf32>
    %29 = arith.mulf %24, %28 : vector<8x16x128xf32>
    %30 = arith.addf %23, %29 : vector<8x16x128xf32>
    %31 = vector.extract_strided_slice %16 {offsets = [2, 0, 0], sizes = [8, 16, 128], strides = [1, 1, 1]} : vector<14x16x128xf32> to vector<8x16x128xf32>
    %32 = vector.extract_strided_slice %0 {offsets = [14, 0], sizes = [1, 128], strides = [1, 1]} : vector<49x128xf32> to vector<1x128xf32>
    %33 = vector.shape_cast %32 : vector<1x128xf32> to vector<128xf32>
    %34 = vector.shape_cast %33 : vector<128xf32> to vector<1x1x128xf32>
    %35 = vector.broadcast %34 : vector<1x1x128xf32> to vector<8x16x128xf32>
    %36 = arith.mulf %31, %35 : vector<8x16x128xf32>
    %37 = arith.addf %30, %36 : vector<8x16x128xf32>
    %38 = vector.extract_strided_slice %16 {offsets = [3, 0, 0], sizes = [8, 16, 128], strides = [1, 1, 1]} : vector<14x16x128xf32> to vector<8x16x128xf32>
    %39 = vector.extract_strided_slice %0 {offsets = [21, 0], sizes = [1, 128], strides = [1, 1]} : vector<49x128xf32> to vector<1x128xf32>
    %40 = vector.shape_cast %39 : vector<1x128xf32> to vector<128xf32>
    %41 = vector.shape_cast %40 : vector<128xf32> to vector<1x1x128xf32>
    %42 = vector.broadcast %41 : vector<1x1x128xf32> to vector<8x16x128xf32>
    %43 = arith.mulf %38, %42 : vector<8x16x128xf32>
    %44 = arith.addf %37, %43 : vector<8x16x128xf32>
    %45 = vector.extract_strided_slice %16 {offsets = [4, 0, 0], sizes = [8, 16, 128], strides = [1, 1, 1]} : vector<14x16x128xf32> to vector<8x16x128xf32>
    %46 = vector.extract_strided_slice %0 {offsets = [28, 0], sizes = [1, 128], strides = [1, 1]} : vector<49x128xf32> to vector<1x128xf32>
    %47 = vector.shape_cast %46 : vector<1x128xf32> to vector<128xf32>
    %48 = vector.shape_cast %47 : vector<128xf32> to vector<1x1x128xf32>
    %49 = vector.broadcast %48 : vector<1x1x128xf32> to vector<8x16x128xf32>
    %50 = arith.mulf %45, %49 : vector<8x16x128xf32>
    %51 = arith.addf %44, %50 : vector<8x16x128xf32>
    %52 = vector.extract_strided_slice %16 {offsets = [5, 0, 0], sizes = [8, 16, 128], strides = [1, 1, 1]} : vector<14x16x128xf32> to vector<8x16x128xf32>
    %53 = vector.extract_strided_slice %0 {offsets = [35, 0], sizes = [1, 128], strides = [1, 1]} : vector<49x128xf32> to vector<1x128xf32>
    %54 = vector.shape_cast %53 : vector<1x128xf32> to vector<128xf32>
    %55 = vector.shape_cast %54 : vector<128xf32> to vector<1x1x128xf32>
    %56 = vector.broadcast %55 : vector<1x1x128xf32> to vector<8x16x128xf32>
    %57 = arith.mulf %52, %56 : vector<8x16x128xf32>
    %58 = arith.addf %51, %57 : vector<8x16x128xf32>
    %59 = vector.extract_strided_slice %16 {offsets = [6, 0, 0], sizes = [8, 16, 128], strides = [1, 1, 1]} : vector<14x16x128xf32> to vector<8x16x128xf32>
    %60 = vector.extract_strided_slice %0 {offsets = [42, 0], sizes = [1, 128], strides = [1, 1]} : vector<49x128xf32> to vector<1x128xf32>
    %61 = vector.shape_cast %60 : vector<1x128xf32> to vector<128xf32>
    %62 = vector.shape_cast %61 : vector<128xf32> to vector<1x1x128xf32>
    %63 = vector.broadcast %62 : vector<1x1x128xf32> to vector<8x16x128xf32>
    %64 = arith.mulf %59, %63 : vector<8x16x128xf32>
    %65 = arith.addf %58, %64 : vector<8x16x128xf32>
    %c335_i32 = arith.constant 335 : i32
    %66 = tpu.dynamic_rotate %14 by %c335_i32 dim 0 : vector<336x128xf32>, i32 -> vector<336x128xf32>
    %67 = vector.shape_cast %66 : vector<336x128xf32> to vector<14x24x128xf32>
    %68 = vector.extract_strided_slice %67 {offsets = [0, 0, 0], sizes = [14, 16, 128], strides = [1, 1, 1]} : vector<14x24x128xf32> to vector<14x16x128xf32>
    %69 = vector.extract_strided_slice %68 {offsets = [0, 0, 0], sizes = [8, 16, 128], strides = [1, 1, 1]} : vector<14x16x128xf32> to vector<8x16x128xf32>
    %70 = vector.extract_strided_slice %0 {offsets = [1, 0], sizes = [1, 128], strides = [1, 1]} : vector<49x128xf32> to vector<1x128xf32>
    %71 = vector.shape_cast %70 : vector<1x128xf32> to vector<128xf32>
    %72 = vector.shape_cast %71 : vector<128xf32> to vector<1x1x128xf32>
    %73 = vector.broadcast %72 : vector<1x1x128xf32> to vector<8x16x128xf32>
    %74 = arith.mulf %69, %73 : vector<8x16x128xf32>
    %75 = arith.addf %65, %74 : vector<8x16x128xf32>
    %76 = vector.extract_strided_slice %68 {offsets = [1, 0, 0], sizes = [8, 16, 128], strides = [1, 1, 1]} : vector<14x16x128xf32> to vector<8x16x128xf32>
    %77 = vector.extract_strided_slice %0 {offsets = [8, 0], sizes = [1, 128], strides = [1, 1]} : vector<49x128xf32> to vector<1x128xf32>
    %78 = vector.shape_cast %77 : vector<1x128xf32> to vector<128xf32>
    %79 = vector.shape_cast %78 : vector<128xf32> to vector<1x1x128xf32>
    %80 = vector.broadcast %79 : vector<1x1x128xf32> to vector<8x16x128xf32>
    %81 = arith.mulf %76, %80 : vector<8x16x128xf32>
    %82 = arith.addf %75, %81 : vector<8x16x128xf32>
    %83 = vector.extract_strided_slice %68 {offsets = [2, 0, 0], sizes = [8, 16, 128], strides = [1, 1, 1]} : vector<14x16x128xf32> to vector<8x16x128xf32>
    %84 = vector.extract_strided_slice %0 {offsets = [15, 0], sizes = [1, 128], strides = [1, 1]} : vector<49x128xf32> to vector<1x128xf32>
    %85 = vector.shape_cast %84 : vector<1x128xf32> to vector<128xf32>
    %86 = vector.shape_cast %85 : vector<128xf32> to vector<1x1x128xf32>
    %87 = vector.broadcast %86 : vector<1x1x128xf32> to vector<8x16x128xf32>
    %88 = arith.mulf %83, %87 : vector<8x16x128xf32>
    %89 = arith.addf %82, %88 : vector<8x16x128xf32>
    %90 = vector.extract_strided_slice %68 {offsets = [3, 0, 0], sizes = [8, 16, 128], strides = [1, 1, 1]} : vector<14x16x128xf32> to vector<8x16x128xf32>
    %91 = vector.extract_strided_slice %0 {offsets = [22, 0], sizes = [1, 128], strides = [1, 1]} : vector<49x128xf32> to vector<1x128xf32>
    %92 = vector.shape_cast %91 : vector<1x128xf32> to vector<128xf32>
    %93 = vector.shape_cast %92 : vector<128xf32> to vector<1x1x128xf32>
    %94 = vector.broadcast %93 : vector<1x1x128xf32> to vector<8x16x128xf32>
    %95 = arith.mulf %90, %94 : vector<8x16x128xf32>
    %96 = arith.addf %89, %95 : vector<8x16x128xf32>
    %97 = vector.extract_strided_slice %68 {offsets = [4, 0, 0], sizes = [8, 16, 128], strides = [1, 1, 1]} : vector<14x16x128xf32> to vector<8x16x128xf32>
    %98 = vector.extract_strided_slice %0 {offsets = [29, 0], sizes = [1, 128], strides = [1, 1]} : vector<49x128xf32> to vector<1x128xf32>
    %99 = vector.shape_cast %98 : vector<1x128xf32> to vector<128xf32>
    %100 = vector.shape_cast %99 : vector<128xf32> to vector<1x1x128xf32>
    %101 = vector.broadcast %100 : vector<1x1x128xf32> to vector<8x16x128xf32>
    %102 = arith.mulf %97, %101 : vector<8x16x128xf32>
    %103 = arith.addf %96, %102 : vector<8x16x128xf32>
    %104 = vector.extract_strided_slice %68 {offsets = [5, 0, 0], sizes = [8, 16, 128], strides = [1, 1, 1]} : vector<14x16x128xf32> to vector<8x16x128xf32>
    %105 = vector.extract_strided_slice %0 {offsets = [36, 0], sizes = [1, 128], strides = [1, 1]} : vector<49x128xf32> to vector<1x128xf32>
    %106 = vector.shape_cast %105 : vector<1x128xf32> to vector<128xf32>
    %107 = vector.shape_cast %106 : vector<128xf32> to vector<1x1x128xf32>
    %108 = vector.broadcast %107 : vector<1x1x128xf32> to vector<8x16x128xf32>
    %109 = arith.mulf %104, %108 : vector<8x16x128xf32>
    %110 = arith.addf %103, %109 : vector<8x16x128xf32>
    %111 = vector.extract_strided_slice %68 {offsets = [6, 0, 0], sizes = [8, 16, 128], strides = [1, 1, 1]} : vector<14x16x128xf32> to vector<8x16x128xf32>
    %112 = vector.extract_strided_slice %0 {offsets = [43, 0], sizes = [1, 128], strides = [1, 1]} : vector<49x128xf32> to vector<1x128xf32>
    %113 = vector.shape_cast %112 : vector<1x128xf32> to vector<128xf32>
    %114 = vector.shape_cast %113 : vector<128xf32> to vector<1x1x128xf32>
    %115 = vector.broadcast %114 : vector<1x1x128xf32> to vector<8x16x128xf32>
    %116 = arith.mulf %111, %115 : vector<8x16x128xf32>
    %117 = arith.addf %110, %116 : vector<8x16x128xf32>
    %c334_i32 = arith.constant 334 : i32
    %118 = tpu.dynamic_rotate %14 by %c334_i32 dim 0 : vector<336x128xf32>, i32 -> vector<336x128xf32>
    %119 = vector.shape_cast %118 : vector<336x128xf32> to vector<14x24x128xf32>
    %120 = vector.extract_strided_slice %119 {offsets = [0, 0, 0], sizes = [14, 16, 128], strides = [1, 1, 1]} : vector<14x24x128xf32> to vector<14x16x128xf32>
    %121 = vector.extract_strided_slice %120 {offsets = [0, 0, 0], sizes = [8, 16, 128], strides = [1, 1, 1]} : vector<14x16x128xf32> to vector<8x16x128xf32>
    %122 = vector.extract_strided_slice %0 {offsets = [2, 0], sizes = [1, 128], strides = [1, 1]} : vector<49x128xf32> to vector<1x128xf32>
    %123 = vector.shape_cast %122 : vector<1x128xf32> to vector<128xf32>
    %124 = vector.shape_cast %123 : vector<128xf32> to vector<1x1x128xf32>
    %125 = vector.broadcast %124 : vector<1x1x128xf32> to vector<8x16x128xf32>
    %126 = arith.mulf %121, %125 : vector<8x16x128xf32>
    %127 = arith.addf %117, %126 : vector<8x16x128xf32>
    %128 = vector.extract_strided_slice %120 {offsets = [1, 0, 0], sizes = [8, 16, 128], strides = [1, 1, 1]} : vector<14x16x128xf32> to vector<8x16x128xf32>
    %129 = vector.extract_strided_slice %0 {offsets = [9, 0], sizes = [1, 128], strides = [1, 1]} : vector<49x128xf32> to vector<1x128xf32>
    %130 = vector.shape_cast %129 : vector<1x128xf32> to vector<128xf32>
    %131 = vector.shape_cast %130 : vector<128xf32> to vector<1x1x128xf32>
    %132 = vector.broadcast %131 : vector<1x1x128xf32> to vector<8x16x128xf32>
    %133 = arith.mulf %128, %132 : vector<8x16x128xf32>
    %134 = arith.addf %127, %133 : vector<8x16x128xf32>
    %135 = vector.extract_strided_slice %120 {offsets = [2, 0, 0], sizes = [8, 16, 128], strides = [1, 1, 1]} : vector<14x16x128xf32> to vector<8x16x128xf32>
    %136 = vector.extract_strided_slice %0 {offsets = [16, 0], sizes = [1, 128], strides = [1, 1]} : vector<49x128xf32> to vector<1x128xf32>
    %137 = vector.shape_cast %136 : vector<1x128xf32> to vector<128xf32>
    %138 = vector.shape_cast %137 : vector<128xf32> to vector<1x1x128xf32>
    %139 = vector.broadcast %138 : vector<1x1x128xf32> to vector<8x16x128xf32>
    %140 = arith.mulf %135, %139 : vector<8x16x128xf32>
    %141 = arith.addf %134, %140 : vector<8x16x128xf32>
    %142 = vector.extract_strided_slice %120 {offsets = [3, 0, 0], sizes = [8, 16, 128], strides = [1, 1, 1]} : vector<14x16x128xf32> to vector<8x16x128xf32>
    %143 = vector.extract_strided_slice %0 {offsets = [23, 0], sizes = [1, 128], strides = [1, 1]} : vector<49x128xf32> to vector<1x128xf32>
    %144 = vector.shape_cast %143 : vector<1x128xf32> to vector<128xf32>
    %145 = vector.shape_cast %144 : vector<128xf32> to vector<1x1x128xf32>
    %146 = vector.broadcast %145 : vector<1x1x128xf32> to vector<8x16x128xf32>
    %147 = arith.mulf %142, %146 : vector<8x16x128xf32>
    %148 = arith.addf %141, %147 : vector<8x16x128xf32>
    %149 = vector.extract_strided_slice %120 {offsets = [4, 0, 0], sizes = [8, 16, 128], strides = [1, 1, 1]} : vector<14x16x128xf32> to vector<8x16x128xf32>
    %150 = vector.extract_strided_slice %0 {offsets = [30, 0], sizes = [1, 128], strides = [1, 1]} : vector<49x128xf32> to vector<1x128xf32>
    %151 = vector.shape_cast %150 : vector<1x128xf32> to vector<128xf32>
    %152 = vector.shape_cast %151 : vector<128xf32> to vector<1x1x128xf32>
    %153 = vector.broadcast %152 : vector<1x1x128xf32> to vector<8x16x128xf32>
    %154 = arith.mulf %149, %153 : vector<8x16x128xf32>
    %155 = arith.addf %148, %154 : vector<8x16x128xf32>
    %156 = vector.extract_strided_slice %120 {offsets = [5, 0, 0], sizes = [8, 16, 128], strides = [1, 1, 1]} : vector<14x16x128xf32> to vector<8x16x128xf32>
    %157 = vector.extract_strided_slice %0 {offsets = [37, 0], sizes = [1, 128], strides = [1, 1]} : vector<49x128xf32> to vector<1x128xf32>
    %158 = vector.shape_cast %157 : vector<1x128xf32> to vector<128xf32>
    %159 = vector.shape_cast %158 : vector<128xf32> to vector<1x1x128xf32>
    %160 = vector.broadcast %159 : vector<1x1x128xf32> to vector<8x16x128xf32>
    %161 = arith.mulf %156, %160 : vector<8x16x128xf32>
    %162 = arith.addf %155, %161 : vector<8x16x128xf32>
    %163 = vector.extract_strided_slice %120 {offsets = [6, 0, 0], sizes = [8, 16, 128], strides = [1, 1, 1]} : vector<14x16x128xf32> to vector<8x16x128xf32>
    %164 = vector.extract_strided_slice %0 {offsets = [44, 0], sizes = [1, 128], strides = [1, 1]} : vector<49x128xf32> to vector<1x128xf32>
    %165 = vector.shape_cast %164 : vector<1x128xf32> to vector<128xf32>
    %166 = vector.shape_cast %165 : vector<128xf32> to vector<1x1x128xf32>
    %167 = vector.broadcast %166 : vector<1x1x128xf32> to vector<8x16x128xf32>
    %168 = arith.mulf %163, %167 : vector<8x16x128xf32>
    %169 = arith.addf %162, %168 : vector<8x16x128xf32>
    %c333_i32 = arith.constant 333 : i32
    %170 = tpu.dynamic_rotate %14 by %c333_i32 dim 0 : vector<336x128xf32>, i32 -> vector<336x128xf32>
    %171 = vector.shape_cast %170 : vector<336x128xf32> to vector<14x24x128xf32>
    %172 = vector.extract_strided_slice %171 {offsets = [0, 0, 0], sizes = [14, 16, 128], strides = [1, 1, 1]} : vector<14x24x128xf32> to vector<14x16x128xf32>
    %173 = vector.extract_strided_slice %172 {offsets = [0, 0, 0], sizes = [8, 16, 128], strides = [1, 1, 1]} : vector<14x16x128xf32> to vector<8x16x128xf32>
    %174 = vector.extract_strided_slice %0 {offsets = [3, 0], sizes = [1, 128], strides = [1, 1]} : vector<49x128xf32> to vector<1x128xf32>
    %175 = vector.shape_cast %174 : vector<1x128xf32> to vector<128xf32>
    %176 = vector.shape_cast %175 : vector<128xf32> to vector<1x1x128xf32>
    %177 = vector.broadcast %176 : vector<1x1x128xf32> to vector<8x16x128xf32>
    %178 = arith.mulf %173, %177 : vector<8x16x128xf32>
    %179 = arith.addf %169, %178 : vector<8x16x128xf32>
    %180 = vector.extract_strided_slice %172 {offsets = [1, 0, 0], sizes = [8, 16, 128], strides = [1, 1, 1]} : vector<14x16x128xf32> to vector<8x16x128xf32>
    %181 = vector.extract_strided_slice %0 {offsets = [10, 0], sizes = [1, 128], strides = [1, 1]} : vector<49x128xf32> to vector<1x128xf32>
    %182 = vector.shape_cast %181 : vector<1x128xf32> to vector<128xf32>
    %183 = vector.shape_cast %182 : vector<128xf32> to vector<1x1x128xf32>
    %184 = vector.broadcast %183 : vector<1x1x128xf32> to vector<8x16x128xf32>
    %185 = arith.mulf %180, %184 : vector<8x16x128xf32>
    %186 = arith.addf %179, %185 : vector<8x16x128xf32>
    %187 = vector.extract_strided_slice %172 {offsets = [2, 0, 0], sizes = [8, 16, 128], strides = [1, 1, 1]} : vector<14x16x128xf32> to vector<8x16x128xf32>
    %188 = vector.extract_strided_slice %0 {offsets = [17, 0], sizes = [1, 128], strides = [1, 1]} : vector<49x128xf32> to vector<1x128xf32>
    %189 = vector.shape_cast %188 : vector<1x128xf32> to vector<128xf32>
    %190 = vector.shape_cast %189 : vector<128xf32> to vector<1x1x128xf32>
    %191 = vector.broadcast %190 : vector<1x1x128xf32> to vector<8x16x128xf32>
    %192 = arith.mulf %187, %191 : vector<8x16x128xf32>
    %193 = arith.addf %186, %192 : vector<8x16x128xf32>
    %194 = vector.extract_strided_slice %172 {offsets = [3, 0, 0], sizes = [8, 16, 128], strides = [1, 1, 1]} : vector<14x16x128xf32> to vector<8x16x128xf32>
    %195 = vector.extract_strided_slice %0 {offsets = [24, 0], sizes = [1, 128], strides = [1, 1]} : vector<49x128xf32> to vector<1x128xf32>
    %196 = vector.shape_cast %195 : vector<1x128xf32> to vector<128xf32>
    %197 = vector.shape_cast %196 : vector<128xf32> to vector<1x1x128xf32>
    %198 = vector.broadcast %197 : vector<1x1x128xf32> to vector<8x16x128xf32>
    %199 = arith.mulf %194, %198 : vector<8x16x128xf32>
    %200 = arith.addf %193, %199 : vector<8x16x128xf32>
    %201 = vector.extract_strided_slice %172 {offsets = [4, 0, 0], sizes = [8, 16, 128], strides = [1, 1, 1]} : vector<14x16x128xf32> to vector<8x16x128xf32>
    %202 = vector.extract_strided_slice %0 {offsets = [31, 0], sizes = [1, 128], strides = [1, 1]} : vector<49x128xf32> to vector<1x128xf32>
    %203 = vector.shape_cast %202 : vector<1x128xf32> to vector<128xf32>
    %204 = vector.shape_cast %203 : vector<128xf32> to vector<1x1x128xf32>
    %205 = vector.broadcast %204 : vector<1x1x128xf32> to vector<8x16x128xf32>
    %206 = arith.mulf %201, %205 : vector<8x16x128xf32>
    %207 = arith.addf %200, %206 : vector<8x16x128xf32>
    %208 = vector.extract_strided_slice %172 {offsets = [5, 0, 0], sizes = [8, 16, 128], strides = [1, 1, 1]} : vector<14x16x128xf32> to vector<8x16x128xf32>
    %209 = vector.extract_strided_slice %0 {offsets = [38, 0], sizes = [1, 128], strides = [1, 1]} : vector<49x128xf32> to vector<1x128xf32>
    %210 = vector.shape_cast %209 : vector<1x128xf32> to vector<128xf32>
    %211 = vector.shape_cast %210 : vector<128xf32> to vector<1x1x128xf32>
    %212 = vector.broadcast %211 : vector<1x1x128xf32> to vector<8x16x128xf32>
    %213 = arith.mulf %208, %212 : vector<8x16x128xf32>
    %214 = arith.addf %207, %213 : vector<8x16x128xf32>
    %215 = vector.extract_strided_slice %172 {offsets = [6, 0, 0], sizes = [8, 16, 128], strides = [1, 1, 1]} : vector<14x16x128xf32> to vector<8x16x128xf32>
    %216 = vector.extract_strided_slice %0 {offsets = [45, 0], sizes = [1, 128], strides = [1, 1]} : vector<49x128xf32> to vector<1x128xf32>
    %217 = vector.shape_cast %216 : vector<1x128xf32> to vector<128xf32>
    %218 = vector.shape_cast %217 : vector<128xf32> to vector<1x1x128xf32>
    %219 = vector.broadcast %218 : vector<1x1x128xf32> to vector<8x16x128xf32>
    %220 = arith.mulf %215, %219 : vector<8x16x128xf32>
    %221 = arith.addf %214, %220 : vector<8x16x128xf32>
    %c332_i32 = arith.constant 332 : i32
    %222 = tpu.dynamic_rotate %14 by %c332_i32 dim 0 : vector<336x128xf32>, i32 -> vector<336x128xf32>
    %223 = vector.shape_cast %222 : vector<336x128xf32> to vector<14x24x128xf32>
    %224 = vector.extract_strided_slice %223 {offsets = [0, 0, 0], sizes = [14, 16, 128], strides = [1, 1, 1]} : vector<14x24x128xf32> to vector<14x16x128xf32>
    %225 = vector.extract_strided_slice %224 {offsets = [0, 0, 0], sizes = [8, 16, 128], strides = [1, 1, 1]} : vector<14x16x128xf32> to vector<8x16x128xf32>
    %226 = vector.extract_strided_slice %0 {offsets = [4, 0], sizes = [1, 128], strides = [1, 1]} : vector<49x128xf32> to vector<1x128xf32>
    %227 = vector.shape_cast %226 : vector<1x128xf32> to vector<128xf32>
    %228 = vector.shape_cast %227 : vector<128xf32> to vector<1x1x128xf32>
    %229 = vector.broadcast %228 : vector<1x1x128xf32> to vector<8x16x128xf32>
    %230 = arith.mulf %225, %229 : vector<8x16x128xf32>
    %231 = arith.addf %221, %230 : vector<8x16x128xf32>
    %232 = vector.extract_strided_slice %224 {offsets = [1, 0, 0], sizes = [8, 16, 128], strides = [1, 1, 1]} : vector<14x16x128xf32> to vector<8x16x128xf32>
    %233 = vector.extract_strided_slice %0 {offsets = [11, 0], sizes = [1, 128], strides = [1, 1]} : vector<49x128xf32> to vector<1x128xf32>
    %234 = vector.shape_cast %233 : vector<1x128xf32> to vector<128xf32>
    %235 = vector.shape_cast %234 : vector<128xf32> to vector<1x1x128xf32>
    %236 = vector.broadcast %235 : vector<1x1x128xf32> to vector<8x16x128xf32>
    %237 = arith.mulf %232, %236 : vector<8x16x128xf32>
    %238 = arith.addf %231, %237 : vector<8x16x128xf32>
    %239 = vector.extract_strided_slice %224 {offsets = [2, 0, 0], sizes = [8, 16, 128], strides = [1, 1, 1]} : vector<14x16x128xf32> to vector<8x16x128xf32>
    %240 = vector.extract_strided_slice %0 {offsets = [18, 0], sizes = [1, 128], strides = [1, 1]} : vector<49x128xf32> to vector<1x128xf32>
    %241 = vector.shape_cast %240 : vector<1x128xf32> to vector<128xf32>
    %242 = vector.shape_cast %241 : vector<128xf32> to vector<1x1x128xf32>
    %243 = vector.broadcast %242 : vector<1x1x128xf32> to vector<8x16x128xf32>
    %244 = arith.mulf %239, %243 : vector<8x16x128xf32>
    %245 = arith.addf %238, %244 : vector<8x16x128xf32>
    %246 = vector.extract_strided_slice %224 {offsets = [3, 0, 0], sizes = [8, 16, 128], strides = [1, 1, 1]} : vector<14x16x128xf32> to vector<8x16x128xf32>
    %247 = vector.extract_strided_slice %0 {offsets = [25, 0], sizes = [1, 128], strides = [1, 1]} : vector<49x128xf32> to vector<1x128xf32>
    %248 = vector.shape_cast %247 : vector<1x128xf32> to vector<128xf32>
    %249 = vector.shape_cast %248 : vector<128xf32> to vector<1x1x128xf32>
    %250 = vector.broadcast %249 : vector<1x1x128xf32> to vector<8x16x128xf32>
    %251 = arith.mulf %246, %250 : vector<8x16x128xf32>
    %252 = arith.addf %245, %251 : vector<8x16x128xf32>
    %253 = vector.extract_strided_slice %224 {offsets = [4, 0, 0], sizes = [8, 16, 128], strides = [1, 1, 1]} : vector<14x16x128xf32> to vector<8x16x128xf32>
    %254 = vector.extract_strided_slice %0 {offsets = [32, 0], sizes = [1, 128], strides = [1, 1]} : vector<49x128xf32> to vector<1x128xf32>
    %255 = vector.shape_cast %254 : vector<1x128xf32> to vector<128xf32>
    %256 = vector.shape_cast %255 : vector<128xf32> to vector<1x1x128xf32>
    %257 = vector.broadcast %256 : vector<1x1x128xf32> to vector<8x16x128xf32>
    %258 = arith.mulf %253, %257 : vector<8x16x128xf32>
    %259 = arith.addf %252, %258 : vector<8x16x128xf32>
    %260 = vector.extract_strided_slice %224 {offsets = [5, 0, 0], sizes = [8, 16, 128], strides = [1, 1, 1]} : vector<14x16x128xf32> to vector<8x16x128xf32>
    %261 = vector.extract_strided_slice %0 {offsets = [39, 0], sizes = [1, 128], strides = [1, 1]} : vector<49x128xf32> to vector<1x128xf32>
    %262 = vector.shape_cast %261 : vector<1x128xf32> to vector<128xf32>
    %263 = vector.shape_cast %262 : vector<128xf32> to vector<1x1x128xf32>
    %264 = vector.broadcast %263 : vector<1x1x128xf32> to vector<8x16x128xf32>
    %265 = arith.mulf %260, %264 : vector<8x16x128xf32>
    %266 = arith.addf %259, %265 : vector<8x16x128xf32>
    %267 = vector.extract_strided_slice %224 {offsets = [6, 0, 0], sizes = [8, 16, 128], strides = [1, 1, 1]} : vector<14x16x128xf32> to vector<8x16x128xf32>
    %268 = vector.extract_strided_slice %0 {offsets = [46, 0], sizes = [1, 128], strides = [1, 1]} : vector<49x128xf32> to vector<1x128xf32>
    %269 = vector.shape_cast %268 : vector<1x128xf32> to vector<128xf32>
    %270 = vector.shape_cast %269 : vector<128xf32> to vector<1x1x128xf32>
    %271 = vector.broadcast %270 : vector<1x1x128xf32> to vector<8x16x128xf32>
    %272 = arith.mulf %267, %271 : vector<8x16x128xf32>
    %273 = arith.addf %266, %272 : vector<8x16x128xf32>
    %c331_i32 = arith.constant 331 : i32
    %274 = tpu.dynamic_rotate %14 by %c331_i32 dim 0 : vector<336x128xf32>, i32 -> vector<336x128xf32>
    %275 = vector.shape_cast %274 : vector<336x128xf32> to vector<14x24x128xf32>
    %276 = vector.extract_strided_slice %275 {offsets = [0, 0, 0], sizes = [14, 16, 128], strides = [1, 1, 1]} : vector<14x24x128xf32> to vector<14x16x128xf32>
    %277 = vector.extract_strided_slice %276 {offsets = [0, 0, 0], sizes = [8, 16, 128], strides = [1, 1, 1]} : vector<14x16x128xf32> to vector<8x16x128xf32>
    %278 = vector.extract_strided_slice %0 {offsets = [5, 0], sizes = [1, 128], strides = [1, 1]} : vector<49x128xf32> to vector<1x128xf32>
    %279 = vector.shape_cast %278 : vector<1x128xf32> to vector<128xf32>
    %280 = vector.shape_cast %279 : vector<128xf32> to vector<1x1x128xf32>
    %281 = vector.broadcast %280 : vector<1x1x128xf32> to vector<8x16x128xf32>
    %282 = arith.mulf %277, %281 : vector<8x16x128xf32>
    %283 = arith.addf %273, %282 : vector<8x16x128xf32>
    %284 = vector.extract_strided_slice %276 {offsets = [1, 0, 0], sizes = [8, 16, 128], strides = [1, 1, 1]} : vector<14x16x128xf32> to vector<8x16x128xf32>
    %285 = vector.extract_strided_slice %0 {offsets = [12, 0], sizes = [1, 128], strides = [1, 1]} : vector<49x128xf32> to vector<1x128xf32>
    %286 = vector.shape_cast %285 : vector<1x128xf32> to vector<128xf32>
    %287 = vector.shape_cast %286 : vector<128xf32> to vector<1x1x128xf32>
    %288 = vector.broadcast %287 : vector<1x1x128xf32> to vector<8x16x128xf32>
    %289 = arith.mulf %284, %288 : vector<8x16x128xf32>
    %290 = arith.addf %283, %289 : vector<8x16x128xf32>
    %291 = vector.extract_strided_slice %276 {offsets = [2, 0, 0], sizes = [8, 16, 128], strides = [1, 1, 1]} : vector<14x16x128xf32> to vector<8x16x128xf32>
    %292 = vector.extract_strided_slice %0 {offsets = [19, 0], sizes = [1, 128], strides = [1, 1]} : vector<49x128xf32> to vector<1x128xf32>
    %293 = vector.shape_cast %292 : vector<1x128xf32> to vector<128xf32>
    %294 = vector.shape_cast %293 : vector<128xf32> to vector<1x1x128xf32>
    %295 = vector.broadcast %294 : vector<1x1x128xf32> to vector<8x16x128xf32>
    %296 = arith.mulf %291, %295 : vector<8x16x128xf32>
    %297 = arith.addf %290, %296 : vector<8x16x128xf32>
    %298 = vector.extract_strided_slice %276 {offsets = [3, 0, 0], sizes = [8, 16, 128], strides = [1, 1, 1]} : vector<14x16x128xf32> to vector<8x16x128xf32>
    %299 = vector.extract_strided_slice %0 {offsets = [26, 0], sizes = [1, 128], strides = [1, 1]} : vector<49x128xf32> to vector<1x128xf32>
    %300 = vector.shape_cast %299 : vector<1x128xf32> to vector<128xf32>
    %301 = vector.shape_cast %300 : vector<128xf32> to vector<1x1x128xf32>
    %302 = vector.broadcast %301 : vector<1x1x128xf32> to vector<8x16x128xf32>
    %303 = arith.mulf %298, %302 : vector<8x16x128xf32>
    %304 = arith.addf %297, %303 : vector<8x16x128xf32>
    %305 = vector.extract_strided_slice %276 {offsets = [4, 0, 0], sizes = [8, 16, 128], strides = [1, 1, 1]} : vector<14x16x128xf32> to vector<8x16x128xf32>
    %306 = vector.extract_strided_slice %0 {offsets = [33, 0], sizes = [1, 128], strides = [1, 1]} : vector<49x128xf32> to vector<1x128xf32>
    %307 = vector.shape_cast %306 : vector<1x128xf32> to vector<128xf32>
    %308 = vector.shape_cast %307 : vector<128xf32> to vector<1x1x128xf32>
    %309 = vector.broadcast %308 : vector<1x1x128xf32> to vector<8x16x128xf32>
    %310 = arith.mulf %305, %309 : vector<8x16x128xf32>
    %311 = arith.addf %304, %310 : vector<8x16x128xf32>
    %312 = vector.extract_strided_slice %276 {offsets = [5, 0, 0], sizes = [8, 16, 128], strides = [1, 1, 1]} : vector<14x16x128xf32> to vector<8x16x128xf32>
    %313 = vector.extract_strided_slice %0 {offsets = [40, 0], sizes = [1, 128], strides = [1, 1]} : vector<49x128xf32> to vector<1x128xf32>
    %314 = vector.shape_cast %313 : vector<1x128xf32> to vector<128xf32>
    %315 = vector.shape_cast %314 : vector<128xf32> to vector<1x1x128xf32>
    %316 = vector.broadcast %315 : vector<1x1x128xf32> to vector<8x16x128xf32>
    %317 = arith.mulf %312, %316 : vector<8x16x128xf32>
    %318 = arith.addf %311, %317 : vector<8x16x128xf32>
    %319 = vector.extract_strided_slice %276 {offsets = [6, 0, 0], sizes = [8, 16, 128], strides = [1, 1, 1]} : vector<14x16x128xf32> to vector<8x16x128xf32>
    %320 = vector.extract_strided_slice %0 {offsets = [47, 0], sizes = [1, 128], strides = [1, 1]} : vector<49x128xf32> to vector<1x128xf32>
    %321 = vector.shape_cast %320 : vector<1x128xf32> to vector<128xf32>
    %322 = vector.shape_cast %321 : vector<128xf32> to vector<1x1x128xf32>
    %323 = vector.broadcast %322 : vector<1x1x128xf32> to vector<8x16x128xf32>
    %324 = arith.mulf %319, %323 : vector<8x16x128xf32>
    %325 = arith.addf %318, %324 : vector<8x16x128xf32>
    %c330_i32 = arith.constant 330 : i32
    %326 = tpu.dynamic_rotate %14 by %c330_i32 dim 0 : vector<336x128xf32>, i32 -> vector<336x128xf32>
    %327 = vector.shape_cast %326 : vector<336x128xf32> to vector<14x24x128xf32>
    %328 = vector.extract_strided_slice %327 {offsets = [0, 0, 0], sizes = [14, 16, 128], strides = [1, 1, 1]} : vector<14x24x128xf32> to vector<14x16x128xf32>
    %329 = vector.extract_strided_slice %328 {offsets = [0, 0, 0], sizes = [8, 16, 128], strides = [1, 1, 1]} : vector<14x16x128xf32> to vector<8x16x128xf32>
    %330 = vector.extract_strided_slice %0 {offsets = [6, 0], sizes = [1, 128], strides = [1, 1]} : vector<49x128xf32> to vector<1x128xf32>
    %331 = vector.shape_cast %330 : vector<1x128xf32> to vector<128xf32>
    %332 = vector.shape_cast %331 : vector<128xf32> to vector<1x1x128xf32>
    %333 = vector.broadcast %332 : vector<1x1x128xf32> to vector<8x16x128xf32>
    %334 = arith.mulf %329, %333 : vector<8x16x128xf32>
    %335 = arith.addf %325, %334 : vector<8x16x128xf32>
    %336 = vector.extract_strided_slice %328 {offsets = [1, 0, 0], sizes = [8, 16, 128], strides = [1, 1, 1]} : vector<14x16x128xf32> to vector<8x16x128xf32>
    %337 = vector.extract_strided_slice %0 {offsets = [13, 0], sizes = [1, 128], strides = [1, 1]} : vector<49x128xf32> to vector<1x128xf32>
    %338 = vector.shape_cast %337 : vector<1x128xf32> to vector<128xf32>
    %339 = vector.shape_cast %338 : vector<128xf32> to vector<1x1x128xf32>
    %340 = vector.broadcast %339 : vector<1x1x128xf32> to vector<8x16x128xf32>
    %341 = arith.mulf %336, %340 : vector<8x16x128xf32>
    %342 = arith.addf %335, %341 : vector<8x16x128xf32>
    %343 = vector.extract_strided_slice %328 {offsets = [2, 0, 0], sizes = [8, 16, 128], strides = [1, 1, 1]} : vector<14x16x128xf32> to vector<8x16x128xf32>
    %344 = vector.extract_strided_slice %0 {offsets = [20, 0], sizes = [1, 128], strides = [1, 1]} : vector<49x128xf32> to vector<1x128xf32>
    %345 = vector.shape_cast %344 : vector<1x128xf32> to vector<128xf32>
    %346 = vector.shape_cast %345 : vector<128xf32> to vector<1x1x128xf32>
    %347 = vector.broadcast %346 : vector<1x1x128xf32> to vector<8x16x128xf32>
    %348 = arith.mulf %343, %347 : vector<8x16x128xf32>
    %349 = arith.addf %342, %348 : vector<8x16x128xf32>
    %350 = vector.extract_strided_slice %328 {offsets = [3, 0, 0], sizes = [8, 16, 128], strides = [1, 1, 1]} : vector<14x16x128xf32> to vector<8x16x128xf32>
    %351 = vector.extract_strided_slice %0 {offsets = [27, 0], sizes = [1, 128], strides = [1, 1]} : vector<49x128xf32> to vector<1x128xf32>
    %352 = vector.shape_cast %351 : vector<1x128xf32> to vector<128xf32>
    %353 = vector.shape_cast %352 : vector<128xf32> to vector<1x1x128xf32>
    %354 = vector.broadcast %353 : vector<1x1x128xf32> to vector<8x16x128xf32>
    %355 = arith.mulf %350, %354 : vector<8x16x128xf32>
    %356 = arith.addf %349, %355 : vector<8x16x128xf32>
    %357 = vector.extract_strided_slice %328 {offsets = [4, 0, 0], sizes = [8, 16, 128], strides = [1, 1, 1]} : vector<14x16x128xf32> to vector<8x16x128xf32>
    %358 = vector.extract_strided_slice %0 {offsets = [34, 0], sizes = [1, 128], strides = [1, 1]} : vector<49x128xf32> to vector<1x128xf32>
    %359 = vector.shape_cast %358 : vector<1x128xf32> to vector<128xf32>
    %360 = vector.shape_cast %359 : vector<128xf32> to vector<1x1x128xf32>
    %361 = vector.broadcast %360 : vector<1x1x128xf32> to vector<8x16x128xf32>
    %362 = arith.mulf %357, %361 : vector<8x16x128xf32>
    %363 = arith.addf %356, %362 : vector<8x16x128xf32>
    %364 = vector.extract_strided_slice %328 {offsets = [5, 0, 0], sizes = [8, 16, 128], strides = [1, 1, 1]} : vector<14x16x128xf32> to vector<8x16x128xf32>
    %365 = vector.extract_strided_slice %0 {offsets = [41, 0], sizes = [1, 128], strides = [1, 1]} : vector<49x128xf32> to vector<1x128xf32>
    %366 = vector.shape_cast %365 : vector<1x128xf32> to vector<128xf32>
    %367 = vector.shape_cast %366 : vector<128xf32> to vector<1x1x128xf32>
    %368 = vector.broadcast %367 : vector<1x1x128xf32> to vector<8x16x128xf32>
    %369 = arith.mulf %364, %368 : vector<8x16x128xf32>
    %370 = arith.addf %363, %369 : vector<8x16x128xf32>
    %371 = vector.extract_strided_slice %328 {offsets = [6, 0, 0], sizes = [8, 16, 128], strides = [1, 1, 1]} : vector<14x16x128xf32> to vector<8x16x128xf32>
    %372 = vector.extract_strided_slice %0 {offsets = [48, 0], sizes = [1, 128], strides = [1, 1]} : vector<49x128xf32> to vector<1x128xf32>
    %373 = vector.shape_cast %372 : vector<1x128xf32> to vector<128xf32>
    %374 = vector.shape_cast %373 : vector<128xf32> to vector<1x1x128xf32>
    %375 = vector.broadcast %374 : vector<1x1x128xf32> to vector<8x16x128xf32>
    %376 = arith.mulf %371, %375 : vector<8x16x128xf32>
    %377 = arith.addf %370, %376 : vector<8x16x128xf32>
    %378 = vector.shape_cast %377 : vector<8x16x128xf32> to vector<128x128xf32>
    %379 = vector.broadcast %1 : vector<1x128xf32> to vector<128x128xf32>
    %380 = arith.addf %378, %379 : vector<128x128xf32>
    %cst_18 = arith.constant dense<0.000000e+00> : vector<128xf32>
    %381 = vector.multi_reduction <add>, %380, %cst_18 [1] : vector<128x128xf32> to vector<128xf32>
    %382 = vector.shape_cast %381 : vector<128xf32> to vector<128x1xf32>
    %cst_19 = arith.constant 2.500000e-01 : f32
    %383 = vector.broadcast %cst_19 : f32 to vector<128x1xf32>
    %384 = arith.mulf %382, %383 : vector<128x1xf32>
    %385 = arith.mulf %380, %380 : vector<128x128xf32>
    %cst_20 = arith.constant dense<0.000000e+00> : vector<128xf32>
    %386 = vector.multi_reduction <add>, %385, %cst_20 [1] : vector<128x128xf32> to vector<128xf32>
    %387 = vector.shape_cast %386 : vector<128xf32> to vector<128x1xf32>
    %cst_21 = arith.constant 2.500000e-01 : f32
    %388 = vector.broadcast %cst_21 : f32 to vector<128x1xf32>
    %389 = arith.mulf %387, %388 : vector<128x1xf32>
    %390 = arith.mulf %384, %384 : vector<128x1xf32>
    %391 = arith.subf %389, %390 : vector<128x1xf32>
    %cst_22 = arith.constant 0.000000e+00 : f32
    %392 = vector.broadcast %cst_22 : f32 to vector<128x1xf32>
    %393 = arith.maximumf %391, %392 : vector<128x1xf32>
    %394 = vector.broadcast %384 : vector<128x1xf32> to vector<128x128xf32>
    %395 = arith.subf %380, %394 : vector<128x128xf32>
    %cst_23 = arith.constant 9.99999997E-7 : f32
    %396 = vector.broadcast %cst_23 : f32 to vector<128x1xf32>
    %397 = arith.addf %393, %396 : vector<128x1xf32>
    %398 = math.rsqrt %397 : vector<128x1xf32>
    %399 = vector.broadcast %398 : vector<128x1xf32> to vector<128x128xf32>
    %400 = arith.mulf %395, %399 : vector<128x128xf32>
    %401 = vector.broadcast %2 : vector<1x128xf32> to vector<128x128xf32>
    %402 = arith.mulf %400, %401 : vector<128x128xf32>
    %403 = vector.broadcast %3 : vector<1x128xf32> to vector<128x128xf32>
    %404 = arith.addf %402, %403 : vector<128x128xf32>
    %405 = arith.truncf %404 : vector<128x128xf32> to vector<128x128xbf16>
    %c0_24 = arith.constant 0 : index
    %c0_25 = arith.constant 0 : index
    %406 = vector.load %arg7[%c0_24, %c0_25] : memref<128x128xbf16, #tpu.memory_space<vmem>>, vector<128x128xbf16>
    %cst_26 = arith.constant dense<0.000000e+00> : vector<128x128xf32>
    %407 = tpu.matmul %405, %406, %cst_26 {dimension_numbers = #tpu.dot_dimension_numbers<[1], [0], [0], [1], [0, 0, 1, 1], [], []>} : vector<128x128xbf16>, vector<128x128xbf16>, vector<128x128xf32> -> vector<128x128xf32>
    %408 = vector.broadcast %4 : vector<1x128xf32> to vector<128x128xf32>
    %409 = arith.addf %407, %408 : vector<128x128xf32>
    %cst_27 = arith.constant 5.000000e-01 : f32
    %410 = vector.broadcast %cst_27 : f32 to vector<128x128xf32>
    %411 = arith.mulf %410, %409 : vector<128x128xf32>
    %cst_28 = arith.constant 0.707106769 : f32
    %412 = vector.broadcast %cst_28 : f32 to vector<128x128xf32>
    %413 = arith.mulf %409, %412 : vector<128x128xf32>
    %414 = math.erf %413 : vector<128x128xf32>
    %cst_29 = arith.constant 1.000000e+00 : f32
    %415 = vector.broadcast %cst_29 : f32 to vector<128x128xf32>
    %416 = arith.addf %415, %414 : vector<128x128xf32>
    %417 = arith.mulf %411, %416 : vector<128x128xf32>
    %418 = arith.truncf %417 : vector<128x128xf32> to vector<128x128xbf16>
    %c0_30 = arith.constant 0 : index
    %c0_31 = arith.constant 0 : index
    %419 = vector.load %arg9[%c0_30, %c0_31] : memref<128x128xbf16, #tpu.memory_space<vmem>>, vector<128x128xbf16>
    %cst_32 = arith.constant dense<0.000000e+00> : vector<128x128xf32>
    %420 = tpu.matmul %418, %419, %cst_32 {dimension_numbers = #tpu.dot_dimension_numbers<[1], [0], [0], [1], [0, 0, 1, 1], [], []>} : vector<128x128xbf16>, vector<128x128xbf16>, vector<128x128xf32> -> vector<128x128xf32>
    %421 = vector.broadcast %5 : vector<1x128xf32> to vector<128x128xf32>
    %422 = arith.addf %420, %421 : vector<128x128xf32>
    %423 = vector.broadcast %6 : vector<1x128xf32> to vector<128x128xf32>
    %424 = arith.mulf %423, %422 : vector<128x128xf32>
    %425 = vector.shape_cast %194 : vector<8x16x128xf32> to vector<128x128xf32>
    %426 = arith.addf %425, %424 : vector<128x128xf32>
    %427 = arith.truncf %426 : vector<128x128xf32> to vector<128x128xbf16>
    %c0_33 = arith.constant 0 : index
    %c0_34 = arith.constant 0 : index
    %428 = vector.load %arg12[%c0_33, %c0_34] : memref<128x128xbf16, #tpu.memory_space<vmem>>, vector<128x128xbf16>
    %cst_35 = arith.constant dense<0.000000e+00> : vector<128x128xf32>
    %429 = tpu.matmul %427, %428, %cst_35 {dimension_numbers = #tpu.dot_dimension_numbers<[1], [0], [0], [1], [0, 0, 1, 1], [], []>} : vector<128x128xbf16>, vector<128x128xbf16>, vector<128x128xf32> -> vector<128x128xf32>
    %430 = vector.broadcast %7 : vector<1x128xf32> to vector<128x128xf32>
    %431 = arith.addf %429, %430 : vector<128x128xf32>
    %432 = vector.shape_cast %431 : vector<128x128xf32> to vector<8x16x128xf32>
    %c0_36 = arith.constant 0 : index
    %c0_37 = arith.constant 0 : index
    %c0_38 = arith.constant 0 : index
    %c0_39 = arith.constant 0 : index
    %433 = vector.load %arg14[%c0_36, %c0_37, %c0_38, %c0_39] : memref<1x8x16x128xf32, #tpu.memory_space<vmem>>, vector<1x8x16x128xf32>
    %434 = vector.shape_cast %433 : vector<1x8x16x128xf32> to vector<8x16x128xf32>
    %435 = vector.shape_cast %432 : vector<8x16x128xf32> to vector<1x8x16x128xf32>
    tpu.vector_store %arg14[%c0_36, %c0_37, %c0_38, %c0_39], %435 {strides = array<i32>} : memref<1x8x16x128xf32, #tpu.memory_space<vmem>>, vector<1x8x16x128xf32>,
    return
  }
  func.func @transform_0(%arg0: i32, %arg1: i32) -> (i32, i32, i32, i32) {
    %c0_i32 = arith.constant 0 : i32
    %c0_i32_0 = arith.constant 0 : i32
    %c0_i32_1 = arith.constant 0 : i32
    %c0_i32_2 = arith.constant 0 : i32
    return %arg0, %c0_i32, %c0_i32_0, %c0_i32_1 : i32, i32, i32, i32
  }
  func.func @transform_1(%arg0: i32, %arg1: i32) -> (i32, i32) {
    %c0_i32 = arith.constant 0 : i32
    %c0_i32_0 = arith.constant 0 : i32
    %c0_i32_1 = arith.constant 0 : i32
    return %c0_i32, %c0_i32_0 : i32, i32
  }
  func.func @transform_2(%arg0: i32, %arg1: i32) -> (i32, i32) {
    %c0_i32 = arith.constant 0 : i32
    %c0_i32_0 = arith.constant 0 : i32
    %c0_i32_1 = arith.constant 0 : i32
    return %c0_i32, %c0_i32_0 : i32, i32
  }
  func.func @transform_3(%arg0: i32, %arg1: i32) -> (i32, i32) {
    %c0_i32 = arith.constant 0 : i32
    %c0_i32_0 = arith.constant 0 : i32
    %c0_i32_1 = arith.constant 0 : i32
    return %c0_i32, %c0_i32_0 : i32, i32
  }
  func.func @transform_4(%arg0: i32, %arg1: i32) -> (i32, i32) {
    %c0_i32 = arith.constant 0 : i32
    %c0_i32_0 = arith.constant 0 : i32
    %c0_i32_1 = arith.constant 0 : i32
    return %c0_i32, %c0_i32_0 : i32, i32
  }
  func.func @transform_5(%arg0: i32, %arg1: i32) -> (i32, i32) {
    %c0_i32 = arith.constant 0 : i32
    %c0_i32_0 = arith.constant 0 : i32
    %c0_i32_1 = arith.constant 0 : i32
    return %c0_i32, %c0_i32_0 : i32, i32
  }
  func.func @transform_6(%arg0: i32, %arg1: i32) -> (i32, i32) {
    %c0_i32 = arith.constant 0 : i32
    %c0_i32_0 = arith.constant 0 : i32
    %c0_i32_1 = arith.constant 0 : i32
    return %c0_i32, %c0_i32_0 : i32, i32
  }
  func.func @transform_7(%arg0: i32, %arg1: i32) -> (i32, i32) {
    %c0_i32 = arith.constant 0 : i32
    %c0_i32_0 = arith.constant 0 : i32
    %c0_i32_1 = arith.constant 0 : i32
    return %c0_i32, %c0_i32_0 : i32, i32
  }
  func.func @transform_8(%arg0: i32, %arg1: i32) -> (i32, i32) {
    %c0_i32 = arith.constant 0 : i32
    %c0_i32_0 = arith.constant 0 : i32
    %c0_i32_1 = arith.constant 0 : i32
    return %c0_i32, %c0_i32_0 : i32, i32
  }
  func.func @transform_9(%arg0: i32, %arg1: i32) -> (i32, i32) {
    %c0_i32 = arith.constant 0 : i32
    %c0_i32_0 = arith.constant 0 : i32
    %c0_i32_1 = arith.constant 0 : i32
    return %c0_i32, %c0_i32_0 : i32, i32
  }
  func.func @transform_10(%arg0: i32, %arg1: i32) -> (i32, i32) {
    %c0_i32 = arith.constant 0 : i32
    %c0_i32_0 = arith.constant 0 : i32
    %c0_i32_1 = arith.constant 0 : i32
    return %c0_i32, %c0_i32_0 : i32, i32
  }
  func.func @transform_11(%arg0: i32, %arg1: i32) -> (i32, i32) {
    %c0_i32 = arith.constant 0 : i32
    %c0_i32_0 = arith.constant 0 : i32
    %c0_i32_1 = arith.constant 0 : i32
    return %c0_i32, %c0_i32_0 : i32, i32
  }
  func.func @transform_12(%arg0: i32, %arg1: i32) -> (i32, i32, i32, i32) {
    %c0_i32 = arith.constant 0 : i32
    %c0_i32_0 = arith.constant 0 : i32
    %c0_i32_1 = arith.constant 0 : i32
    return %arg0, %arg1, %c0_i32, %c0_i32_0 : i32, i32, i32, i32
  }
}

</mosaic_0001>

<llo_original>
// kernel: tpu_custom_call.1
$region0: #{tpu_custom_call.1}
  #allocation0 [shape = 'u32[]', space=smem, size = 0x4, offset = 0x4, fixed_abs, tag = 'smem constant byte address 0x4 - core index']
  #allocation1 [shape = 'u32[144,128]{1,0:T(1,128)}', space=vmem, size = 0x12000, scoped, tag = 'internal scratch']
  %s0 = inlined_call_operand.hbm [shape: bf16[2,22,24,128], index: 0, kind: input, shape index: {}]
  %s1 = inlined_call_operand.hbm [shape: f32[49,128], index: 1, kind: input, shape index: {}]
  %s2 = inlined_call_operand.vmem [shape: f32[1,128], index: 2, kind: input, shape index: {}]
  %s3 = inlined_call_operand.vmem [shape: f32[1,128], index: 3, kind: input, shape index: {}]
  %s4 = inlined_call_operand.vmem [shape: f32[1,128], index: 4, kind: input, shape index: {}]
  %s5 = inlined_call_operand.hbm [shape: bf16[128,128], index: 5, kind: input, shape index: {}]
  %s6 = inlined_call_operand.vmem [shape: f32[1,128], index: 6, kind: input, shape index: {}]
  %s7 = inlined_call_operand.hbm [shape: bf16[128,128], index: 7, kind: input, shape index: {}]
  %s8 = inlined_call_operand.vmem [shape: f32[1,128], index: 8, kind: input, shape index: {}]
  %s9 = inlined_call_operand.vmem [shape: f32[1,128], index: 9, kind: input, shape index: {}]
  %s10 = inlined_call_operand.hbm [shape: bf16[128,128], index: 10, kind: input, shape index: {}]
  %s11 = inlined_call_operand.vmem [shape: f32[1,128], index: 11, kind: input, shape index: {}]
  %s12 = inlined_call_operand.hbm [shape: f32[2,16,16,128], index: 12, kind: output, shape index: {}]
  %s13 = sld [smem:[#allocation0]]
  $region101: #{tpu_custom_call.1} parent=0
    _
  %s15 = ssub.s32 1, %s13
  %s16 = scalar_select 0, %s15, %s13
  $region1: #{tpu_custom_call.1} parent=0
    #allocation2 [shape = 'u8[270336]{0}', space=vmem, size = 0x42000, scoped, tag = 'input window, operand 0']
    #allocation3 [shape = 's32[2]{0}', space=sflag, size = 0x8, scoped, tag = 'scoped memory for tpu_custom_call.1']
    #allocation4 [shape = 's32[2]{0}', space=sflag, size = 0x8, scoped, tag = 'scoped memory for tpu_custom_call.1']
    #allocation5 [shape = 'u8[28672]{0}', space=vmem, size = 0x7000, scoped, tag = 'input window, operand 1, single buffered']
    #allocation6 [shape = 's32[1]{0}', space=sflag, size = 0x4, scoped, tag = 'scoped memory for tpu_custom_call.1']
    #allocation7 [shape = 'u8[32768]{0}', space=vmem, size = 0x8000, scoped, tag = 'input window, operand 5, single buffered']
    #allocation8 [shape = 'u8[32768]{0}', space=vmem, size = 0x8000, scoped, tag = 'input window, operand 7, single buffered']
    #allocation9 [shape = 's32[1]{0}', space=sflag, size = 0x4, scoped, tag = 'scoped memory for tpu_custom_call.1']
    #allocation10 [shape = 'u8[32768]{0}', space=vmem, size = 0x8000, scoped, tag = 'input window, operand 10, single buffered']
    #allocation11 [shape = 'u8[131072]{0}', space=vmem, size = 0x20000, scoped, tag = 'output window, operand 0']
    %17 = vsyncpa [#allocation3], 0
    %s18 = scalar_lea.sflag [#allocation3], 1
    %19 = vsyncpa %s18, 0
    %20 = vsyncpa [#allocation6], 0
    %21 = vsyncpa [#allocation9], 0
    %22 = vsyncpa [#allocation4], 0
    %s23 = scalar_lea.sflag [#allocation4], 1
    %24 = vsyncpa %s23, 0
    loop: start=0, step=1, limit=6
    $region2: #{tpu_custom_call.1} parent=1 // loop_pre_header
      _
    $region3: #{tpu_custom_call.1} parent=1 // loop_header
      %s26 = sphi 0, %s30
      %p27 = scmp.ge.s32.totalorder %s26, 6
      %s33 = sphi 0, %s45
      %s34 = sphi 0, %s41
      %s35 = sphi 0, %s33
      %s36 = sphi 0, %s34
      %s37 = sphi 0, %s35
      %s38 = sphi 0, %s36
      %s48 = sphi 0, %s50
      %s51 = sphi 0, %s48
      %s52 = sphi 0, %s51
      %s68 = sphi 0, %s52
      %s72 = sphi 0, %s72
      %s74 = sphi 0, %s72
      %s75 = sphi 0, %s74
      %s89 = sphi 0, %s75
      %s93 = sphi 0, %s93
      %s95 = sphi 0, %s93
      %s96 = sphi 0, %s95
      %s110 = sphi 0, %s96
      %s114 = sphi 0, %s114
      %s116 = sphi 0, %s114
      %s117 = sphi 0, %s116
      %s131 = sphi 0, %s117
      %s135 = sphi 0, %s135
      %s137 = sphi 0, %s135
      %s138 = sphi 0, %s137
      %s152 = sphi 0, %s138
      %s156 = sphi 0, %s156
      %s158 = sphi 0, %s156
      %s159 = sphi 0, %s158
      %s173 = sphi 0, %s159
      %s177 = sphi 0, %s177
      %s179 = sphi 0, %s177
      %s180 = sphi 0, %s179
      %s194 = sphi 0, %s180
      %s198 = sphi 0, %s198
      %s200 = sphi 0, %s198
      %s201 = sphi 0, %s200
      %s215 = sphi 0, %s201
      %s219 = sphi 0, %s219
      %s221 = sphi 0, %s219
      %s222 = sphi 0, %s221
      %s236 = sphi 0, %s222
      %s240 = sphi 0, %s240
      %s242 = sphi 0, %s240
      %s243 = sphi 0, %s242
      %s257 = sphi 0, %s243
      %s261 = sphi 0, %s261
      %s263 = sphi 0, %s261
      %s264 = sphi 0, %s263
      %s278 = sphi 0, %s264
      %s282 = sphi 0, %s282
      %s284 = sphi 0, %s282
      %s285 = sphi 0, %s284
      %s299 = sphi 0, %s285
      %s307 = sphi 0, %s309
      %s310 = sphi 0, %s307
      %s311 = sphi 0, %s310
      %s327 = sphi 0, %s311
    $region4: #{tpu_custom_call.1} parent=1 // loop_header_branch
      %29 = sbr.rel (%p27) target = $region8
    $region5: #{tpu_custom_call.1} parent=1 // loop_body
      %s31 = ssub.s32 %s26, 1
      %s32 = ssub.s32 %s26, 2
      %s39 = sadd.s32 1, %s34
      %p40 = scmp.ge.s32.totalorder %s39, 2
      %s41 = scalar_select %p40, 0, %s39
      %s42 = sadd.s32 1, %s33
      %s43 = scalar_select %p40, %s42, %s33
      %p44 = scmp.ge.s32.totalorder %s43, 2
      %s45 = scalar_select %p44, 0, %s43
      %s46 = ssub.s32 %s33, %s45
      %p47 = scmp.eq.s32.totalorder %s46, 0
      %s49 = sadd.s32 %s48, 1
      %s50 = scalar_select %p47, %s48, %s49
      %p53 = pneg %p47
      %p54 = scmp.eq.s32.totalorder %s26, 3
      %p55 = por %p53, %p54
      %p56 = scmp.ne.s32.totalorder %s48, %s51
      %p57 = scmp.eq.s32.totalorder %s26, 0
      %p58 = por %p56, %p57
      %p59 = scmp.ne.s32.totalorder %s48, %s51
      %p60 = scmp.eq.s32.totalorder %s31, 3
      %p61 = por %p59, %p60
      %p62 = scmp.ne.s32.totalorder %s51, %s52
      %p63 = scmp.eq.s32.totalorder %s31, 0
      %p64 = por %p62, %p63
      %p65 = scmp.ne.s32.totalorder %s51, %s52
      %p66 = scmp.eq.s32.totalorder %s32, 3
      %p67 = por %p65, %p66
      %p69 = scmp.ne.s32.totalorder %s52, %s68
      %p70 = scmp.eq.s32.totalorder %s32, 0
      %p71 = por %p69, %p70
      %s73 = sadd.s32 %s72, 1
      %p76 = scmp.eq.s32.totalorder %s26, 3
      %p77 = scmp.ne.s32.totalorder %s72, %s74
      %p78 = scmp.eq.s32.totalorder %s26, 0
      %p79 = por %p77, %p78
      %p80 = scmp.ne.s32.totalorder %s72, %s74
      %p81 = scmp.eq.s32.totalorder %s31, 3
      %p82 = por %p80, %p81
      %p83 = scmp.ne.s32.totalorder %s74, %s75
      %p84 = scmp.eq.s32.totalorder %s31, 0
      %p85 = por %p83, %p84
      %p86 = scmp.ne.s32.totalorder %s74, %s75
      %p87 = scmp.eq.s32.totalorder %s32, 3
      %p88 = por %p86, %p87
      %p90 = scmp.ne.s32.totalorder %s75, %s89
      %p91 = scmp.eq.s32.totalorder %s32, 0
      %p92 = por %p90, %p91
      %s94 = sadd.s32 %s93, 1
      %p97 = scmp.eq.s32.totalorder %s26, 3
      %p98 = scmp.ne.s32.totalorder %s93, %s95
      %p99 = scmp.eq.s32.totalorder %s26, 0
      %p100 = por %p98, %p99
      %p101 = scmp.ne.s32.totalorder %s93, %s95
      %p102 = scmp.eq.s32.totalorder %s31, 3
      %p103 = por %p101, %p102
      %p104 = scmp.ne.s32.totalorder %s95, %s96
      %p105 = scmp.eq.s32.totalorder %s31, 0
      %p106 = por %p104, %p105
      %p107 = scmp.ne.s32.totalorder %s95, %s96
      %p108 = scmp.eq.s32.totalorder %s32, 3
      %p109 = por %p107, %p108
      %p111 = scmp.ne.s32.totalorder %s96, %s110
      %p112 = scmp.eq.s32.totalorder %s32, 0
      %p113 = por %p111, %p112
      %s115 = sadd.s32 %s114, 1
      %p118 = scmp.eq.s32.totalorder %s26, 3
      %p119 = scmp.ne.s32.totalorder %s114, %s116
      %p120 = scmp.eq.s32.totalorder %s26, 0
      %p121 = por %p119, %p120
      %p122 = scmp.ne.s32.totalorder %s114, %s116
      %p123 = scmp.eq.s32.totalorder %s31, 3
      %p124 = por %p122, %p123
      %p125 = scmp.ne.s32.totalorder %s116, %s117
      %p126 = scmp.eq.s32.totalorder %s31, 0
      %p127 = por %p125, %p126
      %p128 = scmp.ne.s32.totalorder %s116, %s117
      %p129 = scmp.eq.s32.totalorder %s32, 3
      %p130 = por %p128, %p129
      %p132 = scmp.ne.s32.totalorder %s117, %s131
      %p133 = scmp.eq.s32.totalorder %s32, 0
      %p134 = por %p132, %p133
      %s136 = sadd.s32 %s135, 1
      %p139 = scmp.eq.s32.totalorder %s26, 3
      %p140 = scmp.ne.s32.totalorder %s135, %s137
      %p141 = scmp.eq.s32.totalorder %s26, 0
      %p142 = por %p140, %p141
      %p143 = scmp.ne.s32.totalorder %s135, %s137
      %p144 = scmp.eq.s32.totalorder %s31, 3
      %p145 = por %p143, %p144
      %p146 = scmp.ne.s32.totalorder %s137, %s138
      %p147 = scmp.eq.s32.totalorder %s31, 0
      %p148 = por %p146, %p147
      %p149 = scmp.ne.s32.totalorder %s137, %s138
      %p150 = scmp.eq.s32.totalorder %s32, 3
      %p151 = por %p149, %p150
      %p153 = scmp.ne.s32.totalorder %s138, %s152
      %p154 = scmp.eq.s32.totalorder %s32, 0
      %p155 = por %p153, %p154
      %s157 = sadd.s32 %s156, 1
      %p160 = scmp.eq.s32.totalorder %s26, 3
      %p161 = scmp.ne.s32.totalorder %s156, %s158
      %p162 = scmp.eq.s32.totalorder %s26, 0
      %p163 = por %p161, %p162
      %p164 = scmp.ne.s32.totalorder %s156, %s158
      %p165 = scmp.eq.s32.totalorder %s31, 3
      %p166 = por %p164, %p165
      %p167 = scmp.ne.s32.totalorder %s158, %s159
      %p168 = scmp.eq.s32.totalorder %s31, 0
      %p169 = por %p167, %p168
      %p170 = scmp.ne.s32.totalorder %s158, %s159
      %p171 = scmp.eq.s32.totalorder %s32, 3
      %p172 = por %p170, %p171
      %p174 = scmp.ne.s32.totalorder %s159, %s173
      %p175 = scmp.eq.s32.totalorder %s32, 0
      %p176 = por %p174, %p175
      %s178 = sadd.s32 %s177, 1
      %p181 = scmp.eq.s32.totalorder %s26, 3
      %p182 = scmp.ne.s32.totalorder %s177, %s179
      %p183 = scmp.eq.s32.totalorder %s26, 0
      %p184 = por %p182, %p183
      %p185 = scmp.ne.s32.totalorder %s177, %s179
      %p186 = scmp.eq.s32.totalorder %s31, 3
      %p187 = por %p185, %p186
      %p188 = scmp.ne.s32.totalorder %s179, %s180
      %p189 = scmp.eq.s32.totalorder %s31, 0
      %p190 = por %p188, %p189
      %p191 = scmp.ne.s32.totalorder %s179, %s180
      %p192 = scmp.eq.s32.totalorder %s32, 3
      %p193 = por %p191, %p192
      %p195 = scmp.ne.s32.totalorder %s180, %s194
      %p196 = scmp.eq.s32.totalorder %s32, 0
      %p197 = por %p195, %p196
      %s199 = sadd.s32 %s198, 1
      %p202 = scmp.eq.s32.totalorder %s26, 3
      %p203 = scmp.ne.s32.totalorder %s198, %s200
      %p204 = scmp.eq.s32.totalorder %s26, 0
      %p205 = por %p203, %p204
      %p206 = scmp.ne.s32.totalorder %s198, %s200
      %p207 = scmp.eq.s32.totalorder %s31, 3
      %p208 = por %p206, %p207
      %p209 = scmp.ne.s32.totalorder %s200, %s201
      %p210 = scmp.eq.s32.totalorder %s31, 0
      %p211 = por %p209, %p210
      %p212 = scmp.ne.s32.totalorder %s200, %s201
      %p213 = scmp.eq.s32.totalorder %s32, 3
      %p214 = por %p212, %p213
      %p216 = scmp.ne.s32.totalorder %s201, %s215
      %p217 = scmp.eq.s32.totalorder %s32, 0
      %p218 = por %p216, %p217
      %s220 = sadd.s32 %s219, 1
      %p223 = scmp.eq.s32.totalorder %s26, 3
      %p224 = scmp.ne.s32.totalorder %s219, %s221
      %p225 = scmp.eq.s32.totalorder %s26, 0
      %p226 = por %p224, %p225
      %p227 = scmp.ne.s32.totalorder %s219, %s221
      %p228 = scmp.eq.s32.totalorder %s31, 3
      %p229 = por %p227, %p228
      %p230 = scmp.ne.s32.totalorder %s221, %s222
      %p231 = scmp.eq.s32.totalorder %s31, 0
      %p232 = por %p230, %p231
      %p233 = scmp.ne.s32.totalorder %s221, %s222
      %p234 = scmp.eq.s32.totalorder %s32, 3
      %p235 = por %p233, %p234
      %p237 = scmp.ne.s32.totalorder %s222, %s236
      %p238 = scmp.eq.s32.totalorder %s32, 0
      %p239 = por %p237, %p238
      %s241 = sadd.s32 %s240, 1
      %p244 = scmp.eq.s32.totalorder %s26, 3
      %p245 = scmp.ne.s32.totalorder %s240, %s242
      %p246 = scmp.eq.s32.totalorder %s26, 0
      %p247 = por %p245, %p246
      %p248 = scmp.ne.s32.totalorder %s240, %s242
      %p249 = scmp.eq.s32.totalorder %s31, 3
      %p250 = por %p248, %p249
      %p251 = scmp.ne.s32.totalorder %s242, %s243
      %p252 = scmp.eq.s32.totalorder %s31, 0
      %p253 = por %p251, %p252
      %p254 = scmp.ne.s32.totalorder %s242, %s243
      %p255 = scmp.eq.s32.totalorder %s32, 3
      %p256 = por %p254, %p255
      %p258 = scmp.ne.s32.totalorder %s243, %s257
      %p259 = scmp.eq.s32.totalorder %s32, 0
      %p260 = por %p258, %p259
      %s262 = sadd.s32 %s261, 1
      %p265 = scmp.eq.s32.totalorder %s26, 3
      %p266 = scmp.ne.s32.totalorder %s261, %s263
      %p267 = scmp.eq.s32.totalorder %s26, 0
      %p268 = por %p266, %p267
      %p269 = scmp.ne.s32.totalorder %s261, %s263
      %p270 = scmp.eq.s32.totalorder %s31, 3
      %p271 = por %p269, %p270
      %p272 = scmp.ne.s32.totalorder %s263, %s264
      %p273 = scmp.eq.s32.totalorder %s31, 0
      %p274 = por %p272, %p273
      %p275 = scmp.ne.s32.totalorder %s263, %s264
      %p276 = scmp.eq.s32.totalorder %s32, 3
      %p277 = por %p275, %p276
      %p279 = scmp.ne.s32.totalorder %s264, %s278
      %p280 = scmp.eq.s32.totalorder %s32, 0
      %p281 = por %p279, %p280
      %s283 = sadd.s32 %s282, 1
      %p286 = scmp.eq.s32.totalorder %s26, 3
      %p287 = scmp.ne.s32.totalorder %s282, %s284
      %p288 = scmp.eq.s32.totalorder %s26, 0
      %p289 = por %p287, %p288
      %p290 = scmp.ne.s32.totalorder %s282, %s284
      %p291 = scmp.eq.s32.totalorder %s31, 3
      %p292 = por %p290, %p291
      %p293 = scmp.ne.s32.totalorder %s284, %s285
      %p294 = scmp.eq.s32.totalorder %s31, 0
      %p295 = por %p293, %p294
      %p296 = scmp.ne.s32.totalorder %s284, %s285
      %p297 = scmp.eq.s32.totalorder %s32, 3
      %p298 = por %p296, %p297
      %p300 = scmp.ne.s32.totalorder %s285, %s299
      %p301 = scmp.eq.s32.totalorder %s32, 0
      %p302 = por %p300, %p301
      %s303 = ssub.s32 %s33, %s45
      %s304 = ssub.s32 %s34, %s41
      %s305 = sor.u32 %s303, %s304
      %p306 = scmp.eq.s32.totalorder %s305, 0
      %s308 = sadd.s32 %s307, 1
      %s309 = scalar_select %p306, %s307, %s308
      %p312 = pneg %p306
      %p313 = scmp.eq.s32.totalorder %s26, 3
      %p314 = por %p312, %p313
      %p315 = scmp.ne.s32.totalorder %s307, %s310
      %p316 = scmp.eq.s32.totalorder %s26, 0
      %p317 = por %p315, %p316
      %p318 = scmp.ne.s32.totalorder %s307, %s310
      %p319 = scmp.eq.s32.totalorder %s31, 3
      %p320 = por %p318, %p319
      %p321 = scmp.ne.s32.totalorder %s310, %s311
      %p322 = scmp.eq.s32.totalorder %s31, 0
      %p323 = por %p321, %p322
      %p324 = scmp.ne.s32.totalorder %s310, %s311
      %p325 = scmp.eq.s32.totalorder %s32, 3
      %p326 = por %p324, %p325
      %p328 = scmp.ne.s32.totalorder %s311, %s327
      %p329 = scmp.eq.s32.totalorder %s32, 0
      %p330 = por %p328, %p329
      %p331 = scmp.le.s32.totalorder 1, %s26
      %p332 = scmp.lt.s32.totalorder %s26, 5
      %p333 = pnand %p331, %p332
      %p334 = pneg %p333
      // Predicated region
      $region9: #{tpu_custom_call.1} parent=5 // pred_check
        _
      $region10: #{tpu_custom_call.1} parent=5 // pred_check_branch
        %336 = sbr.rel (%p333) target = $region12
      $region11: #{tpu_custom_call.1} parent=5 // pred_region
        %s337 = ssub.s32 %s26, 1
        // Predicated region
        $region13: #{tpu_custom_call.1} parent=11 // pred_check
          %p338 = pneg %p85
        $region14: #{tpu_custom_call.1} parent=11 // pred_check_branch
          %340 = sbr.rel (%p338) target = $region16
        $region15: #{tpu_custom_call.1} parent=11 // pred_region
          %s342 = ssub.s32 896, 896
          %343 = vsyncadd [#allocation6], %s342
          %s344 = sshll.u32 [#allocation5], 4
          %s345 = int_to_ptr.vmem [resolvable:$true] %s344
          %350 = dma.hbm_to_vmem [thread:$0]  %s1, 896, %s345, [#allocation6], 128, 128, 8
        $region16: #{tpu_custom_call.1} parent=11 // pred_fallthru
          _
        // Predicated region
        $region17: #{tpu_custom_call.1} parent=11 // pred_check
          %p351 = pneg %p106
        $region18: #{tpu_custom_call.1} parent=11 // pred_check_branch
          %353 = sbr.rel (%p351) target = $region20
        $region19: #{tpu_custom_call.1} parent=11 // pred_region
          _
        $region20: #{tpu_custom_call.1} parent=11 // pred_fallthru
          _
        // Predicated region
        $region21: #{tpu_custom_call.1} parent=11 // pred_check
          %p354 = pneg %p127
        $region22: #{tpu_custom_call.1} parent=11 // pred_check_branch
          %356 = sbr.rel (%p354) target = $region24
        $region23: #{tpu_custom_call.1} parent=11 // pred_region
          _
        $region24: #{tpu_custom_call.1} parent=11 // pred_fallthru
          _
        // Predicated region
        $region25: #{tpu_custom_call.1} parent=11 // pred_check
          %p357 = pneg %p148
        $region26: #{tpu_custom_call.1} parent=11 // pred_check_branch
          %359 = sbr.rel (%p357) target = $region28
        $region27: #{tpu_custom_call.1} parent=11 // pred_region
          _
        $region28: #{tpu_custom_call.1} parent=11 // pred_fallthru
          _
        // Predicated region
        $region29: #{tpu_custom_call.1} parent=11 // pred_check
          %p360 = pneg %p169
        $region30: #{tpu_custom_call.1} parent=11 // pred_check_branch
          %362 = sbr.rel (%p360) target = $region32
        $region31: #{tpu_custom_call.1} parent=11 // pred_region
          %s364 = ssub.s32 1024, 1024
          %365 = vsyncadd [#allocation6], %s364
          %s366 = sshll.u32 [#allocation7], 4
          %s367 = int_to_ptr.vmem [resolvable:$true] %s366
          %372 = dma.hbm_to_vmem [thread:$0]  %s5, 1024, %s367, [#allocation6], 64, 64, 4
        $region32: #{tpu_custom_call.1} parent=11 // pred_fallthru
          _
        // Predicated region
        $region33: #{tpu_custom_call.1} parent=11 // pred_check
          %p373 = pneg %p190
        $region34: #{tpu_custom_call.1} parent=11 // pred_check_branch
          %375 = sbr.rel (%p373) target = $region36
        $region35: #{tpu_custom_call.1} parent=11 // pred_region
          _
        $region36: #{tpu_custom_call.1} parent=11 // pred_fallthru
          _
        // Predicated region
        $region37: #{tpu_custom_call.1} parent=11 // pred_check
          %p376 = pneg %p211
        $region38: #{tpu_custom_call.1} parent=11 // pred_check_branch
          %378 = sbr.rel (%p376) target = $region40
        $region39: #{tpu_custom_call.1} parent=11 // pred_region
          %s380 = ssub.s32 1024, 1024
          %381 = vsyncadd [#allocation9], %s380
          %s382 = sshll.u32 [#allocation8], 4
          %s383 = int_to_ptr.vmem [resolvable:$true] %s382
          %388 = dma.hbm_to_vmem [thread:$0]  %s7, 1024, %s383, [#allocation9], 64, 64, 4
        $region40: #{tpu_custom_call.1} parent=11 // pred_fallthru
          _
        // Predicated region
        $region41: #{tpu_custom_call.1} parent=11 // pred_check
          %p389 = pneg %p232
        $region42: #{tpu_custom_call.1} parent=11 // pred_check_branch
          %391 = sbr.rel (%p389) target = $region44
        $region43: #{tpu_custom_call.1} parent=11 // pred_region
          _
        $region44: #{tpu_custom_call.1} parent=11 // pred_fallthru
          _
        // Predicated region
        $region45: #{tpu_custom_call.1} parent=11 // pred_check
          %p392 = pneg %p253
        $region46: #{tpu_custom_call.1} parent=11 // pred_check_branch
          %394 = sbr.rel (%p392) target = $region48
        $region47: #{tpu_custom_call.1} parent=11 // pred_region
          _
        $region48: #{tpu_custom_call.1} parent=11 // pred_fallthru
          _
        // Predicated region
        $region49: #{tpu_custom_call.1} parent=11 // pred_check
          %p395 = pneg %p274
        $region50: #{tpu_custom_call.1} parent=11 // pred_check_branch
          %397 = sbr.rel (%p395) target = $region52
        $region51: #{tpu_custom_call.1} parent=11 // pred_region
          %s399 = ssub.s32 1024, 1024
          %400 = vsyncadd [#allocation9], %s399
          %s401 = sshll.u32 [#allocation10], 4
          %s402 = int_to_ptr.vmem [resolvable:$true] %s401
          %407 = dma.hbm_to_vmem [thread:$0]  %s10, 1024, %s402, [#allocation9], 64, 64, 4
        $region52: #{tpu_custom_call.1} parent=11 // pred_fallthru
          _
        // Predicated region
        $region53: #{tpu_custom_call.1} parent=11 // pred_check
          %p408 = pneg %p295
        $region54: #{tpu_custom_call.1} parent=11 // pred_check_branch
          %410 = sbr.rel (%p408) target = $region56
        $region55: #{tpu_custom_call.1} parent=11 // pred_region
          _
        $region56: #{tpu_custom_call.1} parent=11 // pred_fallthru
          _
      $region12: #{tpu_custom_call.1} parent=5 // pred_fallthru
        _
      %p411 = scmp.lt.s32.totalorder %s26, 4
      // Predicated region
      $region57: #{tpu_custom_call.1} parent=5 // pred_check
        %p412 = pneg %p411
      $region58: #{tpu_custom_call.1} parent=5 // pred_check_branch
        %414 = sbr.rel (%p412) target = $region60
      $region59: #{tpu_custom_call.1} parent=5 // pred_region
        // Predicated region
        $region61: #{tpu_custom_call.1} parent=59 // pred_check
          %p415 = pneg %p58
        $region62: #{tpu_custom_call.1} parent=59 // pred_check_branch
          %417 = sbr.rel (%p415) target = $region64
        $region63: #{tpu_custom_call.1} parent=59 // pred_region
          %s418 = sand.u32 %s48, 1
          %s419 = scalar_lea.sflag [#allocation3], %s418
          %s420 = sand.u32 %s48, 1
          %s421 = smul.addr %s420, 264
          %s422 = scalar_lea.vmem [#allocation2], %s421
          %s424 = ssub.s32 4224, 4224
          %425 = vsyncadd %s419, %s424
          %s426 = smul.addr %s33, 66
          %s427 = smul.addr %s426, 64
          %s428 = scalar_lea.hbm %s0, %s427
          %s429 = sshll.u32 %s422, 4
          %s430 = int_to_ptr.vmem [resolvable:$true] %s429
          %435 = dma.hbm_to_vmem [thread:$0]  %s428, 4224, %s430, %s419, 64, 64, 4
        $region64: #{tpu_custom_call.1} parent=59 // pred_fallthru
          _
      $region60: #{tpu_custom_call.1} parent=5 // pred_fallthru
        _
      %p436 = scmp.le.s32.totalorder 1, %s26
      %p437 = scmp.lt.s32.totalorder %s26, 5
      %p438 = pnand %p436, %p437
      %p439 = pneg %p438
      // Predicated region
      $region65: #{tpu_custom_call.1} parent=5 // pred_check
        _
      $region66: #{tpu_custom_call.1} parent=5 // pred_check_branch
        %441 = sbr.rel (%p438) target = $region68
      $region67: #{tpu_custom_call.1} parent=5 // pred_region
        %s442 = ssub.s32 %s26, 1
        %s443 = sand.u32 %s51, 1
        %s444 = scalar_lea.sflag [#allocation3], %s443
        %s445 = sand.u32 %s51, 1
        %s446 = smul.addr %s445, 264
        %s447 = scalar_lea.vmem [#allocation2], %s446
        // Predicated region
        $region69: #{tpu_custom_call.1} parent=67 // pred_check
          %p448 = pneg %p64
        $region70: #{tpu_custom_call.1} parent=67 // pred_check_branch
          %450 = sbr.rel (%p448) target = $region72
        $region71: #{tpu_custom_call.1} parent=67 // pred_region
          %451 = dma.done %s444, 4224
        $region72: #{tpu_custom_call.1} parent=67 // pred_fallthru
          _
        // Predicated region
        $region73: #{tpu_custom_call.1} parent=67 // pred_check
          %p452 = pneg %p85
        $region74: #{tpu_custom_call.1} parent=67 // pred_check_branch
          %454 = sbr.rel (%p452) target = $region76
        $region75: #{tpu_custom_call.1} parent=67 // pred_region
          %455 = dma.done [#allocation6], 896
        $region76: #{tpu_custom_call.1} parent=67 // pred_fallthru
          _
        // Predicated region
        $region77: #{tpu_custom_call.1} parent=67 // pred_check
          %p456 = pneg %p169
        $region78: #{tpu_custom_call.1} parent=67 // pred_check_branch
          %458 = sbr.rel (%p456) target = $region80
        $region79: #{tpu_custom_call.1} parent=67 // pred_region
          %459 = dma.done [#allocation6], 1024
        $region80: #{tpu_custom_call.1} parent=67 // pred_fallthru
          _
        // Predicated region
        $region81: #{tpu_custom_call.1} parent=67 // pred_check
          %p460 = pneg %p211
        $region82: #{tpu_custom_call.1} parent=67 // pred_check_branch
          %462 = sbr.rel (%p460) target = $region84
        $region83: #{tpu_custom_call.1} parent=67 // pred_region
          %463 = dma.done [#allocation9], 1024
        $region84: #{tpu_custom_call.1} parent=67 // pred_fallthru
          _
        // Predicated region
        $region85: #{tpu_custom_call.1} parent=67 // pred_check
          %p464 = pneg %p274
        $region86: #{tpu_custom_call.1} parent=67 // pred_check_branch
          %466 = sbr.rel (%p464) target = $region88
        $region87: #{tpu_custom_call.1} parent=67 // pred_region
          %467 = dma.done [#allocation9], 1024
        $region88: #{tpu_custom_call.1} parent=67 // pred_fallthru
          _
        %s468 = sand.u32 %s51, 1
        %s469 = scalar_lea.sflag [#allocation3], %s468
        %s470 = sand.u32 %s51, 1
        %s471 = smul.addr %s470, 264
        %s472 = scalar_lea.vmem [#allocation2], %s471
        %p473 = pneg %p64
        %p474 = pneg %p61
        %p475 = pneg %p85
        %p476 = pneg %p82
        %p477 = pneg %p106
        %p478 = pneg %p103
        %p479 = pneg %p127
        %p480 = pneg %p124
        %p481 = pneg %p148
        %p482 = pneg %p145
        %p483 = pneg %p169
        %p484 = pneg %p166
        %p485 = pneg %p190
        %p486 = pneg %p187
        %p487 = pneg %p211
        %p488 = pneg %p208
        %p489 = pneg %p232
        %p490 = pneg %p229
        %p491 = pneg %p253
        %p492 = pneg %p250
        %p493 = pneg %p274
        %p494 = pneg %p271
        %p495 = pneg %p295
        %p496 = pneg %p292
        %p497 = pneg %p323
        %p498 = pneg %p320
        %s499 = sand.u32 %s310, 1
        %s500 = scalar_lea.sflag [#allocation4], %s499
        %s501 = sand.u32 %s310, 1
        %s502 = smul.addr %s501, 128
        %s503 = scalar_lea.vmem [#allocation11], %s502
        %s504 = smul.u32 8, %s36
        %v506 = vld [vmem:[#allocation5] sm:$0xff]
        %v507 = vld [vmem:[#allocation5 + $0x8] sm:$0xff]
        %v508 = vld [vmem:[#allocation5 + $0x10] sm:$0xff]
        %v509 = vld [vmem:[#allocation5 + $0x18] sm:$0xff]
        %v510 = vld [vmem:[#allocation5 + $0x20] sm:$0xff]
        %v511 = vld [vmem:[#allocation5 + $0x28] sm:$0xff]
        %v512 = vld [vmem:[#allocation5 + $0x30] sm:$0x1]
        %v513 = vld [vmem:[%s2] sm:$0x1]
        %v514 = vld [vmem:[%s3] sm:$0x1]
        %v515 = vld [vmem:[%s4] sm:$0x1]
        %v516 = vld [vmem:[%s6] sm:$0x1]
        %v517 = vld [vmem:[%s8] sm:$0x1]
        %v518 = vld [vmem:[%s9] sm:$0x1]
        %v519 = vld [vmem:[%s11] sm:$0x1]
        %s520 = smul.u32 %s36, 8
        %s521 = smul.u32 %s520, 3
        %s522 = smul.addr %s521, 4
        %s523 = scalar_lea.vmem %s447, %s522 [#allocation2]
        %v524 = vld [vmem:[%s523] sm:$0xf]
        %v525 = vld [vmem:[%s523 + $0x4] sm:$0xf]
        %v526 = vld [vmem:[%s523 + $0x8] sm:$0xf]
        %v527 = vld [vmem:[%s523 + $0xc] sm:$0xf]
        %v528 = vld [vmem:[%s523 + $0x10] sm:$0xf]
        %v529 = vld [vmem:[%s523 + $0x14] sm:$0xf]
        %v530 = vld [vmem:[%s523 + $0x18] sm:$0xf]
        %v531 = vld [vmem:[%s523 + $0x1c] sm:$0xf]
        %v532 = vld [vmem:[%s523 + $0x20] sm:$0xf]
        %v533 = vld [vmem:[%s523 + $0x24] sm:$0xf]
        %v534 = vld [vmem:[%s523 + $0x28] sm:$0xf]
        %v535 = vld [vmem:[%s523 + $0x2c] sm:$0xf]
        %v536 = vld [vmem:[%s523 + $0x30] sm:$0xf]
        %v537 = vld [vmem:[%s523 + $0x34] sm:$0xf]
        %v538 = vld [vmem:[%s523 + $0x38] sm:$0xf]
        %v539 = vld [vmem:[%s523 + $0x3c] sm:$0xf]
        %v540 = vld [vmem:[%s523 + $0x40] sm:$0xf]
        %v541 = vld [vmem:[%s523 + $0x44] sm:$0xf]
        %v542 = vld [vmem:[%s523 + $0x48] sm:$0xf]
        %v543 = vld [vmem:[%s523 + $0x4c] sm:$0xf]
        %v544 = vld [vmem:[%s523 + $0x50] sm:$0xf]
        %v545 = vld [vmem:[%s523 + $0x54] sm:$0xf]
        %v546 = vld [vmem:[%s523 + $0x58] sm:$0xf]
        %v547 = vld [vmem:[%s523 + $0x5c] sm:$0xf]
        %v548 = vld [vmem:[%s523 + $0x60] sm:$0xf]
        %v549 = vld [vmem:[%s523 + $0x64] sm:$0xf]
        %v550 = vld [vmem:[%s523 + $0x68] sm:$0xf]
        %v551 = vld [vmem:[%s523 + $0x6c] sm:$0xf]
        %v552 = vld [vmem:[%s523 + $0x70] sm:$0xf]
        %v553 = vld [vmem:[%s523 + $0x74] sm:$0xf]
        %v554 = vld [vmem:[%s523 + $0x78] sm:$0xf]
        %v555 = vld [vmem:[%s523 + $0x7c] sm:$0xf]
        %v556 = vld [vmem:[%s523 + $0x80] sm:$0xf]
        %v557 = vld [vmem:[%s523 + $0x84] sm:$0xf]
        %v558 = vld [vmem:[%s523 + $0x88] sm:$0xf]
        %v559 = vld [vmem:[%s523 + $0x8c] sm:$0xf]
        %v560 = vld [vmem:[%s523 + $0x90] sm:$0xf]
        %v561 = vld [vmem:[%s523 + $0x94] sm:$0xf]
        %v562 = vld [vmem:[%s523 + $0x98] sm:$0xf]
        %v563 = vld [vmem:[%s523 + $0x9c] sm:$0xf]
        %v564 = vld [vmem:[%s523 + $0xa0] sm:$0xf]
        %v565 = vld [vmem:[%s523 + $0xa4] sm:$0xf]
        %v566 = vunpack.c.l.bf16 %v524
        %v567 = vunpack.c.l.bf16 %v525
        %v568 = vunpack.c.l.bf16 %v526
        %v569 = vunpack.c.l.bf16 %v527
        %v570 = vunpack.c.l.bf16 %v528
        %v571 = vunpack.c.l.bf16 %v529
        %v572 = vunpack.c.l.bf16 %v530
        %v573 = vunpack.c.l.bf16 %v531
        %v574 = vunpack.c.l.bf16 %v532
        %v575 = vunpack.c.l.bf16 %v533
        %v576 = vunpack.c.l.bf16 %v534
        %v577 = vunpack.c.l.bf16 %v535
        %v578 = vunpack.c.l.bf16 %v536
        %v579 = vunpack.c.l.bf16 %v537
        %v580 = vunpack.c.l.bf16 %v538
        %v581 = vunpack.c.l.bf16 %v539
        %v582 = vunpack.c.l.bf16 %v540
        %v583 = vunpack.c.l.bf16 %v541
        %v584 = vunpack.c.l.bf16 %v542
        %v585 = vunpack.c.l.bf16 %v543
        %v586 = vunpack.c.l.bf16 %v544
        %v587 = vunpack.c.l.bf16 %v545
        %v588 = vunpack.c.l.bf16 %v546
        %v589 = vunpack.c.l.bf16 %v547
        %v590 = vunpack.c.l.bf16 %v548
        %v591 = vunpack.c.l.bf16 %v549
        %v592 = vunpack.c.l.bf16 %v550
        %v593 = vunpack.c.l.bf16 %v551
        %v594 = vunpack.c.l.bf16 %v552
        %v595 = vunpack.c.l.bf16 %v553
        %v596 = vunpack.c.l.bf16 %v554
        %v597 = vunpack.c.l.bf16 %v555
        %v598 = vunpack.c.l.bf16 %v556
        %v599 = vunpack.c.l.bf16 %v557
        %v600 = vunpack.c.l.bf16 %v558
        %v601 = vunpack.c.l.bf16 %v559
        %v602 = vunpack.c.l.bf16 %v560
        %v603 = vunpack.c.l.bf16 %v561
        %v604 = vunpack.c.l.bf16 %v562
        %v605 = vunpack.c.l.bf16 %v563
        %v606 = vunpack.c.l.bf16 %v564
        %v607 = vunpack.c.l.bf16 %v565
        %v608 = vlaneseq
        %v609 = vshrl.u32 %v608, 7
        %v610 = vsub.s32 0, %v609
        %v611 = vrot.slane %v506, %v610
        %v612 = vmul.f32 %v566, %v611
        %v613 = vmul.f32 %v567, %v611
        %v614 = vmul.f32 %v569, %v611
        %v615 = vmul.f32 %v570, %v611
        %v616 = vmul.f32 %v572, %v611
        %v617 = vmul.f32 %v573, %v611
        %v618 = vmul.f32 %v575, %v611
        %v619 = vmul.f32 %v576, %v611
        %v620 = vmul.f32 %v578, %v611
        %v621 = vmul.f32 %v579, %v611
        %v622 = vmul.f32 %v581, %v611
        %v623 = vmul.f32 %v582, %v611
        %v624 = vmul.f32 %v584, %v611
        %v625 = vmul.f32 %v585, %v611
        %v626 = vmul.f32 %v587, %v611
        %v627 = vmul.f32 %v588, %v611
        %v628 = vadd.f32 %v612, 0.0
        %v629 = vadd.f32 %v613, 0.0
        %v630 = vadd.f32 %v614, 0.0
        %v631 = vadd.f32 %v615, 0.0
        %v632 = vadd.f32 %v616, 0.0
        %v633 = vadd.f32 %v617, 0.0
        %v634 = vadd.f32 %v618, 0.0
        %v635 = vadd.f32 %v619, 0.0
        %v636 = vadd.f32 %v620, 0.0
        %v637 = vadd.f32 %v621, 0.0
        %v638 = vadd.f32 %v622, 0.0
        %v639 = vadd.f32 %v623, 0.0
        %v640 = vadd.f32 %v624, 0.0
        %v641 = vadd.f32 %v625, 0.0
        %v642 = vadd.f32 %v626, 0.0
        %v643 = vadd.f32 %v627, 0.0
        %v644 = vlaneseq
        %v645 = vshrl.u32 %v644, 7
        %v646 = vsub.s32 7, %v645
        %v647 = vrot.slane %v506, %v646
        %v648 = vmul.f32 %v569, %v647
        %v649 = vmul.f32 %v570, %v647
        %v650 = vmul.f32 %v572, %v647
        %v651 = vmul.f32 %v573, %v647
        %v652 = vmul.f32 %v575, %v647
        %v653 = vmul.f32 %v576, %v647
        %v654 = vmul.f32 %v578, %v647
        %v655 = vmul.f32 %v579, %v647
        %v656 = vmul.f32 %v581, %v647
        %v657 = vmul.f32 %v582, %v647
        %v658 = vmul.f32 %v584, %v647
        %v659 = vmul.f32 %v585, %v647
        %v660 = vmul.f32 %v587, %v647
        %v661 = vmul.f32 %v588, %v647
        %v662 = vmul.f32 %v590, %v647
        %v663 = vmul.f32 %v591, %v647
        %v664 = vadd.f32 %v628, %v648
        %v665 = vadd.f32 %v629, %v649
        %v666 = vadd.f32 %v630, %v650
        %v667 = vadd.f32 %v631, %v651
        %v668 = vadd.f32 %v632, %v652
        %v669 = vadd.f32 %v633, %v653
        %v670 = vadd.f32 %v634, %v654
        %v671 = vadd.f32 %v635, %v655
        %v672 = vadd.f32 %v636, %v656
        %v673 = vadd.f32 %v637, %v657
        %v674 = vadd.f32 %v638, %v658
        %v675 = vadd.f32 %v639, %v659
        %v676 = vadd.f32 %v640, %v660
        %v677 = vadd.f32 %v641, %v661
        %v678 = vadd.f32 %v642, %v662
        %v679 = vadd.f32 %v643, %v663
        %v680 = vlaneseq
        %v681 = vshrl.u32 %v680, 7
        %v682 = vsub.s32 6, %v681
        %v683 = vrot.slane %v507, %v682
        %v684 = vmul.f32 %v572, %v683
        %v685 = vmul.f32 %v573, %v683
        %v686 = vmul.f32 %v575, %v683
        %v687 = vmul.f32 %v576, %v683
        %v688 = vmul.f32 %v578, %v683
        %v689 = vmul.f32 %v579, %v683
        %v690 = vmul.f32 %v581, %v683
        %v691 = vmul.f32 %v582, %v683
        %v692 = vmul.f32 %v584, %v683
        %v693 = vmul.f32 %v585, %v683
        %v694 = vmul.f32 %v587, %v683
        %v695 = vmul.f32 %v588, %v683
        %v696 = vmul.f32 %v590, %v683
        %v697 = vmul.f32 %v591, %v683
        %v698 = vmul.f32 %v593, %v683
        %v699 = vmul.f32 %v594, %v683
        %v700 = vadd.f32 %v664, %v684
        %v701 = vadd.f32 %v665, %v685
        %v702 = vadd.f32 %v666, %v686
        %v703 = vadd.f32 %v667, %v687
        %v704 = vadd.f32 %v668, %v688
        %v705 = vadd.f32 %v669, %v689
        %v706 = vadd.f32 %v670, %v690
        %v707 = vadd.f32 %v671, %v691
        %v708 = vadd.f32 %v672, %v692
        %v709 = vadd.f32 %v673, %v693
        %v710 = vadd.f32 %v674, %v694
        %v711 = vadd.f32 %v675, %v695
        %v712 = vadd.f32 %v676, %v696
        %v713 = vadd.f32 %v677, %v697
        %v714 = vadd.f32 %v678, %v698
        %v715 = vadd.f32 %v679, %v699
        %v716 = vlaneseq
        %v717 = vshrl.u32 %v716, 7
        %v718 = vsub.s32 5, %v717
        %v719 = vrot.slane %v508, %v718
        %v720 = vmul.f32 %v575, %v719
        %v721 = vmul.f32 %v576, %v719
        %v722 = vmul.f32 %v578, %v719
        %v723 = vmul.f32 %v579, %v719
        %v724 = vmul.f32 %v581, %v719
        %v725 = vmul.f32 %v582, %v719
        %v726 = vmul.f32 %v584, %v719
        %v727 = vmul.f32 %v585, %v719
        %v728 = vmul.f32 %v587, %v719
        %v729 = vmul.f32 %v588, %v719
        %v730 = vmul.f32 %v590, %v719
        %v731 = vmul.f32 %v591, %v719
        %v732 = vmul.f32 %v593, %v719
        %v733 = vmul.f32 %v594, %v719
        %v734 = vmul.f32 %v596, %v719
        %v735 = vmul.f32 %v597, %v719
        %v736 = vadd.f32 %v700, %v720
        %v737 = vadd.f32 %v701, %v721
        %v738 = vadd.f32 %v702, %v722
        %v739 = vadd.f32 %v703, %v723
        %v740 = vadd.f32 %v704, %v724
        %v741 = vadd.f32 %v705, %v725
        %v742 = vadd.f32 %v706, %v726
        %v743 = vadd.f32 %v707, %v727
        %v744 = vadd.f32 %v708, %v728
        %v745 = vadd.f32 %v709, %v729
        %v746 = vadd.f32 %v710, %v730
        %v747 = vadd.f32 %v711, %v731
        %v748 = vadd.f32 %v712, %v732
        %v749 = vadd.f32 %v713, %v733
        %v750 = vadd.f32 %v714, %v734
        %v751 = vadd.f32 %v715, %v735
        %v752 = vlaneseq
        %v753 = vshrl.u32 %v752, 7
        %v754 = vsub.s32 4, %v753
        %v755 = vrot.slane %v509, %v754
        %v756 = vmul.f32 %v578, %v755
        %v757 = vmul.f32 %v579, %v755
        %v758 = vmul.f32 %v581, %v755
        %v759 = vmul.f32 %v582, %v755
        %v760 = vmul.f32 %v584, %v755
        %v761 = vmul.f32 %v585, %v755
        %v762 = vmul.f32 %v587, %v755
        %v763 = vmul.f32 %v588, %v755
        %v764 = vmul.f32 %v590, %v755
        %v765 = vmul.f32 %v591, %v755
        %v766 = vmul.f32 %v593, %v755
        %v767 = vmul.f32 %v594, %v755
        %v768 = vmul.f32 %v596, %v755
        %v769 = vmul.f32 %v597, %v755
        %v770 = vmul.f32 %v599, %v755
        %v771 = vmul.f32 %v600, %v755
        %v772 = vadd.f32 %v736, %v756
        %v773 = vadd.f32 %v737, %v757
        %v774 = vadd.f32 %v738, %v758
        %v775 = vadd.f32 %v739, %v759
        %v776 = vadd.f32 %v740, %v760
        %v777 = vadd.f32 %v741, %v761
        %v778 = vadd.f32 %v742, %v762
        %v779 = vadd.f32 %v743, %v763
        %v780 = vadd.f32 %v744, %v764
        %v781 = vadd.f32 %v745, %v765
        %v782 = vadd.f32 %v746, %v766
        %v783 = vadd.f32 %v747, %v767
        %v784 = vadd.f32 %v748, %v768
        %v785 = vadd.f32 %v749, %v769
        %v786 = vadd.f32 %v750, %v770
        %v787 = vadd.f32 %v751, %v771
        %v788 = vlaneseq
        %v789 = vshrl.u32 %v788, 7
        %v790 = vsub.s32 3, %v789
        %v791 = vrot.slane %v510, %v790
        %v792 = vmul.f32 %v581, %v791
        %v793 = vmul.f32 %v582, %v791
        %v794 = vmul.f32 %v584, %v791
        %v795 = vmul.f32 %v585, %v791
        %v796 = vmul.f32 %v587, %v791
        %v797 = vmul.f32 %v588, %v791
        %v798 = vmul.f32 %v590, %v791
        %v799 = vmul.f32 %v591, %v791
        %v800 = vmul.f32 %v593, %v791
        %v801 = vmul.f32 %v594, %v791
        %v802 = vmul.f32 %v596, %v791
        %v803 = vmul.f32 %v597, %v791
        %v804 = vmul.f32 %v599, %v791
        %v805 = vmul.f32 %v600, %v791
        %v806 = vmul.f32 %v602, %v791
        %v807 = vmul.f32 %v603, %v791
        %v808 = vadd.f32 %v772, %v792
        %v809 = vadd.f32 %v773, %v793
        %v810 = vadd.f32 %v774, %v794
        %v811 = vadd.f32 %v775, %v795
        %v812 = vadd.f32 %v776, %v796
        %v813 = vadd.f32 %v777, %v797
        %v814 = vadd.f32 %v778, %v798
        %v815 = vadd.f32 %v779, %v799
        %v816 = vadd.f32 %v780, %v800
        %v817 = vadd.f32 %v781, %v801
        %v818 = vadd.f32 %v782, %v802
        %v819 = vadd.f32 %v783, %v803
        %v820 = vadd.f32 %v784, %v804
        %v821 = vadd.f32 %v785, %v805
        %v822 = vadd.f32 %v786, %v806
        %v823 = vadd.f32 %v787, %v807
        %v824 = vlaneseq
        %v825 = vshrl.u32 %v824, 7
        %v826 = vsub.s32 2, %v825
        %v827 = vrot.slane %v511, %v826
        %v828 = vmul.f32 %v584, %v827
        %v829 = vmul.f32 %v585, %v827
        %v830 = vmul.f32 %v587, %v827
        %v831 = vmul.f32 %v588, %v827
        %v832 = vmul.f32 %v590, %v827
        %v833 = vmul.f32 %v591, %v827
        %v834 = vmul.f32 %v593, %v827
        %v835 = vmul.f32 %v594, %v827
        %v836 = vmul.f32 %v596, %v827
        %v837 = vmul.f32 %v597, %v827
        %v838 = vmul.f32 %v599, %v827
        %v839 = vmul.f32 %v600, %v827
        %v840 = vmul.f32 %v602, %v827
        %v841 = vmul.f32 %v603, %v827
        %v842 = vmul.f32 %v605, %v827
        %v843 = vmul.f32 %v606, %v827
        %v844 = vadd.f32 %v808, %v828
        %v845 = vadd.f32 %v809, %v829
        %v846 = vadd.f32 %v810, %v830
        %v847 = vadd.f32 %v811, %v831
        %v848 = vadd.f32 %v812, %v832
        %v849 = vadd.f32 %v813, %v833
        %v850 = vadd.f32 %v814, %v834
        %v851 = vadd.f32 %v815, %v835
        %v852 = vadd.f32 %v816, %v836
        %v853 = vadd.f32 %v817, %v837
        %v854 = vadd.f32 %v818, %v838
        %v855 = vadd.f32 %v819, %v839
        %v856 = vadd.f32 %v820, %v840
        %v857 = vadd.f32 %v821, %v841
        %v858 = vadd.f32 %v822, %v842
        %v859 = vadd.f32 %v823, %v843
        %v860 = vrot.slane %v566, 1
        %v861 = vrot.slane %v567, 1
        %v862 = vrot.slane %v568, 1
        %v863 = vrot.slane %v569, 1
        %v864 = vrot.slane %v570, 1
        %v865 = vrot.slane %v571, 1
        %v866 = vrot.slane %v572, 1
        %v867 = vrot.slane %v573, 1
        %v868 = vrot.slane %v574, 1
        %v869 = vrot.slane %v575, 1
        %v870 = vrot.slane %v576, 1
        %v871 = vrot.slane %v577, 1
        %v872 = vrot.slane %v578, 1
        %v873 = vrot.slane %v579, 1
        %v874 = vrot.slane %v580, 1
        %v875 = vrot.slane %v581, 1
        %v876 = vrot.slane %v582, 1
        %v877 = vrot.slane %v583, 1
        %v878 = vrot.slane %v584, 1
        %v879 = vrot.slane %v585, 1
        %v880 = vrot.slane %v586, 1
        %v881 = vrot.slane %v587, 1
        %v882 = vrot.slane %v588, 1
        %v883 = vrot.slane %v589, 1
        %v884 = vrot.slane %v590, 1
        %v885 = vrot.slane %v591, 1
        %v886 = vrot.slane %v592, 1
        %v887 = vrot.slane %v593, 1
        %v888 = vrot.slane %v594, 1
        %v889 = vrot.slane %v595, 1
        %v890 = vrot.slane %v596, 1
        %v891 = vrot.slane %v597, 1
        %v892 = vrot.slane %v598, 1
        %v893 = vrot.slane %v599, 1
        %v894 = vrot.slane %v600, 1
        %v895 = vrot.slane %v601, 1
        %v896 = vrot.slane %v602, 1
        %v897 = vrot.slane %v603, 1
        %v898 = vrot.slane %v604, 1
        %v899 = vrot.slane %v605, 1
        %v900 = vrot.slane %v606, 1
        %v901 = vrot.slane %v607, 1
        %v902 = vlaneseq
        %v903 = vshrl.u32 %v902, 7
        %vm904 = vcmp.lt.s32.totalorder %v903, 7
        %v905 = vsel %vm904, %v900, %v901
        %v906 = vsel %vm904, %v899, %v900
        %v907 = vsel %vm904, %v897, %v898
        %v908 = vsel %vm904, %v896, %v897
        %v909 = vsel %vm904, %v894, %v895
        %v910 = vsel %vm904, %v893, %v894
        %v911 = vsel %vm904, %v891, %v892
        %v912 = vsel %vm904, %v890, %v891
        %v913 = vsel %vm904, %v888, %v889
        %v914 = vsel %vm904, %v887, %v888
        %v915 = vsel %vm904, %v885, %v886
        %v916 = vsel %vm904, %v884, %v885
        %v917 = vsel %vm904, %v882, %v883
        %v918 = vsel %vm904, %v881, %v882
        %v919 = vsel %vm904, %v879, %v880
        %v920 = vsel %vm904, %v878, %v879
        %v921 = vsel %vm904, %v876, %v877
        %v922 = vsel %vm904, %v875, %v876
        %v923 = vsel %vm904, %v873, %v874
        %v924 = vsel %vm904, %v872, %v873
        %v925 = vsel %vm904, %v870, %v871
        %v926 = vsel %vm904, %v869, %v870
        %v927 = vsel %vm904, %v867, %v868
        %v928 = vsel %vm904, %v866, %v867
        %v929 = vsel %vm904, %v864, %v865
        %v930 = vsel %vm904, %v863, %v864
        %v931 = vsel %vm904, %v861, %v862
        %v932 = vsel %vm904, %v860, %v861
        %v933 = vlaneseq
        %v934 = vshrl.u32 %v933, 7
        %v935 = vsub.s32 1, %v934
        %v936 = vrot.slane %v506, %v935
        %v937 = vmul.f32 %v932, %v936
        %v938 = vmul.f32 %v931, %v936
        %v939 = vmul.f32 %v930, %v936
        %v940 = vmul.f32 %v929, %v936
        %v941 = vmul.f32 %v928, %v936
        %v942 = vmul.f32 %v927, %v936
        %v943 = vmul.f32 %v926, %v936
        %v944 = vmul.f32 %v925, %v936
        %v945 = vmul.f32 %v924, %v936
        %v946 = vmul.f32 %v923, %v936
        %v947 = vmul.f32 %v922, %v936
        %v948 = vmul.f32 %v921, %v936
        %v949 = vmul.f32 %v920, %v936
        %v950 = vmul.f32 %v919, %v936
        %v951 = vmul.f32 %v918, %v936
        %v952 = vmul.f32 %v917, %v936
        %v953 = vadd.f32 %v844, %v937
        %v954 = vadd.f32 %v845, %v938
        %v955 = vadd.f32 %v846, %v939
        %v956 = vadd.f32 %v847, %v940
        %v957 = vadd.f32 %v848, %v941
        %v958 = vadd.f32 %v849, %v942
        %v959 = vadd.f32 %v850, %v943
        %v960 = vadd.f32 %v851, %v944
        %v961 = vadd.f32 %v852, %v945
        %v962 = vadd.f32 %v853, %v946
        %v963 = vadd.f32 %v854, %v947
        %v964 = vadd.f32 %v855, %v948
        %v965 = vadd.f32 %v856, %v949
        %v966 = vadd.f32 %v857, %v950
        %v967 = vadd.f32 %v858, %v951
        %v968 = vadd.f32 %v859, %v952
        %v969 = vlaneseq
        %v970 = vshrl.u32 %v969, 7
        %v971 = vsub.s32 0, %v970
        %v972 = vrot.slane %v507, %v971
        %v973 = vmul.f32 %v930, %v972
        %v974 = vmul.f32 %v929, %v972
        %v975 = vmul.f32 %v928, %v972
        %v976 = vmul.f32 %v927, %v972
        %v977 = vmul.f32 %v926, %v972
        %v978 = vmul.f32 %v925, %v972
        %v979 = vmul.f32 %v924, %v972
        %v980 = vmul.f32 %v923, %v972
        %v981 = vmul.f32 %v922, %v972
        %v982 = vmul.f32 %v921, %v972
        %v983 = vmul.f32 %v920, %v972
        %v984 = vmul.f32 %v919, %v972
        %v985 = vmul.f32 %v918, %v972
        %v986 = vmul.f32 %v917, %v972
        %v987 = vmul.f32 %v916, %v972
        %v988 = vmul.f32 %v915, %v972
        %v989 = vadd.f32 %v953, %v973
        %v990 = vadd.f32 %v954, %v974
        %v991 = vadd.f32 %v955, %v975
        %v992 = vadd.f32 %v956, %v976
        %v993 = vadd.f32 %v957, %v977
        %v994 = vadd.f32 %v958, %v978
        %v995 = vadd.f32 %v959, %v979
        %v996 = vadd.f32 %v960, %v980
        %v997 = vadd.f32 %v961, %v981
        %v998 = vadd.f32 %v962, %v982
        %v999 = vadd.f32 %v963, %v983
        %v1000 = vadd.f32 %v964, %v984
        %v1001 = vadd.f32 %v965, %v985
        %v1002 = vadd.f32 %v966, %v986
        %v1003 = vadd.f32 %v967, %v987
        %v1004 = vadd.f32 %v968, %v988
        %v1005 = vlaneseq
        %v1006 = vshrl.u32 %v1005, 7
        %v1007 = vsub.s32 7, %v1006
        %v1008 = vrot.slane %v507, %v1007
        %v1009 = vmul.f32 %v928, %v1008
        %v1010 = vmul.f32 %v927, %v1008
        %v1011 = vmul.f32 %v926, %v1008
        %v1012 = vmul.f32 %v925, %v1008
        %v1013 = vmul.f32 %v924, %v1008
        %v1014 = vmul.f32 %v923, %v1008
        %v1015 = vmul.f32 %v922, %v1008
        %v1016 = vmul.f32 %v921, %v1008
        %v1017 = vmul.f32 %v920, %v1008
        %v1018 = vmul.f32 %v919, %v1008
        %v1019 = vmul.f32 %v918, %v1008
        %v1020 = vmul.f32 %v917, %v1008
        %v1021 = vmul.f32 %v916, %v1008
        %v1022 = vmul.f32 %v915, %v1008
        %v1023 = vmul.f32 %v914, %v1008
        %v1024 = vmul.f32 %v913, %v1008
        %v1025 = vadd.f32 %v989, %v1009
        %v1026 = vadd.f32 %v990, %v1010
        %v1027 = vadd.f32 %v991, %v1011
        %v1028 = vadd.f32 %v992, %v1012
        %v1029 = vadd.f32 %v993, %v1013
        %v1030 = vadd.f32 %v994, %v1014
        %v1031 = vadd.f32 %v995, %v1015
        %v1032 = vadd.f32 %v996, %v1016
        %v1033 = vadd.f32 %v997, %v1017
        %v1034 = vadd.f32 %v998, %v1018
        %v1035 = vadd.f32 %v999, %v1019
        %v1036 = vadd.f32 %v1000, %v1020
        %v1037 = vadd.f32 %v1001, %v1021
        %v1038 = vadd.f32 %v1002, %v1022
        %v1039 = vadd.f32 %v1003, %v1023
        %v1040 = vadd.f32 %v1004, %v1024
        %v1041 = vlaneseq
        %v1042 = vshrl.u32 %v1041, 7
        %v1043 = vsub.s32 6, %v1042
        %v1044 = vrot.slane %v508, %v1043
        %v1045 = vmul.f32 %v926, %v1044
        %v1046 = vmul.f32 %v925, %v1044
        %v1047 = vmul.f32 %v924, %v1044
        %v1048 = vmul.f32 %v923, %v1044
        %v1049 = vmul.f32 %v922, %v1044
        %v1050 = vmul.f32 %v921, %v1044
        %v1051 = vmul.f32 %v920, %v1044
        %v1052 = vmul.f32 %v919, %v1044
        %v1053 = vmul.f32 %v918, %v1044
        %v1054 = vmul.f32 %v917, %v1044
        %v1055 = vmul.f32 %v916, %v1044
        %v1056 = vmul.f32 %v915, %v1044
        %v1057 = vmul.f32 %v914, %v1044
        %v1058 = vmul.f32 %v913, %v1044
        %v1059 = vmul.f32 %v912, %v1044
        %v1060 = vmul.f32 %v911, %v1044
        %v1061 = vadd.f32 %v1025, %v1045
        %v1062 = vadd.f32 %v1026, %v1046
        %v1063 = vadd.f32 %v1027, %v1047
        %v1064 = vadd.f32 %v1028, %v1048
        %v1065 = vadd.f32 %v1029, %v1049
        %v1066 = vadd.f32 %v1030, %v1050
        %v1067 = vadd.f32 %v1031, %v1051
        %v1068 = vadd.f32 %v1032, %v1052
        %v1069 = vadd.f32 %v1033, %v1053
        %v1070 = vadd.f32 %v1034, %v1054
        %v1071 = vadd.f32 %v1035, %v1055
        %v1072 = vadd.f32 %v1036, %v1056
        %v1073 = vadd.f32 %v1037, %v1057
        %v1074 = vadd.f32 %v1038, %v1058
        %v1075 = vadd.f32 %v1039, %v1059
        %v1076 = vadd.f32 %v1040, %v1060
        %v1077 = vlaneseq
        %v1078 = vshrl.u32 %v1077, 7
        %v1079 = vsub.s32 5, %v1078
        %v1080 = vrot.slane %v509, %v1079
        %v1081 = vmul.f32 %v924, %v1080
        %v1082 = vmul.f32 %v923, %v1080
        %v1083 = vmul.f32 %v922, %v1080
        %v1084 = vmul.f32 %v921, %v1080
        %v1085 = vmul.f32 %v920, %v1080
        %v1086 = vmul.f32 %v919, %v1080
        %v1087 = vmul.f32 %v918, %v1080
        %v1088 = vmul.f32 %v917, %v1080
        %v1089 = vmul.f32 %v916, %v1080
        %v1090 = vmul.f32 %v915, %v1080
        %v1091 = vmul.f32 %v914, %v1080
        %v1092 = vmul.f32 %v913, %v1080
        %v1093 = vmul.f32 %v912, %v1080
        %v1094 = vmul.f32 %v911, %v1080
        %v1095 = vmul.f32 %v910, %v1080
        %v1096 = vmul.f32 %v909, %v1080
        %v1097 = vadd.f32 %v1061, %v1081
        %v1098 = vadd.f32 %v1062, %v1082
        %v1099 = vadd.f32 %v1063, %v1083
        %v1100 = vadd.f32 %v1064, %v1084
        %v1101 = vadd.f32 %v1065, %v1085
        %v1102 = vadd.f32 %v1066, %v1086
        %v1103 = vadd.f32 %v1067, %v1087
        %v1104 = vadd.f32 %v1068, %v1088
        %v1105 = vadd.f32 %v1069, %v1089
        %v1106 = vadd.f32 %v1070, %v1090
        %v1107 = vadd.f32 %v1071, %v1091
        %v1108 = vadd.f32 %v1072, %v1092
        %v1109 = vadd.f32 %v1073, %v1093
        %v1110 = vadd.f32 %v1074, %v1094
        %v1111 = vadd.f32 %v1075, %v1095
        %v1112 = vadd.f32 %v1076, %v1096
        %v1113 = vlaneseq
        %v1114 = vshrl.u32 %v1113, 7
        %v1115 = vsub.s32 4, %v1114
        %v1116 = vrot.slane %v510, %v1115
        %v1117 = vmul.f32 %v922, %v1116
        %v1118 = vmul.f32 %v921, %v1116
        %v1119 = vmul.f32 %v920, %v1116
        %v1120 = vmul.f32 %v919, %v1116
        %v1121 = vmul.f32 %v918, %v1116
        %v1122 = vmul.f32 %v917, %v1116
        %v1123 = vmul.f32 %v916, %v1116
        %v1124 = vmul.f32 %v915, %v1116
        %v1125 = vmul.f32 %v914, %v1116
        %v1126 = vmul.f32 %v913, %v1116
        %v1127 = vmul.f32 %v912, %v1116
        %v1128 = vmul.f32 %v911, %v1116
        %v1129 = vmul.f32 %v910, %v1116
        %v1130 = vmul.f32 %v909, %v1116
        %v1131 = vmul.f32 %v908, %v1116
        %v1132 = vmul.f32 %v907, %v1116
        %v1133 = vadd.f32 %v1097, %v1117
        %v1134 = vadd.f32 %v1098, %v1118
        %v1135 = vadd.f32 %v1099, %v1119
        %v1136 = vadd.f32 %v1100, %v1120
        %v1137 = vadd.f32 %v1101, %v1121
        %v1138 = vadd.f32 %v1102, %v1122
        %v1139 = vadd.f32 %v1103, %v1123
        %v1140 = vadd.f32 %v1104, %v1124
        %v1141 = vadd.f32 %v1105, %v1125
        %v1142 = vadd.f32 %v1106, %v1126
        %v1143 = vadd.f32 %v1107, %v1127
        %v1144 = vadd.f32 %v1108, %v1128
        %v1145 = vadd.f32 %v1109, %v1129
        %v1146 = vadd.f32 %v1110, %v1130
        %v1147 = vadd.f32 %v1111, %v1131
        %v1148 = vadd.f32 %v1112, %v1132
        %v1149 = vlaneseq
        %v1150 = vshrl.u32 %v1149, 7
        %v1151 = vsub.s32 3, %v1150
        %v1152 = vrot.slane %v511, %v1151
        %v1153 = vmul.f32 %v920, %v1152
        %v1154 = vmul.f32 %v919, %v1152
        %v1155 = vmul.f32 %v918, %v1152
        %v1156 = vmul.f32 %v917, %v1152
        %v1157 = vmul.f32 %v916, %v1152
        %v1158 = vmul.f32 %v915, %v1152
        %v1159 = vmul.f32 %v914, %v1152
        %v1160 = vmul.f32 %v913, %v1152
        %v1161 = vmul.f32 %v912, %v1152
        %v1162 = vmul.f32 %v911, %v1152
        %v1163 = vmul.f32 %v910, %v1152
        %v1164 = vmul.f32 %v909, %v1152
        %v1165 = vmul.f32 %v908, %v1152
        %v1166 = vmul.f32 %v907, %v1152
        %v1167 = vmul.f32 %v906, %v1152
        %v1168 = vmul.f32 %v905, %v1152
        %v1169 = vadd.f32 %v1133, %v1153
        %v1170 = vadd.f32 %v1134, %v1154
        %v1171 = vadd.f32 %v1135, %v1155
        %v1172 = vadd.f32 %v1136, %v1156
        %v1173 = vadd.f32 %v1137, %v1157
        %v1174 = vadd.f32 %v1138, %v1158
        %v1175 = vadd.f32 %v1139, %v1159
        %v1176 = vadd.f32 %v1140, %v1160
        %v1177 = vadd.f32 %v1141, %v1161
        %v1178 = vadd.f32 %v1142, %v1162
        %v1179 = vadd.f32 %v1143, %v1163
        %v1180 = vadd.f32 %v1144, %v1164
        %v1181 = vadd.f32 %v1145, %v1165
        %v1182 = vadd.f32 %v1146, %v1166
        %v1183 = vadd.f32 %v1147, %v1167
        %v1184 = vadd.f32 %v1148, %v1168
        %v1185 = vrot.slane %v566, 2
        %v1186 = vrot.slane %v567, 2
        %v1187 = vrot.slane %v568, 2
        %v1188 = vrot.slane %v569, 2
        %v1189 = vrot.slane %v570, 2
        %v1190 = vrot.slane %v571, 2
        %v1191 = vrot.slane %v572, 2
        %v1192 = vrot.slane %v573, 2
        %v1193 = vrot.slane %v574, 2
        %v1194 = vrot.slane %v575, 2
        %v1195 = vrot.slane %v576, 2
        %v1196 = vrot.slane %v577, 2
        %v1197 = vrot.slane %v578, 2
        %v1198 = vrot.slane %v579, 2
        %v1199 = vrot.slane %v580, 2
        %v1200 = vrot.slane %v581, 2
        %v1201 = vrot.slane %v582, 2
        %v1202 = vrot.slane %v583, 2
        %v1203 = vrot.slane %v584, 2
        %v1204 = vrot.slane %v585, 2
        %v1205 = vrot.slane %v586, 2
        %v1206 = vrot.slane %v587, 2
        %v1207 = vrot.slane %v588, 2
        %v1208 = vrot.slane %v589, 2
        %v1209 = vrot.slane %v590, 2
        %v1210 = vrot.slane %v591, 2
        %v1211 = vrot.slane %v592, 2
        %v1212 = vrot.slane %v593, 2
        %v1213 = vrot.slane %v594, 2
        %v1214 = vrot.slane %v595, 2
        %v1215 = vrot.slane %v596, 2
        %v1216 = vrot.slane %v597, 2
        %v1217 = vrot.slane %v598, 2
        %v1218 = vrot.slane %v599, 2
        %v1219 = vrot.slane %v600, 2
        %v1220 = vrot.slane %v601, 2
        %v1221 = vrot.slane %v602, 2
        %v1222 = vrot.slane %v603, 2
        %v1223 = vrot.slane %v604, 2
        %v1224 = vrot.slane %v605, 2
        %v1225 = vrot.slane %v606, 2
        %v1226 = vrot.slane %v607, 2
        %vm1227 = vcmp.lt.s32.totalorder %v903, 6
        %v1228 = vsel %vm1227, %v1225, %v1226
        %v1229 = vsel %vm1227, %v1224, %v1225
        %v1230 = vsel %vm1227, %v1222, %v1223
        %v1231 = vsel %vm1227, %v1221, %v1222
        %v1232 = vsel %vm1227, %v1219, %v1220
        %v1233 = vsel %vm1227, %v1218, %v1219
        %v1234 = vsel %vm1227, %v1216, %v1217
        %v1235 = vsel %vm1227, %v1215, %v1216
        %v1236 = vsel %vm1227, %v1213, %v1214
        %v1237 = vsel %vm1227, %v1212, %v1213
        %v1238 = vsel %vm1227, %v1210, %v1211
        %v1239 = vsel %vm1227, %v1209, %v1210
        %v1240 = vsel %vm1227, %v1207, %v1208
        %v1241 = vsel %vm1227, %v1206, %v1207
        %v1242 = vsel %vm1227, %v1204, %v1205
        %v1243 = vsel %vm1227, %v1203, %v1204
        %v1244 = vsel %vm1227, %v1201, %v1202
        %v1245 = vsel %vm1227, %v1200, %v1201
        %v1246 = vsel %vm1227, %v1198, %v1199
        %v1247 = vsel %vm1227, %v1197, %v1198
        %v1248 = vsel %vm1227, %v1195, %v1196
        %v1249 = vsel %vm1227, %v1194, %v1195
        %v1250 = vsel %vm1227, %v1192, %v1193
        %v1251 = vsel %vm1227, %v1191, %v1192
        %v1252 = vsel %vm1227, %v1189, %v1190
        %v1253 = vsel %vm1227, %v1188, %v1189
        %v1254 = vsel %vm1227, %v1186, %v1187
        %v1255 = vsel %vm1227, %v1185, %v1186
        %v1256 = vlaneseq
        %v1257 = vshrl.u32 %v1256, 7
        %v1258 = vsub.s32 2, %v1257
        %v1259 = vrot.slane %v506, %v1258
        %v1260 = vmul.f32 %v1255, %v1259
        %v1261 = vmul.f32 %v1254, %v1259
        %v1262 = vmul.f32 %v1253, %v1259
        %v1263 = vmul.f32 %v1252, %v1259
        %v1264 = vmul.f32 %v1251, %v1259
        %v1265 = vmul.f32 %v1250, %v1259
        %v1266 = vmul.f32 %v1249, %v1259
        %v1267 = vmul.f32 %v1248, %v1259
        %v1268 = vmul.f32 %v1247, %v1259
        %v1269 = vmul.f32 %v1246, %v1259
        %v1270 = vmul.f32 %v1245, %v1259
        %v1271 = vmul.f32 %v1244, %v1259
        %v1272 = vmul.f32 %v1243, %v1259
        %v1273 = vmul.f32 %v1242, %v1259
        %v1274 = vmul.f32 %v1241, %v1259
        %v1275 = vmul.f32 %v1240, %v1259
        %v1276 = vadd.f32 %v1169, %v1260
        %v1277 = vadd.f32 %v1170, %v1261
        %v1278 = vadd.f32 %v1171, %v1262
        %v1279 = vadd.f32 %v1172, %v1263
        %v1280 = vadd.f32 %v1173, %v1264
        %v1281 = vadd.f32 %v1174, %v1265
        %v1282 = vadd.f32 %v1175, %v1266
        %v1283 = vadd.f32 %v1176, %v1267
        %v1284 = vadd.f32 %v1177, %v1268
        %v1285 = vadd.f32 %v1178, %v1269
        %v1286 = vadd.f32 %v1179, %v1270
        %v1287 = vadd.f32 %v1180, %v1271
        %v1288 = vadd.f32 %v1181, %v1272
        %v1289 = vadd.f32 %v1182, %v1273
        %v1290 = vadd.f32 %v1183, %v1274
        %v1291 = vadd.f32 %v1184, %v1275
        %v1292 = vlaneseq
        %v1293 = vshrl.u32 %v1292, 7
        %v1294 = vsub.s32 1, %v1293
        %v1295 = vrot.slane %v507, %v1294
        %v1296 = vmul.f32 %v1253, %v1295
        %v1297 = vmul.f32 %v1252, %v1295
        %v1298 = vmul.f32 %v1251, %v1295
        %v1299 = vmul.f32 %v1250, %v1295
        %v1300 = vmul.f32 %v1249, %v1295
        %v1301 = vmul.f32 %v1248, %v1295
        %v1302 = vmul.f32 %v1247, %v1295
        %v1303 = vmul.f32 %v1246, %v1295
        %v1304 = vmul.f32 %v1245, %v1295
        %v1305 = vmul.f32 %v1244, %v1295
        %v1306 = vmul.f32 %v1243, %v1295
        %v1307 = vmul.f32 %v1242, %v1295
        %v1308 = vmul.f32 %v1241, %v1295
        %v1309 = vmul.f32 %v1240, %v1295
        %v1310 = vmul.f32 %v1239, %v1295
        %v1311 = vmul.f32 %v1238, %v1295
        %v1312 = vadd.f32 %v1276, %v1296
        %v1313 = vadd.f32 %v1277, %v1297
        %v1314 = vadd.f32 %v1278, %v1298
        %v1315 = vadd.f32 %v1279, %v1299
        %v1316 = vadd.f32 %v1280, %v1300
        %v1317 = vadd.f32 %v1281, %v1301
        %v1318 = vadd.f32 %v1282, %v1302
        %v1319 = vadd.f32 %v1283, %v1303
        %v1320 = vadd.f32 %v1284, %v1304
        %v1321 = vadd.f32 %v1285, %v1305
        %v1322 = vadd.f32 %v1286, %v1306
        %v1323 = vadd.f32 %v1287, %v1307
        %v1324 = vadd.f32 %v1288, %v1308
        %v1325 = vadd.f32 %v1289, %v1309
        %v1326 = vadd.f32 %v1290, %v1310
        %v1327 = vadd.f32 %v1291, %v1311
        %v1328 = vlaneseq
        %v1329 = vshrl.u32 %v1328, 7
        %v1330 = vsub.s32 0, %v1329
        %v1331 = vrot.slane %v508, %v1330
        %v1332 = vmul.f32 %v1251, %v1331
        %v1333 = vmul.f32 %v1250, %v1331
        %v1334 = vmul.f32 %v1249, %v1331
        %v1335 = vmul.f32 %v1248, %v1331
        %v1336 = vmul.f32 %v1247, %v1331
        %v1337 = vmul.f32 %v1246, %v1331
        %v1338 = vmul.f32 %v1245, %v1331
        %v1339 = vmul.f32 %v1244, %v1331
        %v1340 = vmul.f32 %v1243, %v1331
        %v1341 = vmul.f32 %v1242, %v1331
        %v1342 = vmul.f32 %v1241, %v1331
        %v1343 = vmul.f32 %v1240, %v1331
        %v1344 = vmul.f32 %v1239, %v1331
        %v1345 = vmul.f32 %v1238, %v1331
        %v1346 = vmul.f32 %v1237, %v1331
        %v1347 = vmul.f32 %v1236, %v1331
        %v1348 = vadd.f32 %v1312, %v1332
        %v1349 = vadd.f32 %v1313, %v1333
        %v1350 = vadd.f32 %v1314, %v1334
        %v1351 = vadd.f32 %v1315, %v1335
        %v1352 = vadd.f32 %v1316, %v1336
        %v1353 = vadd.f32 %v1317, %v1337
        %v1354 = vadd.f32 %v1318, %v1338
        %v1355 = vadd.f32 %v1319, %v1339
        %v1356 = vadd.f32 %v1320, %v1340
        %v1357 = vadd.f32 %v1321, %v1341
        %v1358 = vadd.f32 %v1322, %v1342
        %v1359 = vadd.f32 %v1323, %v1343
        %v1360 = vadd.f32 %v1324, %v1344
        %v1361 = vadd.f32 %v1325, %v1345
        %v1362 = vadd.f32 %v1326, %v1346
        %v1363 = vadd.f32 %v1327, %v1347
        %v1364 = vlaneseq
        %v1365 = vshrl.u32 %v1364, 7
        %v1366 = vsub.s32 7, %v1365
        %v1367 = vrot.slane %v508, %v1366
        %v1368 = vmul.f32 %v1249, %v1367
        %v1369 = vmul.f32 %v1248, %v1367
        %v1370 = vmul.f32 %v1247, %v1367
        %v1371 = vmul.f32 %v1246, %v1367
        %v1372 = vmul.f32 %v1245, %v1367
        %v1373 = vmul.f32 %v1244, %v1367
        %v1374 = vmul.f32 %v1243, %v1367
        %v1375 = vmul.f32 %v1242, %v1367
        %v1376 = vmul.f32 %v1241, %v1367
        %v1377 = vmul.f32 %v1240, %v1367
        %v1378 = vmul.f32 %v1239, %v1367
        %v1379 = vmul.f32 %v1238, %v1367
        %v1380 = vmul.f32 %v1237, %v1367
        %v1381 = vmul.f32 %v1236, %v1367
        %v1382 = vmul.f32 %v1235, %v1367
        %v1383 = vmul.f32 %v1234, %v1367
        %v1384 = vadd.f32 %v1348, %v1368
        %v1385 = vadd.f32 %v1349, %v1369
        %v1386 = vadd.f32 %v1350, %v1370
        %v1387 = vadd.f32 %v1351, %v1371
        %v1388 = vadd.f32 %v1352, %v1372
        %v1389 = vadd.f32 %v1353, %v1373
        %v1390 = vadd.f32 %v1354, %v1374
        %v1391 = vadd.f32 %v1355, %v1375
        %v1392 = vadd.f32 %v1356, %v1376
        %v1393 = vadd.f32 %v1357, %v1377
        %v1394 = vadd.f32 %v1358, %v1378
        %v1395 = vadd.f32 %v1359, %v1379
        %v1396 = vadd.f32 %v1360, %v1380
        %v1397 = vadd.f32 %v1361, %v1381
        %v1398 = vadd.f32 %v1362, %v1382
        %v1399 = vadd.f32 %v1363, %v1383
        %v1400 = vlaneseq
        %v1401 = vshrl.u32 %v1400, 7
        %v1402 = vsub.s32 6, %v1401
        %v1403 = vrot.slane %v509, %v1402
        %v1404 = vmul.f32 %v1247, %v1403
        %v1405 = vmul.f32 %v1246, %v1403
        %v1406 = vmul.f32 %v1245, %v1403
        %v1407 = vmul.f32 %v1244, %v1403
        %v1408 = vmul.f32 %v1243, %v1403
        %v1409 = vmul.f32 %v1242, %v1403
        %v1410 = vmul.f32 %v1241, %v1403
        %v1411 = vmul.f32 %v1240, %v1403
        %v1412 = vmul.f32 %v1239, %v1403
        %v1413 = vmul.f32 %v1238, %v1403
        %v1414 = vmul.f32 %v1237, %v1403
        %v1415 = vmul.f32 %v1236, %v1403
        %v1416 = vmul.f32 %v1235, %v1403
        %v1417 = vmul.f32 %v1234, %v1403
        %v1418 = vmul.f32 %v1233, %v1403
        %v1419 = vmul.f32 %v1232, %v1403
        %v1420 = vadd.f32 %v1384, %v1404
        %v1421 = vadd.f32 %v1385, %v1405
        %v1422 = vadd.f32 %v1386, %v1406
        %v1423 = vadd.f32 %v1387, %v1407
        %v1424 = vadd.f32 %v1388, %v1408
        %v1425 = vadd.f32 %v1389, %v1409
        %v1426 = vadd.f32 %v1390, %v1410
        %v1427 = vadd.f32 %v1391, %v1411
        %v1428 = vadd.f32 %v1392, %v1412
        %v1429 = vadd.f32 %v1393, %v1413
        %v1430 = vadd.f32 %v1394, %v1414
        %v1431 = vadd.f32 %v1395, %v1415
        %v1432 = vadd.f32 %v1396, %v1416
        %v1433 = vadd.f32 %v1397, %v1417
        %v1434 = vadd.f32 %v1398, %v1418
        %v1435 = vadd.f32 %v1399, %v1419
        %v1436 = vlaneseq
        %v1437 = vshrl.u32 %v1436, 7
        %v1438 = vsub.s32 5, %v1437
        %v1439 = vrot.slane %v510, %v1438
        %v1440 = vmul.f32 %v1245, %v1439
        %v1441 = vmul.f32 %v1244, %v1439
        %v1442 = vmul.f32 %v1243, %v1439
        %v1443 = vmul.f32 %v1242, %v1439
        %v1444 = vmul.f32 %v1241, %v1439
        %v1445 = vmul.f32 %v1240, %v1439
        %v1446 = vmul.f32 %v1239, %v1439
        %v1447 = vmul.f32 %v1238, %v1439
        %v1448 = vmul.f32 %v1237, %v1439
        %v1449 = vmul.f32 %v1236, %v1439
        %v1450 = vmul.f32 %v1235, %v1439
        %v1451 = vmul.f32 %v1234, %v1439
        %v1452 = vmul.f32 %v1233, %v1439
        %v1453 = vmul.f32 %v1232, %v1439
        %v1454 = vmul.f32 %v1231, %v1439
        %v1455 = vmul.f32 %v1230, %v1439
        %v1456 = vadd.f32 %v1420, %v1440
        %v1457 = vadd.f32 %v1421, %v1441
        %v1458 = vadd.f32 %v1422, %v1442
        %v1459 = vadd.f32 %v1423, %v1443
        %v1460 = vadd.f32 %v1424, %v1444
        %v1461 = vadd.f32 %v1425, %v1445
        %v1462 = vadd.f32 %v1426, %v1446
        %v1463 = vadd.f32 %v1427, %v1447
        %v1464 = vadd.f32 %v1428, %v1448
        %v1465 = vadd.f32 %v1429, %v1449
        %v1466 = vadd.f32 %v1430, %v1450
        %v1467 = vadd.f32 %v1431, %v1451
        %v1468 = vadd.f32 %v1432, %v1452
        %v1469 = vadd.f32 %v1433, %v1453
        %v1470 = vadd.f32 %v1434, %v1454
        %v1471 = vadd.f32 %v1435, %v1455
        %v1472 = vlaneseq
        %v1473 = vshrl.u32 %v1472, 7
        %v1474 = vsub.s32 4, %v1473
        %v1475 = vrot.slane %v511, %v1474
        %v1476 = vmul.f32 %v1243, %v1475
        %v1477 = vmul.f32 %v1242, %v1475
        %v1478 = vmul.f32 %v1241, %v1475
        %v1479 = vmul.f32 %v1240, %v1475
        %v1480 = vmul.f32 %v1239, %v1475
        %v1481 = vmul.f32 %v1238, %v1475
        %v1482 = vmul.f32 %v1237, %v1475
        %v1483 = vmul.f32 %v1236, %v1475
        %v1484 = vmul.f32 %v1235, %v1475
        %v1485 = vmul.f32 %v1234, %v1475
        %v1486 = vmul.f32 %v1233, %v1475
        %v1487 = vmul.f32 %v1232, %v1475
        %v1488 = vmul.f32 %v1231, %v1475
        %v1489 = vmul.f32 %v1230, %v1475
        %v1490 = vmul.f32 %v1229, %v1475
        %v1491 = vmul.f32 %v1228, %v1475
        %v1492 = vadd.f32 %v1456, %v1476
        %v1493 = vadd.f32 %v1457, %v1477
        %v1494 = vadd.f32 %v1458, %v1478
        %v1495 = vadd.f32 %v1459, %v1479
        %v1496 = vadd.f32 %v1460, %v1480
        %v1497 = vadd.f32 %v1461, %v1481
        %v1498 = vadd.f32 %v1462, %v1482
        %v1499 = vadd.f32 %v1463, %v1483
        %v1500 = vadd.f32 %v1464, %v1484
        %v1501 = vadd.f32 %v1465, %v1485
        %v1502 = vadd.f32 %v1466, %v1486
        %v1503 = vadd.f32 %v1467, %v1487
        %v1504 = vadd.f32 %v1468, %v1488
        %v1505 = vadd.f32 %v1469, %v1489
        %v1506 = vadd.f32 %v1470, %v1490
        %v1507 = vadd.f32 %v1471, %v1491
        %v1508 = vrot.slane %v566, 3
        %v1509 = vrot.slane %v567, 3
        %v1510 = vrot.slane %v568, 3
        %v1511 = vrot.slane %v569, 3
        %v1512 = vrot.slane %v570, 3
        %v1513 = vrot.slane %v571, 3
        %v1514 = vrot.slane %v572, 3
        %v1515 = vrot.slane %v573, 3
        %v1516 = vrot.slane %v574, 3
        %v1517 = vrot.slane %v575, 3
        %v1518 = vrot.slane %v576, 3
        %v1519 = vrot.slane %v577, 3
        %v1520 = vrot.slane %v578, 3
        %v1521 = vrot.slane %v579, 3
        %v1522 = vrot.slane %v580, 3
        %v1523 = vrot.slane %v581, 3
        %v1524 = vrot.slane %v582, 3
        %v1525 = vrot.slane %v583, 3
        %v1526 = vrot.slane %v584, 3
        %v1527 = vrot.slane %v585, 3
        %v1528 = vrot.slane %v586, 3
        %v1529 = vrot.slane %v587, 3
        %v1530 = vrot.slane %v588, 3
        %v1531 = vrot.slane %v589, 3
        %v1532 = vrot.slane %v590, 3
        %v1533 = vrot.slane %v591, 3
        %v1534 = vrot.slane %v592, 3
        %v1535 = vrot.slane %v593, 3
        %v1536 = vrot.slane %v594, 3
        %v1537 = vrot.slane %v595, 3
        %v1538 = vrot.slane %v596, 3
        %v1539 = vrot.slane %v597, 3
        %v1540 = vrot.slane %v598, 3
        %v1541 = vrot.slane %v599, 3
        %v1542 = vrot.slane %v600, 3
        %v1543 = vrot.slane %v601, 3
        %v1544 = vrot.slane %v602, 3
        %v1545 = vrot.slane %v603, 3
        %v1546 = vrot.slane %v604, 3
        %v1547 = vrot.slane %v605, 3
        %v1548 = vrot.slane %v606, 3
        %v1549 = vrot.slane %v607, 3
        %vm1550 = vcmp.lt.s32.totalorder %v903, 5
        %v1551 = vsel %vm1550, %v1548, %v1549
        %v1552 = vsel %vm1550, %v1547, %v1548
        %v1553 = vsel %vm1550, %v1545, %v1546
        %v1554 = vsel %vm1550, %v1544, %v1545
        %v1555 = vsel %vm1550, %v1542, %v1543
        %v1556 = vsel %vm1550, %v1541, %v1542
        %v1557 = vsel %vm1550, %v1539, %v1540
        %v1558 = vsel %vm1550, %v1538, %v1539
        %v1559 = vsel %vm1550, %v1536, %v1537
        %v1560 = vsel %vm1550, %v1535, %v1536
        %v1561 = vsel %vm1550, %v1533, %v1534
        %v1562 = vsel %vm1550, %v1532, %v1533
        %v1563 = vsel %vm1550, %v1530, %v1531
        %v1564 = vsel %vm1550, %v1529, %v1530
        %v1565 = vsel %vm1550, %v1527, %v1528
        %v1566 = vsel %vm1550, %v1526, %v1527
        %v1567 = vsel %vm1550, %v1524, %v1525
        %v1568 = vsel %vm1550, %v1523, %v1524
        %v1569 = vsel %vm1550, %v1521, %v1522
        %v1570 = vsel %vm1550, %v1520, %v1521
        %v1571 = vsel %vm1550, %v1518, %v1519
        %v1572 = vsel %vm1550, %v1517, %v1518
        %v1573 = vsel %vm1550, %v1515, %v1516
        %v1574 = vsel %vm1550, %v1514, %v1515
        %v1575 = vsel %vm1550, %v1512, %v1513
        %v1576 = vsel %vm1550, %v1511, %v1512
        %v1577 = vsel %vm1550, %v1509, %v1510
        %v1578 = vsel %vm1550, %v1508, %v1509
        %v1579 = vlaneseq
        %v1580 = vshrl.u32 %v1579, 7
        %v1581 = vsub.s32 3, %v1580
        %v1582 = vrot.slane %v506, %v1581
        %v1583 = vmul.f32 %v1578, %v1582
        %v1584 = vmul.f32 %v1577, %v1582
        %v1585 = vmul.f32 %v1576, %v1582
        %v1586 = vmul.f32 %v1575, %v1582
        %v1587 = vmul.f32 %v1574, %v1582
        %v1588 = vmul.f32 %v1573, %v1582
        %v1589 = vmul.f32 %v1572, %v1582
        %v1590 = vmul.f32 %v1571, %v1582
        %v1591 = vmul.f32 %v1570, %v1582
        %v1592 = vmul.f32 %v1569, %v1582
        %v1593 = vmul.f32 %v1568, %v1582
        %v1594 = vmul.f32 %v1567, %v1582
        %v1595 = vmul.f32 %v1566, %v1582
        %v1596 = vmul.f32 %v1565, %v1582
        %v1597 = vmul.f32 %v1564, %v1582
        %v1598 = vmul.f32 %v1563, %v1582
        %v1599 = vadd.f32 %v1492, %v1583
        %v1600 = vadd.f32 %v1493, %v1584
        %v1601 = vadd.f32 %v1494, %v1585
        %v1602 = vadd.f32 %v1495, %v1586
        %v1603 = vadd.f32 %v1496, %v1587
        %v1604 = vadd.f32 %v1497, %v1588
        %v1605 = vadd.f32 %v1498, %v1589
        %v1606 = vadd.f32 %v1499, %v1590
        %v1607 = vadd.f32 %v1500, %v1591
        %v1608 = vadd.f32 %v1501, %v1592
        %v1609 = vadd.f32 %v1502, %v1593
        %v1610 = vadd.f32 %v1503, %v1594
        %v1611 = vadd.f32 %v1504, %v1595
        %v1612 = vadd.f32 %v1505, %v1596
        %v1613 = vadd.f32 %v1506, %v1597
        %v1614 = vadd.f32 %v1507, %v1598
        %v1615 = vlaneseq
        %v1616 = vshrl.u32 %v1615, 7
        %v1617 = vsub.s32 2, %v1616
        %v1618 = vrot.slane %v507, %v1617
        %v1619 = vmul.f32 %v1576, %v1618
        %v1620 = vmul.f32 %v1575, %v1618
        %v1621 = vmul.f32 %v1574, %v1618
        %v1622 = vmul.f32 %v1573, %v1618
        %v1623 = vmul.f32 %v1572, %v1618
        %v1624 = vmul.f32 %v1571, %v1618
        %v1625 = vmul.f32 %v1570, %v1618
        %v1626 = vmul.f32 %v1569, %v1618
        %v1627 = vmul.f32 %v1568, %v1618
        %v1628 = vmul.f32 %v1567, %v1618
        %v1629 = vmul.f32 %v1566, %v1618
        %v1630 = vmul.f32 %v1565, %v1618
        %v1631 = vmul.f32 %v1564, %v1618
        %v1632 = vmul.f32 %v1563, %v1618
        %v1633 = vmul.f32 %v1562, %v1618
        %v1634 = vmul.f32 %v1561, %v1618
        %v1635 = vadd.f32 %v1599, %v1619
        %v1636 = vadd.f32 %v1600, %v1620
        %v1637 = vadd.f32 %v1601, %v1621
        %v1638 = vadd.f32 %v1602, %v1622
        %v1639 = vadd.f32 %v1603, %v1623
        %v1640 = vadd.f32 %v1604, %v1624
        %v1641 = vadd.f32 %v1605, %v1625
        %v1642 = vadd.f32 %v1606, %v1626
        %v1643 = vadd.f32 %v1607, %v1627
        %v1644 = vadd.f32 %v1608, %v1628
        %v1645 = vadd.f32 %v1609, %v1629
        %v1646 = vadd.f32 %v1610, %v1630
        %v1647 = vadd.f32 %v1611, %v1631
        %v1648 = vadd.f32 %v1612, %v1632
        %v1649 = vadd.f32 %v1613, %v1633
        %v1650 = vadd.f32 %v1614, %v1634
        %v1651 = vlaneseq
        %v1652 = vshrl.u32 %v1651, 7
        %v1653 = vsub.s32 1, %v1652
        %v1654 = vrot.slane %v508, %v1653
        %v1655 = vmul.f32 %v1574, %v1654
        %v1656 = vmul.f32 %v1573, %v1654
        %v1657 = vmul.f32 %v1572, %v1654
        %v1658 = vmul.f32 %v1571, %v1654
        %v1659 = vmul.f32 %v1570, %v1654
        %v1660 = vmul.f32 %v1569, %v1654
        %v1661 = vmul.f32 %v1568, %v1654
        %v1662 = vmul.f32 %v1567, %v1654
        %v1663 = vmul.f32 %v1566, %v1654
        %v1664 = vmul.f32 %v1565, %v1654
        %v1665 = vmul.f32 %v1564, %v1654
        %v1666 = vmul.f32 %v1563, %v1654
        %v1667 = vmul.f32 %v1562, %v1654
        %v1668 = vmul.f32 %v1561, %v1654
        %v1669 = vmul.f32 %v1560, %v1654
        %v1670 = vmul.f32 %v1559, %v1654
        %v1671 = vadd.f32 %v1635, %v1655
        %v1672 = vadd.f32 %v1636, %v1656
        %v1673 = vadd.f32 %v1637, %v1657
        %v1674 = vadd.f32 %v1638, %v1658
        %v1675 = vadd.f32 %v1639, %v1659
        %v1676 = vadd.f32 %v1640, %v1660
        %v1677 = vadd.f32 %v1641, %v1661
        %v1678 = vadd.f32 %v1642, %v1662
        %v1679 = vadd.f32 %v1643, %v1663
        %v1680 = vadd.f32 %v1644, %v1664
        %v1681 = vadd.f32 %v1645, %v1665
        %v1682 = vadd.f32 %v1646, %v1666
        %v1683 = vadd.f32 %v1647, %v1667
        %v1684 = vadd.f32 %v1648, %v1668
        %v1685 = vadd.f32 %v1649, %v1669
        %v1686 = vadd.f32 %v1650, %v1670
        %v1687 = vlaneseq
        %v1688 = vshrl.u32 %v1687, 7
        %v1689 = vsub.s32 0, %v1688
        %v1690 = vrot.slane %v509, %v1689
        %v1691 = vmul.f32 %v1572, %v1690
        %v1692 = vmul.f32 %v1571, %v1690
        %v1693 = vmul.f32 %v1570, %v1690
        %v1694 = vmul.f32 %v1569, %v1690
        %v1695 = vmul.f32 %v1568, %v1690
        %v1696 = vmul.f32 %v1567, %v1690
        %v1697 = vmul.f32 %v1566, %v1690
        %v1698 = vmul.f32 %v1565, %v1690
        %v1699 = vmul.f32 %v1564, %v1690
        %v1700 = vmul.f32 %v1563, %v1690
        %v1701 = vmul.f32 %v1562, %v1690
        %v1702 = vmul.f32 %v1561, %v1690
        %v1703 = vmul.f32 %v1560, %v1690
        %v1704 = vmul.f32 %v1559, %v1690
        %v1705 = vmul.f32 %v1558, %v1690
        %v1706 = vmul.f32 %v1557, %v1690
        %v1707 = vadd.f32 %v1671, %v1691
        %v1708 = vadd.f32 %v1672, %v1692
        %v1709 = vadd.f32 %v1673, %v1693
        %v1710 = vadd.f32 %v1674, %v1694
        %v1711 = vadd.f32 %v1675, %v1695
        %v1712 = vadd.f32 %v1676, %v1696
        %v1713 = vadd.f32 %v1677, %v1697
        %v1714 = vadd.f32 %v1678, %v1698
        %v1715 = vadd.f32 %v1679, %v1699
        %v1716 = vadd.f32 %v1680, %v1700
        %v1717 = vadd.f32 %v1681, %v1701
        %v1718 = vadd.f32 %v1682, %v1702
        %v1719 = vadd.f32 %v1683, %v1703
        %v1720 = vadd.f32 %v1684, %v1704
        %v1721 = vadd.f32 %v1685, %v1705
        %v1722 = vadd.f32 %v1686, %v1706
        %v1723 = vlaneseq
        %v1724 = vshrl.u32 %v1723, 7
        %v1725 = vsub.s32 7, %v1724
        %v1726 = vrot.slane %v509, %v1725
        %v1727 = vmul.f32 %v1570, %v1726
        %v1728 = vmul.f32 %v1569, %v1726
        %v1729 = vmul.f32 %v1568, %v1726
        %v1730 = vmul.f32 %v1567, %v1726
        %v1731 = vmul.f32 %v1566, %v1726
        %v1732 = vmul.f32 %v1565, %v1726
        %v1733 = vmul.f32 %v1564, %v1726
        %v1734 = vmul.f32 %v1563, %v1726
        %v1735 = vmul.f32 %v1562, %v1726
        %v1736 = vmul.f32 %v1561, %v1726
        %v1737 = vmul.f32 %v1560, %v1726
        %v1738 = vmul.f32 %v1559, %v1726
        %v1739 = vmul.f32 %v1558, %v1726
        %v1740 = vmul.f32 %v1557, %v1726
        %v1741 = vmul.f32 %v1556, %v1726
        %v1742 = vmul.f32 %v1555, %v1726
        %v1743 = vadd.f32 %v1707, %v1727
        %v1744 = vadd.f32 %v1708, %v1728
        %v1745 = vadd.f32 %v1709, %v1729
        %v1746 = vadd.f32 %v1710, %v1730
        %v1747 = vadd.f32 %v1711, %v1731
        %v1748 = vadd.f32 %v1712, %v1732
        %v1749 = vadd.f32 %v1713, %v1733
        %v1750 = vadd.f32 %v1714, %v1734
        %v1751 = vadd.f32 %v1715, %v1735
        %v1752 = vadd.f32 %v1716, %v1736
        %v1753 = vadd.f32 %v1717, %v1737
        %v1754 = vadd.f32 %v1718, %v1738
        %v1755 = vadd.f32 %v1719, %v1739
        %v1756 = vadd.f32 %v1720, %v1740
        %v1757 = vadd.f32 %v1721, %v1741
        %v1758 = vadd.f32 %v1722, %v1742
        %v1759 = vlaneseq
        %v1760 = vshrl.u32 %v1759, 7
        %v1761 = vsub.s32 6, %v1760
        %v1762 = vrot.slane %v510, %v1761
        %v1763 = vmul.f32 %v1568, %v1762
        %v1764 = vmul.f32 %v1567, %v1762
        %v1765 = vmul.f32 %v1566, %v1762
        %v1766 = vmul.f32 %v1565, %v1762
        %v1767 = vmul.f32 %v1564, %v1762
        %v1768 = vmul.f32 %v1563, %v1762
        %v1769 = vmul.f32 %v1562, %v1762
        %v1770 = vmul.f32 %v1561, %v1762
        %v1771 = vmul.f32 %v1560, %v1762
        %v1772 = vmul.f32 %v1559, %v1762
        %v1773 = vmul.f32 %v1558, %v1762
        %v1774 = vmul.f32 %v1557, %v1762
        %v1775 = vmul.f32 %v1556, %v1762
        %v1776 = vmul.f32 %v1555, %v1762
        %v1777 = vmul.f32 %v1554, %v1762
        %v1778 = vmul.f32 %v1553, %v1762
        %v1779 = vadd.f32 %v1743, %v1763
        %v1780 = vadd.f32 %v1744, %v1764
        %v1781 = vadd.f32 %v1745, %v1765
        %v1782 = vadd.f32 %v1746, %v1766
        %v1783 = vadd.f32 %v1747, %v1767
        %v1784 = vadd.f32 %v1748, %v1768
        %v1785 = vadd.f32 %v1749, %v1769
        %v1786 = vadd.f32 %v1750, %v1770
        %v1787 = vadd.f32 %v1751, %v1771
        %v1788 = vadd.f32 %v1752, %v1772
        %v1789 = vadd.f32 %v1753, %v1773
        %v1790 = vadd.f32 %v1754, %v1774
        %v1791 = vadd.f32 %v1755, %v1775
        %v1792 = vadd.f32 %v1756, %v1776
        %v1793 = vadd.f32 %v1757, %v1777
        %v1794 = vadd.f32 %v1758, %v1778
        %v1795 = vlaneseq
        %v1796 = vshrl.u32 %v1795, 7
        %v1797 = vsub.s32 5, %v1796
        %v1798 = vrot.slane %v511, %v1797
        %v1799 = vmul.f32 %v1566, %v1798
        %v1800 = vmul.f32 %v1565, %v1798
        %v1801 = vmul.f32 %v1564, %v1798
        %v1802 = vmul.f32 %v1563, %v1798
        %v1803 = vmul.f32 %v1562, %v1798
        %v1804 = vmul.f32 %v1561, %v1798
        %v1805 = vmul.f32 %v1560, %v1798
        %v1806 = vmul.f32 %v1559, %v1798
        %v1807 = vmul.f32 %v1558, %v1798
        %v1808 = vmul.f32 %v1557, %v1798
        %v1809 = vmul.f32 %v1556, %v1798
        %v1810 = vmul.f32 %v1555, %v1798
        %v1811 = vmul.f32 %v1554, %v1798
        %v1812 = vmul.f32 %v1553, %v1798
        %v1813 = vmul.f32 %v1552, %v1798
        %v1814 = vmul.f32 %v1551, %v1798
        %v1815 = vadd.f32 %v1779, %v1799
        %v1816 = vadd.f32 %v1780, %v1800
        %v1817 = vadd.f32 %v1781, %v1801
        %v1818 = vadd.f32 %v1782, %v1802
        %v1819 = vadd.f32 %v1783, %v1803
        %v1820 = vadd.f32 %v1784, %v1804
        %v1821 = vadd.f32 %v1785, %v1805
        %v1822 = vadd.f32 %v1786, %v1806
        %v1823 = vadd.f32 %v1787, %v1807
        %v1824 = vadd.f32 %v1788, %v1808
        %v1825 = vadd.f32 %v1789, %v1809
        %v1826 = vadd.f32 %v1790, %v1810
        %v1827 = vadd.f32 %v1791, %v1811
        %v1828 = vadd.f32 %v1792, %v1812
        %v1829 = vadd.f32 %v1793, %v1813
        %v1830 = vadd.f32 %v1794, %v1814
        %v1831 = vrot.slane %v566, 4
        %v1832 = vrot.slane %v567, 4
        %v1833 = vrot.slane %v568, 4
        %v1834 = vrot.slane %v569, 4
        %v1835 = vrot.slane %v570, 4
        %v1836 = vrot.slane %v571, 4
        %v1837 = vrot.slane %v572, 4
        %v1838 = vrot.slane %v573, 4
        %v1839 = vrot.slane %v574, 4
        %v1840 = vrot.slane %v575, 4
        %v1841 = vrot.slane %v576, 4
        %v1842 = vrot.slane %v577, 4
        %v1843 = vrot.slane %v578, 4
        %v1844 = vrot.slane %v579, 4
        %v1845 = vrot.slane %v580, 4
        %v1846 = vrot.slane %v581, 4
        %v1847 = vrot.slane %v582, 4
        %v1848 = vrot.slane %v583, 4
        %v1849 = vrot.slane %v584, 4
        %v1850 = vrot.slane %v585, 4
        %v1851 = vrot.slane %v586, 4
        %v1852 = vrot.slane %v587, 4
        %v1853 = vrot.slane %v588, 4
        %v1854 = vrot.slane %v589, 4
        %v1855 = vrot.slane %v590, 4
        %v1856 = vrot.slane %v591, 4
        %v1857 = vrot.slane %v592, 4
        %v1858 = vrot.slane %v593, 4
        %v1859 = vrot.slane %v594, 4
        %v1860 = vrot.slane %v595, 4
        %v1861 = vrot.slane %v596, 4
        %v1862 = vrot.slane %v597, 4
        %v1863 = vrot.slane %v598, 4
        %v1864 = vrot.slane %v599, 4
        %v1865 = vrot.slane %v600, 4
        %v1866 = vrot.slane %v601, 4
        %v1867 = vrot.slane %v602, 4
        %v1868 = vrot.slane %v603, 4
        %v1869 = vrot.slane %v604, 4
        %v1870 = vrot.slane %v605, 4
        %v1871 = vrot.slane %v606, 4
        %v1872 = vrot.slane %v607, 4
        %vm1873 = vcmp.lt.s32.totalorder %v903, 4
        %v1874 = vsel %vm1873, %v1871, %v1872
        %v1875 = vsel %vm1873, %v1870, %v1871
        %v1876 = vsel %vm1873, %v1868, %v1869
        %v1877 = vsel %vm1873, %v1867, %v1868
        %v1878 = vsel %vm1873, %v1865, %v1866
        %v1879 = vsel %vm1873, %v1864, %v1865
        %v1880 = vsel %vm1873, %v1862, %v1863
        %v1881 = vsel %vm1873, %v1861, %v1862
        %v1882 = vsel %vm1873, %v1859, %v1860
        %v1883 = vsel %vm1873, %v1858, %v1859
        %v1884 = vsel %vm1873, %v1856, %v1857
        %v1885 = vsel %vm1873, %v1855, %v1856
        %v1886 = vsel %vm1873, %v1853, %v1854
        %v1887 = vsel %vm1873, %v1852, %v1853
        %v1888 = vsel %vm1873, %v1850, %v1851
        %v1889 = vsel %vm1873, %v1849, %v1850
        %v1890 = vsel %vm1873, %v1847, %v1848
        %v1891 = vsel %vm1873, %v1846, %v1847
        %v1892 = vsel %vm1873, %v1844, %v1845
        %v1893 = vsel %vm1873, %v1843, %v1844
        %v1894 = vsel %vm1873, %v1841, %v1842
        %v1895 = vsel %vm1873, %v1840, %v1841
        %v1896 = vsel %vm1873, %v1838, %v1839
        %v1897 = vsel %vm1873, %v1837, %v1838
        %v1898 = vsel %vm1873, %v1835, %v1836
        %v1899 = vsel %vm1873, %v1834, %v1835
        %v1900 = vsel %vm1873, %v1832, %v1833
        %v1901 = vsel %vm1873, %v1831, %v1832
        %v1902 = vlaneseq
        %v1903 = vshrl.u32 %v1902, 7
        %v1904 = vsub.s32 4, %v1903
        %v1905 = vrot.slane %v506, %v1904
        %v1906 = vmul.f32 %v1901, %v1905
        %v1907 = vmul.f32 %v1900, %v1905
        %v1908 = vmul.f32 %v1899, %v1905
        %v1909 = vmul.f32 %v1898, %v1905
        %v1910 = vmul.f32 %v1897, %v1905
        %v1911 = vmul.f32 %v1896, %v1905
        %v1912 = vmul.f32 %v1895, %v1905
        %v1913 = vmul.f32 %v1894, %v1905
        %v1914 = vmul.f32 %v1893, %v1905
        %v1915 = vmul.f32 %v1892, %v1905
        %v1916 = vmul.f32 %v1891, %v1905
        %v1917 = vmul.f32 %v1890, %v1905
        %v1918 = vmul.f32 %v1889, %v1905
        %v1919 = vmul.f32 %v1888, %v1905
        %v1920 = vmul.f32 %v1887, %v1905
        %v1921 = vmul.f32 %v1886, %v1905
        %v1922 = vadd.f32 %v1815, %v1906
        %v1923 = vadd.f32 %v1816, %v1907
        %v1924 = vadd.f32 %v1817, %v1908
        %v1925 = vadd.f32 %v1818, %v1909
        %v1926 = vadd.f32 %v1819, %v1910
        %v1927 = vadd.f32 %v1820, %v1911
        %v1928 = vadd.f32 %v1821, %v1912
        %v1929 = vadd.f32 %v1822, %v1913
        %v1930 = vadd.f32 %v1823, %v1914
        %v1931 = vadd.f32 %v1824, %v1915
        %v1932 = vadd.f32 %v1825, %v1916
        %v1933 = vadd.f32 %v1826, %v1917
        %v1934 = vadd.f32 %v1827, %v1918
        %v1935 = vadd.f32 %v1828, %v1919
        %v1936 = vadd.f32 %v1829, %v1920
        %v1937 = vadd.f32 %v1830, %v1921
        %v1938 = vlaneseq
        %v1939 = vshrl.u32 %v1938, 7
        %v1940 = vsub.s32 3, %v1939
        %v1941 = vrot.slane %v507, %v1940
        %v1942 = vmul.f32 %v1899, %v1941
        %v1943 = vmul.f32 %v1898, %v1941
        %v1944 = vmul.f32 %v1897, %v1941
        %v1945 = vmul.f32 %v1896, %v1941
        %v1946 = vmul.f32 %v1895, %v1941
        %v1947 = vmul.f32 %v1894, %v1941
        %v1948 = vmul.f32 %v1893, %v1941
        %v1949 = vmul.f32 %v1892, %v1941
        %v1950 = vmul.f32 %v1891, %v1941
        %v1951 = vmul.f32 %v1890, %v1941
        %v1952 = vmul.f32 %v1889, %v1941
        %v1953 = vmul.f32 %v1888, %v1941
        %v1954 = vmul.f32 %v1887, %v1941
        %v1955 = vmul.f32 %v1886, %v1941
        %v1956 = vmul.f32 %v1885, %v1941
        %v1957 = vmul.f32 %v1884, %v1941
        %v1958 = vadd.f32 %v1922, %v1942
        %v1959 = vadd.f32 %v1923, %v1943
        %v1960 = vadd.f32 %v1924, %v1944
        %v1961 = vadd.f32 %v1925, %v1945
        %v1962 = vadd.f32 %v1926, %v1946
        %v1963 = vadd.f32 %v1927, %v1947
        %v1964 = vadd.f32 %v1928, %v1948
        %v1965 = vadd.f32 %v1929, %v1949
        %v1966 = vadd.f32 %v1930, %v1950
        %v1967 = vadd.f32 %v1931, %v1951
        %v1968 = vadd.f32 %v1932, %v1952
        %v1969 = vadd.f32 %v1933, %v1953
        %v1970 = vadd.f32 %v1934, %v1954
        %v1971 = vadd.f32 %v1935, %v1955
        %v1972 = vadd.f32 %v1936, %v1956
        %v1973 = vadd.f32 %v1937, %v1957
        %v1974 = vlaneseq
        %v1975 = vshrl.u32 %v1974, 7
        %v1976 = vsub.s32 2, %v1975
        %v1977 = vrot.slane %v508, %v1976
        %v1978 = vmul.f32 %v1897, %v1977
        %v1979 = vmul.f32 %v1896, %v1977
        %v1980 = vmul.f32 %v1895, %v1977
        %v1981 = vmul.f32 %v1894, %v1977
        %v1982 = vmul.f32 %v1893, %v1977
        %v1983 = vmul.f32 %v1892, %v1977
        %v1984 = vmul.f32 %v1891, %v1977
        %v1985 = vmul.f32 %v1890, %v1977
        %v1986 = vmul.f32 %v1889, %v1977
        %v1987 = vmul.f32 %v1888, %v1977
        %v1988 = vmul.f32 %v1887, %v1977
        %v1989 = vmul.f32 %v1886, %v1977
        %v1990 = vmul.f32 %v1885, %v1977
        %v1991 = vmul.f32 %v1884, %v1977
        %v1992 = vmul.f32 %v1883, %v1977
        %v1993 = vmul.f32 %v1882, %v1977
        %v1994 = vadd.f32 %v1958, %v1978
        %v1995 = vadd.f32 %v1959, %v1979
        %v1996 = vadd.f32 %v1960, %v1980
        %v1997 = vadd.f32 %v1961, %v1981
        %v1998 = vadd.f32 %v1962, %v1982
        %v1999 = vadd.f32 %v1963, %v1983
        %v2000 = vadd.f32 %v1964, %v1984
        %v2001 = vadd.f32 %v1965, %v1985
        %v2002 = vadd.f32 %v1966, %v1986
        %v2003 = vadd.f32 %v1967, %v1987
        %v2004 = vadd.f32 %v1968, %v1988
        %v2005 = vadd.f32 %v1969, %v1989
        %v2006 = vadd.f32 %v1970, %v1990
        %v2007 = vadd.f32 %v1971, %v1991
        %v2008 = vadd.f32 %v1972, %v1992
        %v2009 = vadd.f32 %v1973, %v1993
        %v2010 = vlaneseq
        %v2011 = vshrl.u32 %v2010, 7
        %v2012 = vsub.s32 1, %v2011
        %v2013 = vrot.slane %v509, %v2012
        %v2014 = vmul.f32 %v1895, %v2013
        %v2015 = vmul.f32 %v1894, %v2013
        %v2016 = vmul.f32 %v1893, %v2013
        %v2017 = vmul.f32 %v1892, %v2013
        %v2018 = vmul.f32 %v1891, %v2013
        %v2019 = vmul.f32 %v1890, %v2013
        %v2020 = vmul.f32 %v1889, %v2013
        %v2021 = vmul.f32 %v1888, %v2013
        %v2022 = vmul.f32 %v1887, %v2013
        %v2023 = vmul.f32 %v1886, %v2013
        %v2024 = vmul.f32 %v1885, %v2013
        %v2025 = vmul.f32 %v1884, %v2013
        %v2026 = vmul.f32 %v1883, %v2013
        %v2027 = vmul.f32 %v1882, %v2013
        %v2028 = vmul.f32 %v1881, %v2013
        %v2029 = vmul.f32 %v1880, %v2013
        %v2030 = vadd.f32 %v1994, %v2014
        %v2031 = vadd.f32 %v1995, %v2015
        %v2032 = vadd.f32 %v1996, %v2016
        %v2033 = vadd.f32 %v1997, %v2017
        %v2034 = vadd.f32 %v1998, %v2018
        %v2035 = vadd.f32 %v1999, %v2019
        %v2036 = vadd.f32 %v2000, %v2020
        %v2037 = vadd.f32 %v2001, %v2021
        %v2038 = vadd.f32 %v2002, %v2022
        %v2039 = vadd.f32 %v2003, %v2023
        %v2040 = vadd.f32 %v2004, %v2024
        %v2041 = vadd.f32 %v2005, %v2025
        %v2042 = vadd.f32 %v2006, %v2026
        %v2043 = vadd.f32 %v2007, %v2027
        %v2044 = vadd.f32 %v2008, %v2028
        %v2045 = vadd.f32 %v2009, %v2029
        %v2046 = vlaneseq
        %v2047 = vshrl.u32 %v2046, 7
        %v2048 = vsub.s32 0, %v2047
        %v2049 = vrot.slane %v510, %v2048
        %v2050 = vmul.f32 %v1893, %v2049
        %v2051 = vmul.f32 %v1892, %v2049
        %v2052 = vmul.f32 %v1891, %v2049
        %v2053 = vmul.f32 %v1890, %v2049
        %v2054 = vmul.f32 %v1889, %v2049
        %v2055 = vmul.f32 %v1888, %v2049
        %v2056 = vmul.f32 %v1887, %v2049
        %v2057 = vmul.f32 %v1886, %v2049
        %v2058 = vmul.f32 %v1885, %v2049
        %v2059 = vmul.f32 %v1884, %v2049
        %v2060 = vmul.f32 %v1883, %v2049
        %v2061 = vmul.f32 %v1882, %v2049
        %v2062 = vmul.f32 %v1881, %v2049
        %v2063 = vmul.f32 %v1880, %v2049
        %v2064 = vmul.f32 %v1879, %v2049
        %v2065 = vmul.f32 %v1878, %v2049
        %v2066 = vadd.f32 %v2030, %v2050
        %v2067 = vadd.f32 %v2031, %v2051
        %v2068 = vadd.f32 %v2032, %v2052
        %v2069 = vadd.f32 %v2033, %v2053
        %v2070 = vadd.f32 %v2034, %v2054
        %v2071 = vadd.f32 %v2035, %v2055
        %v2072 = vadd.f32 %v2036, %v2056
        %v2073 = vadd.f32 %v2037, %v2057
        %v2074 = vadd.f32 %v2038, %v2058
        %v2075 = vadd.f32 %v2039, %v2059
        %v2076 = vadd.f32 %v2040, %v2060
        %v2077 = vadd.f32 %v2041, %v2061
        %v2078 = vadd.f32 %v2042, %v2062
        %v2079 = vadd.f32 %v2043, %v2063
        %v2080 = vadd.f32 %v2044, %v2064
        %v2081 = vadd.f32 %v2045, %v2065
        %v2082 = vlaneseq
        %v2083 = vshrl.u32 %v2082, 7
        %v2084 = vsub.s32 7, %v2083
        %v2085 = vrot.slane %v510, %v2084
        %v2086 = vmul.f32 %v1891, %v2085
        %v2087 = vmul.f32 %v1890, %v2085
        %v2088 = vmul.f32 %v1889, %v2085
        %v2089 = vmul.f32 %v1888, %v2085
        %v2090 = vmul.f32 %v1887, %v2085
        %v2091 = vmul.f32 %v1886, %v2085
        %v2092 = vmul.f32 %v1885, %v2085
        %v2093 = vmul.f32 %v1884, %v2085
        %v2094 = vmul.f32 %v1883, %v2085
        %v2095 = vmul.f32 %v1882, %v2085
        %v2096 = vmul.f32 %v1881, %v2085
        %v2097 = vmul.f32 %v1880, %v2085
        %v2098 = vmul.f32 %v1879, %v2085
        %v2099 = vmul.f32 %v1878, %v2085
        %v2100 = vmul.f32 %v1877, %v2085
        %v2101 = vmul.f32 %v1876, %v2085
        %v2102 = vadd.f32 %v2066, %v2086
        %v2103 = vadd.f32 %v2067, %v2087
        %v2104 = vadd.f32 %v2068, %v2088
        %v2105 = vadd.f32 %v2069, %v2089
        %v2106 = vadd.f32 %v2070, %v2090
        %v2107 = vadd.f32 %v2071, %v2091
        %v2108 = vadd.f32 %v2072, %v2092
        %v2109 = vadd.f32 %v2073, %v2093
        %v2110 = vadd.f32 %v2074, %v2094
        %v2111 = vadd.f32 %v2075, %v2095
        %v2112 = vadd.f32 %v2076, %v2096
        %v2113 = vadd.f32 %v2077, %v2097
        %v2114 = vadd.f32 %v2078, %v2098
        %v2115 = vadd.f32 %v2079, %v2099
        %v2116 = vadd.f32 %v2080, %v2100
        %v2117 = vadd.f32 %v2081, %v2101
        %v2118 = vlaneseq
        %v2119 = vshrl.u32 %v2118, 7
        %v2120 = vsub.s32 6, %v2119
        %v2121 = vrot.slane %v511, %v2120
        %v2122 = vmul.f32 %v1889, %v2121
        %v2123 = vmul.f32 %v1888, %v2121
        %v2124 = vmul.f32 %v1887, %v2121
        %v2125 = vmul.f32 %v1886, %v2121
        %v2126 = vmul.f32 %v1885, %v2121
        %v2127 = vmul.f32 %v1884, %v2121
        %v2128 = vmul.f32 %v1883, %v2121
        %v2129 = vmul.f32 %v1882, %v2121
        %v2130 = vmul.f32 %v1881, %v2121
        %v2131 = vmul.f32 %v1880, %v2121
        %v2132 = vmul.f32 %v1879, %v2121
        %v2133 = vmul.f32 %v1878, %v2121
        %v2134 = vmul.f32 %v1877, %v2121
        %v2135 = vmul.f32 %v1876, %v2121
        %v2136 = vmul.f32 %v1875, %v2121
        %v2137 = vmul.f32 %v1874, %v2121
        %v2138 = vadd.f32 %v2102, %v2122
        %v2139 = vadd.f32 %v2103, %v2123
        %v2140 = vadd.f32 %v2104, %v2124
        %v2141 = vadd.f32 %v2105, %v2125
        %v2142 = vadd.f32 %v2106, %v2126
        %v2143 = vadd.f32 %v2107, %v2127
        %v2144 = vadd.f32 %v2108, %v2128
        %v2145 = vadd.f32 %v2109, %v2129
        %v2146 = vadd.f32 %v2110, %v2130
        %v2147 = vadd.f32 %v2111, %v2131
        %v2148 = vadd.f32 %v2112, %v2132
        %v2149 = vadd.f32 %v2113, %v2133
        %v2150 = vadd.f32 %v2114, %v2134
        %v2151 = vadd.f32 %v2115, %v2135
        %v2152 = vadd.f32 %v2116, %v2136
        %v2153 = vadd.f32 %v2117, %v2137
        %v2154 = vrot.slane %v566, 5
        %v2155 = vrot.slane %v567, 5
        %v2156 = vrot.slane %v568, 5
        %v2157 = vrot.slane %v569, 5
        %v2158 = vrot.slane %v570, 5
        %v2159 = vrot.slane %v571, 5
        %v2160 = vrot.slane %v572, 5
        %v2161 = vrot.slane %v573, 5
        %v2162 = vrot.slane %v574, 5
        %v2163 = vrot.slane %v575, 5
        %v2164 = vrot.slane %v576, 5
        %v2165 = vrot.slane %v577, 5
        %v2166 = vrot.slane %v578, 5
        %v2167 = vrot.slane %v579, 5
        %v2168 = vrot.slane %v580, 5
        %v2169 = vrot.slane %v581, 5
        %v2170 = vrot.slane %v582, 5
        %v2171 = vrot.slane %v583, 5
        %v2172 = vrot.slane %v584, 5
        %v2173 = vrot.slane %v585, 5
        %v2174 = vrot.slane %v586, 5
        %v2175 = vrot.slane %v587, 5
        %v2176 = vrot.slane %v588, 5
        %v2177 = vrot.slane %v589, 5
        %v2178 = vrot.slane %v590, 5
        %v2179 = vrot.slane %v591, 5
        %v2180 = vrot.slane %v592, 5
        %v2181 = vrot.slane %v593, 5
        %v2182 = vrot.slane %v594, 5
        %v2183 = vrot.slane %v595, 5
        %v2184 = vrot.slane %v596, 5
        %v2185 = vrot.slane %v597, 5
        %v2186 = vrot.slane %v598, 5
        %v2187 = vrot.slane %v599, 5
        %v2188 = vrot.slane %v600, 5
        %v2189 = vrot.slane %v601, 5
        %v2190 = vrot.slane %v602, 5
        %v2191 = vrot.slane %v603, 5
        %v2192 = vrot.slane %v604, 5
        %v2193 = vrot.slane %v605, 5
        %v2194 = vrot.slane %v606, 5
        %v2195 = vrot.slane %v607, 5
        %vm2196 = vcmp.lt.s32.totalorder %v903, 3
        %v2197 = vsel %vm2196, %v2194, %v2195
        %v2198 = vsel %vm2196, %v2193, %v2194
        %v2199 = vsel %vm2196, %v2191, %v2192
        %v2200 = vsel %vm2196, %v2190, %v2191
        %v2201 = vsel %vm2196, %v2188, %v2189
        %v2202 = vsel %vm2196, %v2187, %v2188
        %v2203 = vsel %vm2196, %v2185, %v2186
        %v2204 = vsel %vm2196, %v2184, %v2185
        %v2205 = vsel %vm2196, %v2182, %v2183
        %v2206 = vsel %vm2196, %v2181, %v2182
        %v2207 = vsel %vm2196, %v2179, %v2180
        %v2208 = vsel %vm2196, %v2178, %v2179
        %v2209 = vsel %vm2196, %v2176, %v2177
        %v2210 = vsel %vm2196, %v2175, %v2176
        %v2211 = vsel %vm2196, %v2173, %v2174
        %v2212 = vsel %vm2196, %v2172, %v2173
        %v2213 = vsel %vm2196, %v2170, %v2171
        %v2214 = vsel %vm2196, %v2169, %v2170
        %v2215 = vsel %vm2196, %v2167, %v2168
        %v2216 = vsel %vm2196, %v2166, %v2167
        %v2217 = vsel %vm2196, %v2164, %v2165
        %v2218 = vsel %vm2196, %v2163, %v2164
        %v2219 = vsel %vm2196, %v2161, %v2162
        %v2220 = vsel %vm2196, %v2160, %v2161
        %v2221 = vsel %vm2196, %v2158, %v2159
        %v2222 = vsel %vm2196, %v2157, %v2158
        %v2223 = vsel %vm2196, %v2155, %v2156
        %v2224 = vsel %vm2196, %v2154, %v2155
        %v2225 = vlaneseq
        %v2226 = vshrl.u32 %v2225, 7
        %v2227 = vsub.s32 5, %v2226
        %v2228 = vrot.slane %v506, %v2227
        %v2229 = vmul.f32 %v2224, %v2228
        %v2230 = vmul.f32 %v2223, %v2228
        %v2231 = vmul.f32 %v2222, %v2228
        %v2232 = vmul.f32 %v2221, %v2228
        %v2233 = vmul.f32 %v2220, %v2228
        %v2234 = vmul.f32 %v2219, %v2228
        %v2235 = vmul.f32 %v2218, %v2228
        %v2236 = vmul.f32 %v2217, %v2228
        %v2237 = vmul.f32 %v2216, %v2228
        %v2238 = vmul.f32 %v2215, %v2228
        %v2239 = vmul.f32 %v2214, %v2228
        %v2240 = vmul.f32 %v2213, %v2228
        %v2241 = vmul.f32 %v2212, %v2228
        %v2242 = vmul.f32 %v2211, %v2228
        %v2243 = vmul.f32 %v2210, %v2228
        %v2244 = vmul.f32 %v2209, %v2228
        %v2245 = vadd.f32 %v2138, %v2229
        %v2246 = vadd.f32 %v2139, %v2230
        %v2247 = vadd.f32 %v2140, %v2231
        %v2248 = vadd.f32 %v2141, %v2232
        %v2249 = vadd.f32 %v2142, %v2233
        %v2250 = vadd.f32 %v2143, %v2234
        %v2251 = vadd.f32 %v2144, %v2235
        %v2252 = vadd.f32 %v2145, %v2236
        %v2253 = vadd.f32 %v2146, %v2237
        %v2254 = vadd.f32 %v2147, %v2238
        %v2255 = vadd.f32 %v2148, %v2239
        %v2256 = vadd.f32 %v2149, %v2240
        %v2257 = vadd.f32 %v2150, %v2241
        %v2258 = vadd.f32 %v2151, %v2242
        %v2259 = vadd.f32 %v2152, %v2243
        %v2260 = vadd.f32 %v2153, %v2244
        %v2261 = vlaneseq
        %v2262 = vshrl.u32 %v2261, 7
        %v2263 = vsub.s32 4, %v2262
        %v2264 = vrot.slane %v507, %v2263
        %v2265 = vmul.f32 %v2222, %v2264
        %v2266 = vmul.f32 %v2221, %v2264
        %v2267 = vmul.f32 %v2220, %v2264
        %v2268 = vmul.f32 %v2219, %v2264
        %v2269 = vmul.f32 %v2218, %v2264
        %v2270 = vmul.f32 %v2217, %v2264
        %v2271 = vmul.f32 %v2216, %v2264
        %v2272 = vmul.f32 %v2215, %v2264
        %v2273 = vmul.f32 %v2214, %v2264
        %v2274 = vmul.f32 %v2213, %v2264
        %v2275 = vmul.f32 %v2212, %v2264
        %v2276 = vmul.f32 %v2211, %v2264
        %v2277 = vmul.f32 %v2210, %v2264
        %v2278 = vmul.f32 %v2209, %v2264
        %v2279 = vmul.f32 %v2208, %v2264
        %v2280 = vmul.f32 %v2207, %v2264
        %v2281 = vadd.f32 %v2245, %v2265
        %v2282 = vadd.f32 %v2246, %v2266
        %v2283 = vadd.f32 %v2247, %v2267
        %v2284 = vadd.f32 %v2248, %v2268
        %v2285 = vadd.f32 %v2249, %v2269
        %v2286 = vadd.f32 %v2250, %v2270
        %v2287 = vadd.f32 %v2251, %v2271
        %v2288 = vadd.f32 %v2252, %v2272
        %v2289 = vadd.f32 %v2253, %v2273
        %v2290 = vadd.f32 %v2254, %v2274
        %v2291 = vadd.f32 %v2255, %v2275
        %v2292 = vadd.f32 %v2256, %v2276
        %v2293 = vadd.f32 %v2257, %v2277
        %v2294 = vadd.f32 %v2258, %v2278
        %v2295 = vadd.f32 %v2259, %v2279
        %v2296 = vadd.f32 %v2260, %v2280
        %v2297 = vlaneseq
        %v2298 = vshrl.u32 %v2297, 7
        %v2299 = vsub.s32 3, %v2298
        %v2300 = vrot.slane %v508, %v2299
        %v2301 = vmul.f32 %v2220, %v2300
        %v2302 = vmul.f32 %v2219, %v2300
        %v2303 = vmul.f32 %v2218, %v2300
        %v2304 = vmul.f32 %v2217, %v2300
        %v2305 = vmul.f32 %v2216, %v2300
        %v2306 = vmul.f32 %v2215, %v2300
        %v2307 = vmul.f32 %v2214, %v2300
        %v2308 = vmul.f32 %v2213, %v2300
        %v2309 = vmul.f32 %v2212, %v2300
        %v2310 = vmul.f32 %v2211, %v2300
        %v2311 = vmul.f32 %v2210, %v2300
        %v2312 = vmul.f32 %v2209, %v2300
        %v2313 = vmul.f32 %v2208, %v2300
        %v2314 = vmul.f32 %v2207, %v2300
        %v2315 = vmul.f32 %v2206, %v2300
        %v2316 = vmul.f32 %v2205, %v2300
        %v2317 = vadd.f32 %v2281, %v2301
        %v2318 = vadd.f32 %v2282, %v2302
        %v2319 = vadd.f32 %v2283, %v2303
        %v2320 = vadd.f32 %v2284, %v2304
        %v2321 = vadd.f32 %v2285, %v2305
        %v2322 = vadd.f32 %v2286, %v2306
        %v2323 = vadd.f32 %v2287, %v2307
        %v2324 = vadd.f32 %v2288, %v2308
        %v2325 = vadd.f32 %v2289, %v2309
        %v2326 = vadd.f32 %v2290, %v2310
        %v2327 = vadd.f32 %v2291, %v2311
        %v2328 = vadd.f32 %v2292, %v2312
        %v2329 = vadd.f32 %v2293, %v2313
        %v2330 = vadd.f32 %v2294, %v2314
        %v2331 = vadd.f32 %v2295, %v2315
        %v2332 = vadd.f32 %v2296, %v2316
        %v2333 = vlaneseq
        %v2334 = vshrl.u32 %v2333, 7
        %v2335 = vsub.s32 2, %v2334
        %v2336 = vrot.slane %v509, %v2335
        %v2337 = vmul.f32 %v2218, %v2336
        %v2338 = vmul.f32 %v2217, %v2336
        %v2339 = vmul.f32 %v2216, %v2336
        %v2340 = vmul.f32 %v2215, %v2336
        %v2341 = vmul.f32 %v2214, %v2336
        %v2342 = vmul.f32 %v2213, %v2336
        %v2343 = vmul.f32 %v2212, %v2336
        %v2344 = vmul.f32 %v2211, %v2336
        %v2345 = vmul.f32 %v2210, %v2336
        %v2346 = vmul.f32 %v2209, %v2336
        %v2347 = vmul.f32 %v2208, %v2336
        %v2348 = vmul.f32 %v2207, %v2336
        %v2349 = vmul.f32 %v2206, %v2336
        %v2350 = vmul.f32 %v2205, %v2336
        %v2351 = vmul.f32 %v2204, %v2336
        %v2352 = vmul.f32 %v2203, %v2336
        %v2353 = vadd.f32 %v2317, %v2337
        %v2354 = vadd.f32 %v2318, %v2338
        %v2355 = vadd.f32 %v2319, %v2339
        %v2356 = vadd.f32 %v2320, %v2340
        %v2357 = vadd.f32 %v2321, %v2341
        %v2358 = vadd.f32 %v2322, %v2342
        %v2359 = vadd.f32 %v2323, %v2343
        %v2360 = vadd.f32 %v2324, %v2344
        %v2361 = vadd.f32 %v2325, %v2345
        %v2362 = vadd.f32 %v2326, %v2346
        %v2363 = vadd.f32 %v2327, %v2347
        %v2364 = vadd.f32 %v2328, %v2348
        %v2365 = vadd.f32 %v2329, %v2349
        %v2366 = vadd.f32 %v2330, %v2350
        %v2367 = vadd.f32 %v2331, %v2351
        %v2368 = vadd.f32 %v2332, %v2352
        %v2369 = vlaneseq
        %v2370 = vshrl.u32 %v2369, 7
        %v2371 = vsub.s32 1, %v2370
        %v2372 = vrot.slane %v510, %v2371
        %v2373 = vmul.f32 %v2216, %v2372
        %v2374 = vmul.f32 %v2215, %v2372
        %v2375 = vmul.f32 %v2214, %v2372
        %v2376 = vmul.f32 %v2213, %v2372
        %v2377 = vmul.f32 %v2212, %v2372
        %v2378 = vmul.f32 %v2211, %v2372
        %v2379 = vmul.f32 %v2210, %v2372
        %v2380 = vmul.f32 %v2209, %v2372
        %v2381 = vmul.f32 %v2208, %v2372
        %v2382 = vmul.f32 %v2207, %v2372
        %v2383 = vmul.f32 %v2206, %v2372
        %v2384 = vmul.f32 %v2205, %v2372
        %v2385 = vmul.f32 %v2204, %v2372
        %v2386 = vmul.f32 %v2203, %v2372
        %v2387 = vmul.f32 %v2202, %v2372
        %v2388 = vmul.f32 %v2201, %v2372
        %v2389 = vadd.f32 %v2353, %v2373
        %v2390 = vadd.f32 %v2354, %v2374
        %v2391 = vadd.f32 %v2355, %v2375
        %v2392 = vadd.f32 %v2356, %v2376
        %v2393 = vadd.f32 %v2357, %v2377
        %v2394 = vadd.f32 %v2358, %v2378
        %v2395 = vadd.f32 %v2359, %v2379
        %v2396 = vadd.f32 %v2360, %v2380
        %v2397 = vadd.f32 %v2361, %v2381
        %v2398 = vadd.f32 %v2362, %v2382
        %v2399 = vadd.f32 %v2363, %v2383
        %v2400 = vadd.f32 %v2364, %v2384
        %v2401 = vadd.f32 %v2365, %v2385
        %v2402 = vadd.f32 %v2366, %v2386
        %v2403 = vadd.f32 %v2367, %v2387
        %v2404 = vadd.f32 %v2368, %v2388
        %v2405 = vlaneseq
        %v2406 = vshrl.u32 %v2405, 7
        %v2407 = vsub.s32 0, %v2406
        %v2408 = vrot.slane %v511, %v2407
        %v2409 = vmul.f32 %v2214, %v2408
        %v2410 = vmul.f32 %v2213, %v2408
        %v2411 = vmul.f32 %v2212, %v2408
        %v2412 = vmul.f32 %v2211, %v2408
        %v2413 = vmul.f32 %v2210, %v2408
        %v2414 = vmul.f32 %v2209, %v2408
        %v2415 = vmul.f32 %v2208, %v2408
        %v2416 = vmul.f32 %v2207, %v2408
        %v2417 = vmul.f32 %v2206, %v2408
        %v2418 = vmul.f32 %v2205, %v2408
        %v2419 = vmul.f32 %v2204, %v2408
        %v2420 = vmul.f32 %v2203, %v2408
        %v2421 = vmul.f32 %v2202, %v2408
        %v2422 = vmul.f32 %v2201, %v2408
        %v2423 = vmul.f32 %v2200, %v2408
        %v2424 = vmul.f32 %v2199, %v2408
        %v2425 = vadd.f32 %v2389, %v2409
        %v2426 = vadd.f32 %v2390, %v2410
        %v2427 = vadd.f32 %v2391, %v2411
        %v2428 = vadd.f32 %v2392, %v2412
        %v2429 = vadd.f32 %v2393, %v2413
        %v2430 = vadd.f32 %v2394, %v2414
        %v2431 = vadd.f32 %v2395, %v2415
        %v2432 = vadd.f32 %v2396, %v2416
        %v2433 = vadd.f32 %v2397, %v2417
        %v2434 = vadd.f32 %v2398, %v2418
        %v2435 = vadd.f32 %v2399, %v2419
        %v2436 = vadd.f32 %v2400, %v2420
        %v2437 = vadd.f32 %v2401, %v2421
        %v2438 = vadd.f32 %v2402, %v2422
        %v2439 = vadd.f32 %v2403, %v2423
        %v2440 = vadd.f32 %v2404, %v2424
        %v2441 = vlaneseq
        %v2442 = vshrl.u32 %v2441, 7
        %v2443 = vsub.s32 7, %v2442
        %v2444 = vrot.slane %v511, %v2443
        %v2445 = vmul.f32 %v2212, %v2444
        %v2446 = vmul.f32 %v2211, %v2444
        %v2447 = vmul.f32 %v2210, %v2444
        %v2448 = vmul.f32 %v2209, %v2444
        %v2449 = vmul.f32 %v2208, %v2444
        %v2450 = vmul.f32 %v2207, %v2444
        %v2451 = vmul.f32 %v2206, %v2444
        %v2452 = vmul.f32 %v2205, %v2444
        %v2453 = vmul.f32 %v2204, %v2444
        %v2454 = vmul.f32 %v2203, %v2444
        %v2455 = vmul.f32 %v2202, %v2444
        %v2456 = vmul.f32 %v2201, %v2444
        %v2457 = vmul.f32 %v2200, %v2444
        %v2458 = vmul.f32 %v2199, %v2444
        %v2459 = vmul.f32 %v2198, %v2444
        %v2460 = vmul.f32 %v2197, %v2444
        %v2461 = vadd.f32 %v2425, %v2445
        %v2462 = vadd.f32 %v2426, %v2446
        %v2463 = vadd.f32 %v2427, %v2447
        %v2464 = vadd.f32 %v2428, %v2448
        %v2465 = vadd.f32 %v2429, %v2449
        %v2466 = vadd.f32 %v2430, %v2450
        %v2467 = vadd.f32 %v2431, %v2451
        %v2468 = vadd.f32 %v2432, %v2452
        %v2469 = vadd.f32 %v2433, %v2453
        %v2470 = vadd.f32 %v2434, %v2454
        %v2471 = vadd.f32 %v2435, %v2455
        %v2472 = vadd.f32 %v2436, %v2456
        %v2473 = vadd.f32 %v2437, %v2457
        %v2474 = vadd.f32 %v2438, %v2458
        %v2475 = vadd.f32 %v2439, %v2459
        %v2476 = vadd.f32 %v2440, %v2460
        %v2477 = vrot.slane %v566, 6
        %v2478 = vrot.slane %v567, 6
        %v2479 = vrot.slane %v568, 6
        %v2480 = vrot.slane %v569, 6
        %v2481 = vrot.slane %v570, 6
        %v2482 = vrot.slane %v571, 6
        %v2483 = vrot.slane %v572, 6
        %v2484 = vrot.slane %v573, 6
        %v2485 = vrot.slane %v574, 6
        %v2486 = vrot.slane %v575, 6
        %v2487 = vrot.slane %v576, 6
        %v2488 = vrot.slane %v577, 6
        %v2489 = vrot.slane %v578, 6
        %v2490 = vrot.slane %v579, 6
        %v2491 = vrot.slane %v580, 6
        %v2492 = vrot.slane %v581, 6
        %v2493 = vrot.slane %v582, 6
        %v2494 = vrot.slane %v583, 6
        %v2495 = vrot.slane %v584, 6
        %v2496 = vrot.slane %v585, 6
        %v2497 = vrot.slane %v586, 6
        %v2498 = vrot.slane %v587, 6
        %v2499 = vrot.slane %v588, 6
        %v2500 = vrot.slane %v589, 6
        %v2501 = vrot.slane %v590, 6
        %v2502 = vrot.slane %v591, 6
        %v2503 = vrot.slane %v592, 6
        %v2504 = vrot.slane %v593, 6
        %v2505 = vrot.slane %v594, 6
        %v2506 = vrot.slane %v595, 6
        %v2507 = vrot.slane %v596, 6
        %v2508 = vrot.slane %v597, 6
        %v2509 = vrot.slane %v598, 6
        %v2510 = vrot.slane %v599, 6
        %v2511 = vrot.slane %v600, 6
        %v2512 = vrot.slane %v601, 6
        %v2513 = vrot.slane %v602, 6
        %v2514 = vrot.slane %v603, 6
        %v2515 = vrot.slane %v604, 6
        %v2516 = vrot.slane %v605, 6
        %v2517 = vrot.slane %v606, 6
        %v2518 = vrot.slane %v607, 6
        %vm2519 = vcmp.lt.s32.totalorder %v903, 2
        %v2520 = vsel %vm2519, %v2517, %v2518
        %v2521 = vsel %vm2519, %v2516, %v2517
        %v2522 = vsel %vm2519, %v2514, %v2515
        %v2523 = vsel %vm2519, %v2513, %v2514
        %v2524 = vsel %vm2519, %v2511, %v2512
        %v2525 = vsel %vm2519, %v2510, %v2511
        %v2526 = vsel %vm2519, %v2508, %v2509
        %v2527 = vsel %vm2519, %v2507, %v2508
        %v2528 = vsel %vm2519, %v2505, %v2506
        %v2529 = vsel %vm2519, %v2504, %v2505
        %v2530 = vsel %vm2519, %v2502, %v2503
        %v2531 = vsel %vm2519, %v2501, %v2502
        %v2532 = vsel %vm2519, %v2499, %v2500
        %v2533 = vsel %vm2519, %v2498, %v2499
        %v2534 = vsel %vm2519, %v2496, %v2497
        %v2535 = vsel %vm2519, %v2495, %v2496
        %v2536 = vsel %vm2519, %v2493, %v2494
        %v2537 = vsel %vm2519, %v2492, %v2493
        %v2538 = vsel %vm2519, %v2490, %v2491
        %v2539 = vsel %vm2519, %v2489, %v2490
        %v2540 = vsel %vm2519, %v2487, %v2488
        %v2541 = vsel %vm2519, %v2486, %v2487
        %v2542 = vsel %vm2519, %v2484, %v2485
        %v2543 = vsel %vm2519, %v2483, %v2484
        %v2544 = vsel %vm2519, %v2481, %v2482
        %v2545 = vsel %vm2519, %v2480, %v2481
        %v2546 = vsel %vm2519, %v2478, %v2479
        %v2547 = vsel %vm2519, %v2477, %v2478
        %v2548 = vlaneseq
        %v2549 = vshrl.u32 %v2548, 7
        %v2550 = vsub.s32 6, %v2549
        %v2551 = vrot.slane %v506, %v2550
        %v2552 = vmul.f32 %v2547, %v2551
        %v2553 = vmul.f32 %v2546, %v2551
        %v2554 = vmul.f32 %v2545, %v2551
        %v2555 = vmul.f32 %v2544, %v2551
        %v2556 = vmul.f32 %v2543, %v2551
        %v2557 = vmul.f32 %v2542, %v2551
        %v2558 = vmul.f32 %v2541, %v2551
        %v2559 = vmul.f32 %v2540, %v2551
        %v2560 = vmul.f32 %v2539, %v2551
        %v2561 = vmul.f32 %v2538, %v2551
        %v2562 = vmul.f32 %v2537, %v2551
        %v2563 = vmul.f32 %v2536, %v2551
        %v2564 = vmul.f32 %v2535, %v2551
        %v2565 = vmul.f32 %v2534, %v2551
        %v2566 = vmul.f32 %v2533, %v2551
        %v2567 = vmul.f32 %v2532, %v2551
        %v2568 = vadd.f32 %v2461, %v2552
        %v2569 = vadd.f32 %v2462, %v2553
        %v2570 = vadd.f32 %v2463, %v2554
        %v2571 = vadd.f32 %v2464, %v2555
        %v2572 = vadd.f32 %v2465, %v2556
        %v2573 = vadd.f32 %v2466, %v2557
        %v2574 = vadd.f32 %v2467, %v2558
        %v2575 = vadd.f32 %v2468, %v2559
        %v2576 = vadd.f32 %v2469, %v2560
        %v2577 = vadd.f32 %v2470, %v2561
        %v2578 = vadd.f32 %v2471, %v2562
        %v2579 = vadd.f32 %v2472, %v2563
        %v2580 = vadd.f32 %v2473, %v2564
        %v2581 = vadd.f32 %v2474, %v2565
        %v2582 = vadd.f32 %v2475, %v2566
        %v2583 = vadd.f32 %v2476, %v2567
        %v2584 = vlaneseq
        %v2585 = vshrl.u32 %v2584, 7
        %v2586 = vsub.s32 5, %v2585
        %v2587 = vrot.slane %v507, %v2586
        %v2588 = vmul.f32 %v2545, %v2587
        %v2589 = vmul.f32 %v2544, %v2587
        %v2590 = vmul.f32 %v2543, %v2587
        %v2591 = vmul.f32 %v2542, %v2587
        %v2592 = vmul.f32 %v2541, %v2587
        %v2593 = vmul.f32 %v2540, %v2587
        %v2594 = vmul.f32 %v2539, %v2587
        %v2595 = vmul.f32 %v2538, %v2587
        %v2596 = vmul.f32 %v2537, %v2587
        %v2597 = vmul.f32 %v2536, %v2587
        %v2598 = vmul.f32 %v2535, %v2587
        %v2599 = vmul.f32 %v2534, %v2587
        %v2600 = vmul.f32 %v2533, %v2587
        %v2601 = vmul.f32 %v2532, %v2587
        %v2602 = vmul.f32 %v2531, %v2587
        %v2603 = vmul.f32 %v2530, %v2587
        %v2604 = vadd.f32 %v2568, %v2588
        %v2605 = vadd.f32 %v2569, %v2589
        %v2606 = vadd.f32 %v2570, %v2590
        %v2607 = vadd.f32 %v2571, %v2591
        %v2608 = vadd.f32 %v2572, %v2592
        %v2609 = vadd.f32 %v2573, %v2593
        %v2610 = vadd.f32 %v2574, %v2594
        %v2611 = vadd.f32 %v2575, %v2595
        %v2612 = vadd.f32 %v2576, %v2596
        %v2613 = vadd.f32 %v2577, %v2597
        %v2614 = vadd.f32 %v2578, %v2598
        %v2615 = vadd.f32 %v2579, %v2599
        %v2616 = vadd.f32 %v2580, %v2600
        %v2617 = vadd.f32 %v2581, %v2601
        %v2618 = vadd.f32 %v2582, %v2602
        %v2619 = vadd.f32 %v2583, %v2603
        %v2620 = vlaneseq
        %v2621 = vshrl.u32 %v2620, 7
        %v2622 = vsub.s32 4, %v2621
        %v2623 = vrot.slane %v508, %v2622
        %v2624 = vmul.f32 %v2543, %v2623
        %v2625 = vmul.f32 %v2542, %v2623
        %v2626 = vmul.f32 %v2541, %v2623
        %v2627 = vmul.f32 %v2540, %v2623
        %v2628 = vmul.f32 %v2539, %v2623
        %v2629 = vmul.f32 %v2538, %v2623
        %v2630 = vmul.f32 %v2537, %v2623
        %v2631 = vmul.f32 %v2536, %v2623
        %v2632 = vmul.f32 %v2535, %v2623
        %v2633 = vmul.f32 %v2534, %v2623
        %v2634 = vmul.f32 %v2533, %v2623
        %v2635 = vmul.f32 %v2532, %v2623
        %v2636 = vmul.f32 %v2531, %v2623
        %v2637 = vmul.f32 %v2530, %v2623
        %v2638 = vmul.f32 %v2529, %v2623
        %v2639 = vmul.f32 %v2528, %v2623
        %v2640 = vadd.f32 %v2604, %v2624
        %v2641 = vadd.f32 %v2605, %v2625
        %v2642 = vadd.f32 %v2606, %v2626
        %v2643 = vadd.f32 %v2607, %v2627
        %v2644 = vadd.f32 %v2608, %v2628
        %v2645 = vadd.f32 %v2609, %v2629
        %v2646 = vadd.f32 %v2610, %v2630
        %v2647 = vadd.f32 %v2611, %v2631
        %v2648 = vadd.f32 %v2612, %v2632
        %v2649 = vadd.f32 %v2613, %v2633
        %v2650 = vadd.f32 %v2614, %v2634
        %v2651 = vadd.f32 %v2615, %v2635
        %v2652 = vadd.f32 %v2616, %v2636
        %v2653 = vadd.f32 %v2617, %v2637
        %v2654 = vadd.f32 %v2618, %v2638
        %v2655 = vadd.f32 %v2619, %v2639
        %v2656 = vlaneseq
        %v2657 = vshrl.u32 %v2656, 7
        %v2658 = vsub.s32 3, %v2657
        %v2659 = vrot.slane %v509, %v2658
        %v2660 = vmul.f32 %v2541, %v2659
        %v2661 = vmul.f32 %v2540, %v2659
        %v2662 = vmul.f32 %v2539, %v2659
        %v2663 = vmul.f32 %v2538, %v2659
        %v2664 = vmul.f32 %v2537, %v2659
        %v2665 = vmul.f32 %v2536, %v2659
        %v2666 = vmul.f32 %v2535, %v2659
        %v2667 = vmul.f32 %v2534, %v2659
        %v2668 = vmul.f32 %v2533, %v2659
        %v2669 = vmul.f32 %v2532, %v2659
        %v2670 = vmul.f32 %v2531, %v2659
        %v2671 = vmul.f32 %v2530, %v2659
        %v2672 = vmul.f32 %v2529, %v2659
        %v2673 = vmul.f32 %v2528, %v2659
        %v2674 = vmul.f32 %v2527, %v2659
        %v2675 = vmul.f32 %v2526, %v2659
        %v2676 = vadd.f32 %v2640, %v2660
        %v2677 = vadd.f32 %v2641, %v2661
        %v2678 = vadd.f32 %v2642, %v2662
        %v2679 = vadd.f32 %v2643, %v2663
        %v2680 = vadd.f32 %v2644, %v2664
        %v2681 = vadd.f32 %v2645, %v2665
        %v2682 = vadd.f32 %v2646, %v2666
        %v2683 = vadd.f32 %v2647, %v2667
        %v2684 = vadd.f32 %v2648, %v2668
        %v2685 = vadd.f32 %v2649, %v2669
        %v2686 = vadd.f32 %v2650, %v2670
        %v2687 = vadd.f32 %v2651, %v2671
        %v2688 = vadd.f32 %v2652, %v2672
        %v2689 = vadd.f32 %v2653, %v2673
        %v2690 = vadd.f32 %v2654, %v2674
        %v2691 = vadd.f32 %v2655, %v2675
        %v2692 = vlaneseq
        %v2693 = vshrl.u32 %v2692, 7
        %v2694 = vsub.s32 2, %v2693
        %v2695 = vrot.slane %v510, %v2694
        %v2696 = vmul.f32 %v2539, %v2695
        %v2697 = vmul.f32 %v2538, %v2695
        %v2698 = vmul.f32 %v2537, %v2695
        %v2699 = vmul.f32 %v2536, %v2695
        %v2700 = vmul.f32 %v2535, %v2695
        %v2701 = vmul.f32 %v2534, %v2695
        %v2702 = vmul.f32 %v2533, %v2695
        %v2703 = vmul.f32 %v2532, %v2695
        %v2704 = vmul.f32 %v2531, %v2695
        %v2705 = vmul.f32 %v2530, %v2695
        %v2706 = vmul.f32 %v2529, %v2695
        %v2707 = vmul.f32 %v2528, %v2695
        %v2708 = vmul.f32 %v2527, %v2695
        %v2709 = vmul.f32 %v2526, %v2695
        %v2710 = vmul.f32 %v2525, %v2695
        %v2711 = vmul.f32 %v2524, %v2695
        %v2712 = vadd.f32 %v2676, %v2696
        %v2713 = vadd.f32 %v2677, %v2697
        %v2714 = vadd.f32 %v2678, %v2698
        %v2715 = vadd.f32 %v2679, %v2699
        %v2716 = vadd.f32 %v2680, %v2700
        %v2717 = vadd.f32 %v2681, %v2701
        %v2718 = vadd.f32 %v2682, %v2702
        %v2719 = vadd.f32 %v2683, %v2703
        %v2720 = vadd.f32 %v2684, %v2704
        %v2721 = vadd.f32 %v2685, %v2705
        %v2722 = vadd.f32 %v2686, %v2706
        %v2723 = vadd.f32 %v2687, %v2707
        %v2724 = vadd.f32 %v2688, %v2708
        %v2725 = vadd.f32 %v2689, %v2709
        %v2726 = vadd.f32 %v2690, %v2710
        %v2727 = vadd.f32 %v2691, %v2711
        %v2728 = vlaneseq
        %v2729 = vshrl.u32 %v2728, 7
        %v2730 = vsub.s32 1, %v2729
        %v2731 = vrot.slane %v511, %v2730
        %v2732 = vmul.f32 %v2537, %v2731
        %v2733 = vmul.f32 %v2536, %v2731
        %v2734 = vmul.f32 %v2535, %v2731
        %v2735 = vmul.f32 %v2534, %v2731
        %v2736 = vmul.f32 %v2533, %v2731
        %v2737 = vmul.f32 %v2532, %v2731
        %v2738 = vmul.f32 %v2531, %v2731
        %v2739 = vmul.f32 %v2530, %v2731
        %v2740 = vmul.f32 %v2529, %v2731
        %v2741 = vmul.f32 %v2528, %v2731
        %v2742 = vmul.f32 %v2527, %v2731
        %v2743 = vmul.f32 %v2526, %v2731
        %v2744 = vmul.f32 %v2525, %v2731
        %v2745 = vmul.f32 %v2524, %v2731
        %v2746 = vmul.f32 %v2523, %v2731
        %v2747 = vmul.f32 %v2522, %v2731
        %v2748 = vadd.f32 %v2712, %v2732
        %v2749 = vadd.f32 %v2713, %v2733
        %v2750 = vadd.f32 %v2714, %v2734
        %v2751 = vadd.f32 %v2715, %v2735
        %v2752 = vadd.f32 %v2716, %v2736
        %v2753 = vadd.f32 %v2717, %v2737
        %v2754 = vadd.f32 %v2718, %v2738
        %v2755 = vadd.f32 %v2719, %v2739
        %v2756 = vadd.f32 %v2720, %v2740
        %v2757 = vadd.f32 %v2721, %v2741
        %v2758 = vadd.f32 %v2722, %v2742
        %v2759 = vadd.f32 %v2723, %v2743
        %v2760 = vadd.f32 %v2724, %v2744
        %v2761 = vadd.f32 %v2725, %v2745
        %v2762 = vadd.f32 %v2726, %v2746
        %v2763 = vadd.f32 %v2727, %v2747
        %v2764 = vlaneseq
        %v2765 = vshrl.u32 %v2764, 7
        %v2766 = vsub.s32 0, %v2765
        %v2767 = vrot.slane %v512, %v2766
        %v2768 = vmul.f32 %v2535, %v2767
        %v2769 = vmul.f32 %v2534, %v2767
        %v2770 = vmul.f32 %v2533, %v2767
        %v2771 = vmul.f32 %v2532, %v2767
        %v2772 = vmul.f32 %v2531, %v2767
        %v2773 = vmul.f32 %v2530, %v2767
        %v2774 = vmul.f32 %v2529, %v2767
        %v2775 = vmul.f32 %v2528, %v2767
        %v2776 = vmul.f32 %v2527, %v2767
        %v2777 = vmul.f32 %v2526, %v2767
        %v2778 = vmul.f32 %v2525, %v2767
        %v2779 = vmul.f32 %v2524, %v2767
        %v2780 = vmul.f32 %v2523, %v2767
        %v2781 = vmul.f32 %v2522, %v2767
        %v2782 = vmul.f32 %v2521, %v2767
        %v2783 = vmul.f32 %v2520, %v2767
        %v2784 = vadd.f32 %v2748, %v2768
        %v2785 = vadd.f32 %v2749, %v2769
        %v2786 = vadd.f32 %v2750, %v2770
        %v2787 = vadd.f32 %v2751, %v2771
        %v2788 = vadd.f32 %v2752, %v2772
        %v2789 = vadd.f32 %v2753, %v2773
        %v2790 = vadd.f32 %v2754, %v2774
        %v2791 = vadd.f32 %v2755, %v2775
        %v2792 = vadd.f32 %v2756, %v2776
        %v2793 = vadd.f32 %v2757, %v2777
        %v2794 = vadd.f32 %v2758, %v2778
        %v2795 = vadd.f32 %v2759, %v2779
        %v2796 = vadd.f32 %v2760, %v2780
        %v2797 = vadd.f32 %v2761, %v2781
        %v2798 = vadd.f32 %v2762, %v2782
        %v2799 = vadd.f32 %v2763, %v2783
        %v2801 = vlaneseq
        %v2802 = vshrl.u32 %v2801, 7
        %v2803 = vsub.s32 0, %v2802
        %v2804 = vrot.slane %v513, %v2803
        %v2806 = vadd.f32 %v2784, %v2804
        %v2807 = vadd.f32 %v2785, %v2804
        %v2808 = vadd.f32 %v2786, %v2804
        %v2809 = vadd.f32 %v2787, %v2804
        %v2810 = vadd.f32 %v2788, %v2804
        %v2811 = vadd.f32 %v2789, %v2804
        %v2812 = vadd.f32 %v2790, %v2804
        %v2813 = vadd.f32 %v2791, %v2804
        %v2814 = vadd.f32 %v2792, %v2804
        %v2815 = vadd.f32 %v2793, %v2804
        %v2816 = vadd.f32 %v2794, %v2804
        %v2817 = vadd.f32 %v2795, %v2804
        %v2818 = vadd.f32 %v2796, %v2804
        %v2819 = vadd.f32 %v2797, %v2804
        %v2820 = vadd.f32 %v2798, %v2804
        %v2821 = vadd.f32 %v2799, %v2804
        %2822 = vadd.xlane.f32.xlu0 %v2806
        %v2823 = vpop.xlane.xlu0 %2822
        %2824 = vadd.xlane.f32.xlu0 %v2807
        %v2825 = vpop.xlane.xlu0 %2824
        %2826 = vadd.xlane.f32.xlu0 %v2808
        %v2827 = vpop.xlane.xlu0 %2826
        %2828 = vadd.xlane.f32.xlu0 %v2809
        %v2829 = vpop.xlane.xlu0 %2828
        %2830 = vadd.xlane.f32.xlu0 %v2810
        %v2831 = vpop.xlane.xlu0 %2830
        %2832 = vadd.xlane.f32.xlu0 %v2811
        %v2833 = vpop.xlane.xlu0 %2832
        %2834 = vadd.xlane.f32.xlu0 %v2812
        %v2835 = vpop.xlane.xlu0 %2834
        %2836 = vadd.xlane.f32.xlu0 %v2813
        %v2837 = vpop.xlane.xlu0 %2836
        %2838 = vadd.xlane.f32.xlu0 %v2814
        %v2839 = vpop.xlane.xlu0 %2838
        %2840 = vadd.xlane.f32.xlu0 %v2815
        %v2841 = vpop.xlane.xlu0 %2840
        %2842 = vadd.xlane.f32.xlu0 %v2816
        %v2843 = vpop.xlane.xlu0 %2842
        %2844 = vadd.xlane.f32.xlu0 %v2817
        %v2845 = vpop.xlane.xlu0 %2844
        %2846 = vadd.xlane.f32.xlu0 %v2818
        %v2847 = vpop.xlane.xlu0 %2846
        %2848 = vadd.xlane.f32.xlu0 %v2819
        %v2849 = vpop.xlane.xlu0 %2848
        %2850 = vadd.xlane.f32.xlu0 %v2820
        %v2851 = vpop.xlane.xlu0 %2850
        %2852 = vadd.xlane.f32.xlu0 %v2821
        %v2853 = vpop.xlane.xlu0 %2852
        %v2854 = vmul.f32 %v2823, 0.25
        %v2855 = vmul.f32 %v2825, 0.25
        %v2856 = vmul.f32 %v2827, 0.25
        %v2857 = vmul.f32 %v2829, 0.25
        %v2858 = vmul.f32 %v2831, 0.25
        %v2859 = vmul.f32 %v2833, 0.25
        %v2860 = vmul.f32 %v2835, 0.25
        %v2861 = vmul.f32 %v2837, 0.25
        %v2862 = vmul.f32 %v2839, 0.25
        %v2863 = vmul.f32 %v2841, 0.25
        %v2864 = vmul.f32 %v2843, 0.25
        %v2865 = vmul.f32 %v2845, 0.25
        %v2866 = vmul.f32 %v2847, 0.25
        %v2867 = vmul.f32 %v2849, 0.25
        %v2868 = vmul.f32 %v2851, 0.25
        %v2869 = vmul.f32 %v2853, 0.25
        %v2870 = vmul.f32 %v2806, %v2806
        %v2871 = vmul.f32 %v2807, %v2807
        %v2872 = vmul.f32 %v2808, %v2808
        %v2873 = vmul.f32 %v2809, %v2809
        %v2874 = vmul.f32 %v2810, %v2810
        %v2875 = vmul.f32 %v2811, %v2811
        %v2876 = vmul.f32 %v2812, %v2812
        %v2877 = vmul.f32 %v2813, %v2813
        %v2878 = vmul.f32 %v2814, %v2814
        %v2879 = vmul.f32 %v2815, %v2815
        %v2880 = vmul.f32 %v2816, %v2816
        %v2881 = vmul.f32 %v2817, %v2817
        %v2882 = vmul.f32 %v2818, %v2818
        %v2883 = vmul.f32 %v2819, %v2819
        %v2884 = vmul.f32 %v2820, %v2820
        %v2885 = vmul.f32 %v2821, %v2821
        %2886 = vadd.xlane.f32.xlu0 %v2870
        %v2887 = vpop.xlane.xlu0 %2886
        %2888 = vadd.xlane.f32.xlu0 %v2871
        %v2889 = vpop.xlane.xlu0 %2888
        %2890 = vadd.xlane.f32.xlu0 %v2872
        %v2891 = vpop.xlane.xlu0 %2890
        %2892 = vadd.xlane.f32.xlu0 %v2873
        %v2893 = vpop.xlane.xlu0 %2892
        %2894 = vadd.xlane.f32.xlu0 %v2874
        %v2895 = vpop.xlane.xlu0 %2894
        %2896 = vadd.xlane.f32.xlu0 %v2875
        %v2897 = vpop.xlane.xlu0 %2896
        %2898 = vadd.xlane.f32.xlu0 %v2876
        %v2899 = vpop.xlane.xlu0 %2898
        %2900 = vadd.xlane.f32.xlu0 %v2877
        %v2901 = vpop.xlane.xlu0 %2900
        %2902 = vadd.xlane.f32.xlu0 %v2878
        %v2903 = vpop.xlane.xlu0 %2902
        %2904 = vadd.xlane.f32.xlu0 %v2879
        %v2905 = vpop.xlane.xlu0 %2904
        %2906 = vadd.xlane.f32.xlu0 %v2880
        %v2907 = vpop.xlane.xlu0 %2906
        %2908 = vadd.xlane.f32.xlu0 %v2881
        %v2909 = vpop.xlane.xlu0 %2908
        %2910 = vadd.xlane.f32.xlu0 %v2882
        %v2911 = vpop.xlane.xlu0 %2910
        %2912 = vadd.xlane.f32.xlu0 %v2883
        %v2913 = vpop.xlane.xlu0 %2912
        %2914 = vadd.xlane.f32.xlu0 %v2884
        %v2915 = vpop.xlane.xlu0 %2914
        %2916 = vadd.xlane.f32.xlu0 %v2885
        %v2917 = vpop.xlane.xlu0 %2916
        %v2918 = vmul.f32 %v2887, 0.25
        %v2919 = vmul.f32 %v2889, 0.25
        %v2920 = vmul.f32 %v2891, 0.25
        %v2921 = vmul.f32 %v2893, 0.25
        %v2922 = vmul.f32 %v2895, 0.25
        %v2923 = vmul.f32 %v2897, 0.25
        %v2924 = vmul.f32 %v2899, 0.25
        %v2925 = vmul.f32 %v2901, 0.25
        %v2926 = vmul.f32 %v2903, 0.25
        %v2927 = vmul.f32 %v2905, 0.25
        %v2928 = vmul.f32 %v2907, 0.25
        %v2929 = vmul.f32 %v2909, 0.25
        %v2930 = vmul.f32 %v2911, 0.25
        %v2931 = vmul.f32 %v2913, 0.25
        %v2932 = vmul.f32 %v2915, 0.25
        %v2933 = vmul.f32 %v2917, 0.25
        %v2934 = vmul.f32 %v2854, %v2854
        %v2935 = vmul.f32 %v2855, %v2855
        %v2936 = vmul.f32 %v2856, %v2856
        %v2937 = vmul.f32 %v2857, %v2857
        %v2938 = vmul.f32 %v2858, %v2858
        %v2939 = vmul.f32 %v2859, %v2859
        %v2940 = vmul.f32 %v2860, %v2860
        %v2941 = vmul.f32 %v2861, %v2861
        %v2942 = vmul.f32 %v2862, %v2862
        %v2943 = vmul.f32 %v2863, %v2863
        %v2944 = vmul.f32 %v2864, %v2864
        %v2945 = vmul.f32 %v2865, %v2865
        %v2946 = vmul.f32 %v2866, %v2866
        %v2947 = vmul.f32 %v2867, %v2867
        %v2948 = vmul.f32 %v2868, %v2868
        %v2949 = vmul.f32 %v2869, %v2869
        %v2950 = vsub.f32 %v2918, %v2934
        %v2951 = vsub.f32 %v2919, %v2935
        %v2952 = vsub.f32 %v2920, %v2936
        %v2953 = vsub.f32 %v2921, %v2937
        %v2954 = vsub.f32 %v2922, %v2938
        %v2955 = vsub.f32 %v2923, %v2939
        %v2956 = vsub.f32 %v2924, %v2940
        %v2957 = vsub.f32 %v2925, %v2941
        %v2958 = vsub.f32 %v2926, %v2942
        %v2959 = vsub.f32 %v2927, %v2943
        %v2960 = vsub.f32 %v2928, %v2944
        %v2961 = vsub.f32 %v2929, %v2945
        %v2962 = vsub.f32 %v2930, %v2946
        %v2963 = vsub.f32 %v2931, %v2947
        %v2964 = vsub.f32 %v2932, %v2948
        %v2965 = vsub.f32 %v2933, %v2949
        %v2966 = vmax.f32 %v2950, 0.0
        %v2967 = vmax.f32 %v2951, 0.0
        %v2968 = vmax.f32 %v2952, 0.0
        %v2969 = vmax.f32 %v2953, 0.0
        %v2970 = vmax.f32 %v2954, 0.0
        %v2971 = vmax.f32 %v2955, 0.0
        %v2972 = vmax.f32 %v2956, 0.0
        %v2973 = vmax.f32 %v2957, 0.0
        %v2974 = vmax.f32 %v2958, 0.0
        %v2975 = vmax.f32 %v2959, 0.0
        %v2976 = vmax.f32 %v2960, 0.0
        %v2977 = vmax.f32 %v2961, 0.0
        %v2978 = vmax.f32 %v2962, 0.0
        %v2979 = vmax.f32 %v2963, 0.0
        %v2980 = vmax.f32 %v2964, 0.0
        %v2981 = vmax.f32 %v2965, 0.0
        %v2982 = vsub.f32 %v2806, %v2854
        %v2983 = vsub.f32 %v2807, %v2855
        %v2984 = vsub.f32 %v2808, %v2856
        %v2985 = vsub.f32 %v2809, %v2857
        %v2986 = vsub.f32 %v2810, %v2858
        %v2987 = vsub.f32 %v2811, %v2859
        %v2988 = vsub.f32 %v2812, %v2860
        %v2989 = vsub.f32 %v2813, %v2861
        %v2990 = vsub.f32 %v2814, %v2862
        %v2991 = vsub.f32 %v2815, %v2863
        %v2992 = vsub.f32 %v2816, %v2864
        %v2993 = vsub.f32 %v2817, %v2865
        %v2994 = vsub.f32 %v2818, %v2866
        %v2995 = vsub.f32 %v2819, %v2867
        %v2996 = vsub.f32 %v2820, %v2868
        %v2997 = vsub.f32 %v2821, %v2869
        %v2998 = vadd.f32 %v2966, 1e-06
        %v2999 = vadd.f32 %v2967, 1e-06
        %v3000 = vadd.f32 %v2968, 1e-06
        %v3001 = vadd.f32 %v2969, 1e-06
        %v3002 = vadd.f32 %v2970, 1e-06
        %v3003 = vadd.f32 %v2971, 1e-06
        %v3004 = vadd.f32 %v2972, 1e-06
        %v3005 = vadd.f32 %v2973, 1e-06
        %v3006 = vadd.f32 %v2974, 1e-06
        %v3007 = vadd.f32 %v2975, 1e-06
        %v3008 = vadd.f32 %v2976, 1e-06
        %v3009 = vadd.f32 %v2977, 1e-06
        %v3010 = vadd.f32 %v2978, 1e-06
        %v3011 = vadd.f32 %v2979, 1e-06
        %v3012 = vadd.f32 %v2980, 1e-06
        %v3013 = vadd.f32 %v2981, 1e-06
        %v3014 = vrsqrt.pop %v2998
        %v3015 = vrsqrt.pop %v2999
        %v3016 = vrsqrt.pop %v3000
        %v3017 = vrsqrt.pop %v3001
        %v3018 = vrsqrt.pop %v3002
        %v3019 = vrsqrt.pop %v3003
        %v3020 = vrsqrt.pop %v3004
        %v3021 = vrsqrt.pop %v3005
        %v3022 = vrsqrt.pop %v3006
        %v3023 = vrsqrt.pop %v3007
        %v3024 = vrsqrt.pop %v3008
        %v3025 = vrsqrt.pop %v3009
        %v3026 = vrsqrt.pop %v3010
        %v3027 = vrsqrt.pop %v3011
        %v3028 = vrsqrt.pop %v3012
        %v3029 = vrsqrt.pop %v3013
        %v3030 = vmul.f32 %v2982, %v3014
        %v3031 = vmul.f32 %v2983, %v3015
        %v3032 = vmul.f32 %v2984, %v3016
        %v3033 = vmul.f32 %v2985, %v3017
        %v3034 = vmul.f32 %v2986, %v3018
        %v3035 = vmul.f32 %v2987, %v3019
        %v3036 = vmul.f32 %v2988, %v3020
        %v3037 = vmul.f32 %v2989, %v3021
        %v3038 = vmul.f32 %v2990, %v3022
        %v3039 = vmul.f32 %v2991, %v3023
        %v3040 = vmul.f32 %v2992, %v3024
        %v3041 = vmul.f32 %v2993, %v3025
        %v3042 = vmul.f32 %v2994, %v3026
        %v3043 = vmul.f32 %v2995, %v3027
        %v3044 = vmul.f32 %v2996, %v3028
        %v3045 = vmul.f32 %v2997, %v3029
        %v3047 = vlaneseq
        %v3048 = vshrl.u32 %v3047, 7
        %v3049 = vsub.s32 0, %v3048
        %v3050 = vrot.slane %v514, %v3049
        %v3052 = vmul.f32 %v3030, %v3050
        %v3053 = vmul.f32 %v3031, %v3050
        %v3054 = vmul.f32 %v3032, %v3050
        %v3055 = vmul.f32 %v3033, %v3050
        %v3056 = vmul.f32 %v3034, %v3050
        %v3057 = vmul.f32 %v3035, %v3050
        %v3058 = vmul.f32 %v3036, %v3050
        %v3059 = vmul.f32 %v3037, %v3050
        %v3060 = vmul.f32 %v3038, %v3050
        %v3061 = vmul.f32 %v3039, %v3050
        %v3062 = vmul.f32 %v3040, %v3050
        %v3063 = vmul.f32 %v3041, %v3050
        %v3064 = vmul.f32 %v3042, %v3050
        %v3065 = vmul.f32 %v3043, %v3050
        %v3066 = vmul.f32 %v3044, %v3050
        %v3067 = vmul.f32 %v3045, %v3050
        %v3069 = vlaneseq
        %v3070 = vshrl.u32 %v3069, 7
        %v3071 = vsub.s32 0, %v3070
        %v3072 = vrot.slane %v515, %v3071
        %v3074 = vadd.f32 %v3052, %v3072
        %v3075 = vadd.f32 %v3053, %v3072
        %v3076 = vadd.f32 %v3054, %v3072
        %v3077 = vadd.f32 %v3055, %v3072
        %v3078 = vadd.f32 %v3056, %v3072
        %v3079 = vadd.f32 %v3057, %v3072
        %v3080 = vadd.f32 %v3058, %v3072
        %v3081 = vadd.f32 %v3059, %v3072
        %v3082 = vadd.f32 %v3060, %v3072
        %v3083 = vadd.f32 %v3061, %v3072
        %v3084 = vadd.f32 %v3062, %v3072
        %v3085 = vadd.f32 %v3063, %v3072
        %v3086 = vadd.f32 %v3064, %v3072
        %v3087 = vadd.f32 %v3065, %v3072
        %v3088 = vadd.f32 %v3066, %v3072
        %v3089 = vadd.f32 %v3067, %v3072
        %v3090 = vpack.c.bf16 %v3075, %v3074
        %v3091 = vpack.c.bf16 %v3077, %v3076
        %v3092 = vpack.c.bf16 %v3079, %v3078
        %v3093 = vpack.c.bf16 %v3081, %v3080
        %v3094 = vpack.c.bf16 %v3083, %v3082
        %v3095 = vpack.c.bf16 %v3085, %v3084
        %v3096 = vpack.c.bf16 %v3087, %v3086
        %v3097 = vpack.c.bf16 %v3089, %v3088
        %v3098 = vld [vmem:[#allocation7] sm:$0xf]
        %v3099 = vld [vmem:[#allocation7 + $0x4] sm:$0xf]
        %v3100 = vld [vmem:[#allocation7 + $0x8] sm:$0xf]
        %v3101 = vld [vmem:[#allocation7 + $0xc] sm:$0xf]
        %v3102 = vld [vmem:[#allocation7 + $0x10] sm:$0xf]
        %v3103 = vld [vmem:[#allocation7 + $0x14] sm:$0xf]
        %v3104 = vld [vmem:[#allocation7 + $0x18] sm:$0xf]
        %v3105 = vld [vmem:[#allocation7 + $0x1c] sm:$0xf]
        %v3106 = vld [vmem:[#allocation7 + $0x20] sm:$0xf]
        %v3107 = vld [vmem:[#allocation7 + $0x24] sm:$0xf]
        %v3108 = vld [vmem:[#allocation7 + $0x28] sm:$0xf]
        %v3109 = vld [vmem:[#allocation7 + $0x2c] sm:$0xf]
        %v3110 = vld [vmem:[#allocation7 + $0x30] sm:$0xf]
        %v3111 = vld [vmem:[#allocation7 + $0x34] sm:$0xf]
        %v3112 = vld [vmem:[#allocation7 + $0x38] sm:$0xf]
        %v3113 = vld [vmem:[#allocation7 + $0x3c] sm:$0xf]
        %v3115 = vlaneseq
        %v3116 = vshrl.u32 %v3115, 7
        %v3117 = vsub.s32 0, %v3116
        %v3118 = vrot.slane %v516, %v3117
        %v3136 = vunpack.c.l.b16 %v3098
        %v3137 = vunpack.c.l.b16 %v3099
        %v3138 = vunpack.c.l.b16 %v3100
        %v3139 = vunpack.c.l.b16 %v3101
        %v3140 = vunpack.c.l.b16 %v3102
        %v3141 = vunpack.c.l.b16 %v3103
        %v3142 = vunpack.c.l.b16 %v3104
        %v3143 = vunpack.c.l.b16 %v3105
        %v3144 = vunpack.c.l.b16 %v3106
        %v3145 = vunpack.c.l.b16 %v3107
        %v3146 = vunpack.c.l.b16 %v3108
        %v3147 = vunpack.c.l.b16 %v3109
        %v3148 = vunpack.c.l.b16 %v3110
        %v3149 = vunpack.c.l.b16 %v3111
        %v3150 = vunpack.c.l.b16 %v3112
        %v3151 = vunpack.c.l.b16 %v3113
        %v3152 = vpack.c.b16 %v3137, %v3136
        %v3153 = vpack.c.b16 %v3139, %v3138
        %v3154 = vpack.c.b16 %v3141, %v3140
        %v3155 = vpack.c.b16 %v3143, %v3142
        %v3156 = vpack.c.b16 %v3145, %v3144
        %v3157 = vpack.c.b16 %v3147, %v3146
        %v3158 = vpack.c.b16 %v3149, %v3148
        %v3159 = vpack.c.b16 %v3151, %v3150
        %3168 = vmatprep.subr.bf16.mxu0 0
        %3169 = vmatpush1.bf16.msra.mxu0 %v3152
        %3170 = vmatprep.subr.bf16.mxu0 0
        %3171 = vmatpush1.bf16.msra.mxu0 %v3153
        %3172 = vmatprep.subr.bf16.mxu0 0
        %3173 = vmatpush1.bf16.msra.mxu0 %v3154
        %3174 = vmatprep.subr.bf16.mxu0 0
        %3175 = vmatpush1.bf16.msra.mxu0 %v3155
        %3176 = vmatprep.subr.bf16.mxu0 0
        %3177 = vmatpush1.bf16.msra.mxu0 %v3156
        %3178 = vmatprep.subr.bf16.mxu0 0
        %3179 = vmatpush1.bf16.msra.mxu0 %v3157
        %3180 = vmatprep.subr.bf16.mxu0 0
        %3181 = vmatpush1.bf16.msra.mxu0 %v3158
        %3182 = vmatprep.subr.bf16.mxu0 0
        %3183 = vmatpush1.bf16.msra.mxu0 %v3159
        %3184 = vmatprep.subr.bf16.mxu0 0
        %3185 = vmatpush1.bf16.msra.mxu0 0
        %3186 = vmatprep.subr.bf16.mxu0 0
        %3187 = vmatpush1.bf16.msra.mxu0 0
        %3188 = vmatprep.subr.bf16.mxu0 0
        %3189 = vmatpush1.bf16.msra.mxu0 0
        %3190 = vmatprep.subr.bf16.mxu0 0
        %3191 = vmatpush1.bf16.msra.mxu0 0
        %3192 = vmatprep.subr.bf16.mxu0 0
        %3193 = vmatpush1.bf16.msra.mxu0 0
        %3194 = vmatprep.subr.bf16.mxu0 0
        %3195 = vmatpush1.bf16.msra.mxu0 0
        %3196 = vmatprep.subr.bf16.mxu0 0
        %3197 = vmatpush1.bf16.msra.mxu0 0
        %3198 = vmatprep.subr.bf16.mxu0 0
        %3199 = vmatpush1.bf16.msra.mxu0 0
        %3200 = vmatprep.mubr.bf16.mxu0 0
        %3201 = vmatmul.mubr.bf16.gmra.mrb[0].mxu0 %v3090
        %v3202 = vpop.f32.mrb[0].mxu0
        %v3203 = vadd.f32 %v3118, %v3202
        %v3204 = vpop.f32.mrb[0].mxu0
        %v3205 = vpop.f32.mrb[0].mxu0
        %v3206 = vadd.f32 %v3118, %v3205
        %v3207 = vpop.f32.mrb[0].mxu0
        %3208 = vmatprep.mubr.bf16.mxu0 0
        %3209 = vmatmul.mubr.bf16.gmra.mrb[0].mxu0 %v3091
        %v3210 = vpop.f32.mrb[0].mxu0
        %v3211 = vadd.f32 %v3118, %v3210
        %v3212 = vpop.f32.mrb[0].mxu0
        %v3213 = vpop.f32.mrb[0].mxu0
        %v3214 = vadd.f32 %v3118, %v3213
        %v3215 = vpop.f32.mrb[0].mxu0
        %3216 = vmatprep.mubr.bf16.mxu0 0
        %3217 = vmatmul.mubr.bf16.gmra.mrb[0].mxu0 %v3092
        %v3218 = vpop.f32.mrb[0].mxu0
        %v3219 = vadd.f32 %v3118, %v3218
        %v3220 = vpop.f32.mrb[0].mxu0
        %v3221 = vpop.f32.mrb[0].mxu0
        %v3222 = vadd.f32 %v3118, %v3221
        %v3223 = vpop.f32.mrb[0].mxu0
        %3224 = vmatprep.mubr.bf16.mxu0 0
        %3225 = vmatmul.mubr.bf16.gmra.mrb[0].mxu0 %v3093
        %v3226 = vpop.f32.mrb[0].mxu0
        %v3227 = vadd.f32 %v3118, %v3226
        %v3228 = vpop.f32.mrb[0].mxu0
        %v3229 = vpop.f32.mrb[0].mxu0
        %v3230 = vadd.f32 %v3118, %v3229
        %v3231 = vpop.f32.mrb[0].mxu0
        %3232 = vmatprep.mubr.bf16.mxu0 0
        %3233 = vmatmul.mubr.bf16.gmra.mrb[0].mxu0 %v3094
        %v3234 = vpop.f32.mrb[0].mxu0
        %v3235 = vadd.f32 %v3118, %v3234
        %v3236 = vpop.f32.mrb[0].mxu0
        %v3237 = vpop.f32.mrb[0].mxu0
        %v3238 = vadd.f32 %v3118, %v3237
        %v3239 = vpop.f32.mrb[0].mxu0
        %3240 = vmatprep.mubr.bf16.mxu0 0
        %3241 = vmatmul.mubr.bf16.gmra.mrb[0].mxu0 %v3095
        %v3242 = vpop.f32.mrb[0].mxu0
        %v3243 = vadd.f32 %v3118, %v3242
        %v3244 = vpop.f32.mrb[0].mxu0
        %v3245 = vpop.f32.mrb[0].mxu0
        %v3246 = vadd.f32 %v3118, %v3245
        %v3247 = vpop.f32.mrb[0].mxu0
        %3248 = vmatprep.mubr.bf16.mxu0 0
        %3249 = vmatmul.mubr.bf16.gmra.mrb[0].mxu0 %v3096
        %v3250 = vpop.f32.mrb[0].mxu0
        %v3251 = vadd.f32 %v3118, %v3250
        %v3252 = vpop.f32.mrb[0].mxu0
        %v3253 = vpop.f32.mrb[0].mxu0
        %v3254 = vadd.f32 %v3118, %v3253
        %v3255 = vpop.f32.mrb[0].mxu0
        %3256 = vmatprep.mubr.bf16.mxu0 0
        %3257 = vmatmul.mubr.bf16.gmra.mrb[0].mxu0 %v3097
        %v3258 = vpop.f32.mrb[0].mxu0
        %v3259 = vadd.f32 %v3118, %v3258
        %v3260 = vpop.f32.mrb[0].mxu0
        %v3261 = vpop.f32.mrb[0].mxu0
        %v3262 = vadd.f32 %v3118, %v3261
        %v3263 = vpop.f32.mrb[0].mxu0
        %3264 = vdwg.mxu0
        %v3265 = vmul.f32 %v3203, 0.5
        %v3266 = vmul.f32 %v3206, 0.5
        %v3267 = vmul.f32 %v3211, 0.5
        %v3268 = vmul.f32 %v3214, 0.5
        %v3269 = vmul.f32 %v3219, 0.5
        %v3270 = vmul.f32 %v3222, 0.5
        %v3271 = vmul.f32 %v3227, 0.5
        %v3272 = vmul.f32 %v3230, 0.5
        %v3273 = vmul.f32 %v3235, 0.5
        %v3274 = vmul.f32 %v3238, 0.5
        %v3275 = vmul.f32 %v3243, 0.5
        %v3276 = vmul.f32 %v3246, 0.5
        %v3277 = vmul.f32 %v3251, 0.5
        %v3278 = vmul.f32 %v3254, 0.5
        %v3279 = vmul.f32 %v3259, 0.5
        %v3280 = vmul.f32 %v3262, 0.5
        %v3281 = vmul.f32 %v3203, 0.70710677
        %v3282 = vmul.f32 %v3206, 0.70710677
        %v3283 = vmul.f32 %v3211, 0.70710677
        %v3284 = vmul.f32 %v3214, 0.70710677
        %v3285 = vmul.f32 %v3219, 0.70710677
        %v3286 = vmul.f32 %v3222, 0.70710677
        %v3287 = vmul.f32 %v3227, 0.70710677
        %v3288 = vmul.f32 %v3230, 0.70710677
        %v3289 = vmul.f32 %v3235, 0.70710677
        %v3290 = vmul.f32 %v3238, 0.70710677
        %v3291 = vmul.f32 %v3243, 0.70710677
        %v3292 = vmul.f32 %v3246, 0.70710677
        %v3293 = vmul.f32 %v3251, 0.70710677
        %v3294 = vmul.f32 %v3254, 0.70710677
        %v3295 = vmul.f32 %v3259, 0.70710677
        %v3296 = vmul.f32 %v3262, 0.70710677
        %v3297 = verf.f32.pop %v3281
        %v3298 = verf.f32.pop %v3282
        %v3299 = verf.f32.pop %v3283
        %v3300 = verf.f32.pop %v3284
        %v3301 = verf.f32.pop %v3285
        %v3302 = verf.f32.pop %v3286
        %v3303 = verf.f32.pop %v3287
        %v3304 = verf.f32.pop %v3288
        %v3305 = verf.f32.pop %v3289
        %v3306 = verf.f32.pop %v3290
        %v3307 = verf.f32.pop %v3291
        %v3308 = verf.f32.pop %v3292
        %v3309 = verf.f32.pop %v3293
        %v3310 = verf.f32.pop %v3294
        %v3311 = verf.f32.pop %v3295
        %v3312 = verf.f32.pop %v3296
        %v3313 = vadd.f32 %v3297, 1.0
        %v3314 = vadd.f32 %v3298, 1.0
        %v3315 = vadd.f32 %v3299, 1.0
        %v3316 = vadd.f32 %v3300, 1.0
        %v3317 = vadd.f32 %v3301, 1.0
        %v3318 = vadd.f32 %v3302, 1.0
        %v3319 = vadd.f32 %v3303, 1.0
        %v3320 = vadd.f32 %v3304, 1.0
        %v3321 = vadd.f32 %v3305, 1.0
        %v3322 = vadd.f32 %v3306, 1.0
        %v3323 = vadd.f32 %v3307, 1.0
        %v3324 = vadd.f32 %v3308, 1.0
        %v3325 = vadd.f32 %v3309, 1.0
        %v3326 = vadd.f32 %v3310, 1.0
        %v3327 = vadd.f32 %v3311, 1.0
        %v3328 = vadd.f32 %v3312, 1.0
        %v3329 = vmul.f32 %v3265, %v3313
        %v3330 = vmul.f32 %v3266, %v3314
        %v3331 = vmul.f32 %v3267, %v3315
        %v3332 = vmul.f32 %v3268, %v3316
        %v3333 = vmul.f32 %v3269, %v3317
        %v3334 = vmul.f32 %v3270, %v3318
        %v3335 = vmul.f32 %v3271, %v3319
        %v3336 = vmul.f32 %v3272, %v3320
        %v3337 = vmul.f32 %v3273, %v3321
        %v3338 = vmul.f32 %v3274, %v3322
        %v3339 = vmul.f32 %v3275, %v3323
        %v3340 = vmul.f32 %v3276, %v3324
        %v3341 = vmul.f32 %v3277, %v3325
        %v3342 = vmul.f32 %v3278, %v3326
        %v3343 = vmul.f32 %v3279, %v3327
        %v3344 = vmul.f32 %v3280, %v3328
        %v3345 = vpack.c.bf16 %v3330, %v3329
        %v3346 = vpack.c.bf16 %v3332, %v3331
        %v3347 = vpack.c.bf16 %v3334, %v3333
        %v3348 = vpack.c.bf16 %v3336, %v3335
        %v3349 = vpack.c.bf16 %v3338, %v3337
        %v3350 = vpack.c.bf16 %v3340, %v3339
        %v3351 = vpack.c.bf16 %v3342, %v3341
        %v3352 = vpack.c.bf16 %v3344, %v3343
        %v3353 = vld [vmem:[#allocation8] sm:$0xf]
        %v3354 = vld [vmem:[#allocation8 + $0x4] sm:$0xf]
        %v3355 = vld [vmem:[#allocation8 + $0x8] sm:$0xf]
        %v3356 = vld [vmem:[#allocation8 + $0xc] sm:$0xf]
        %v3357 = vld [vmem:[#allocation8 + $0x10] sm:$0xf]
        %v3358 = vld [vmem:[#allocation8 + $0x14] sm:$0xf]
        %v3359 = vld [vmem:[#allocation8 + $0x18] sm:$0xf]
        %v3360 = vld [vmem:[#allocation8 + $0x1c] sm:$0xf]
        %v3361 = vld [vmem:[#allocation8 + $0x20] sm:$0xf]
        %v3362 = vld [vmem:[#allocation8 + $0x24] sm:$0xf]
        %v3363 = vld [vmem:[#allocation8 + $0x28] sm:$0xf]
        %v3364 = vld [vmem:[#allocation8 + $0x2c] sm:$0xf]
        %v3365 = vld [vmem:[#allocation8 + $0x30] sm:$0xf]
        %v3366 = vld [vmem:[#allocation8 + $0x34] sm:$0xf]
        %v3367 = vld [vmem:[#allocation8 + $0x38] sm:$0xf]
        %v3368 = vld [vmem:[#allocation8 + $0x3c] sm:$0xf]
        %v3370 = vlaneseq
        %v3371 = vshrl.u32 %v3370, 7
        %v3372 = vsub.s32 0, %v3371
        %v3373 = vrot.slane %v517, %v3372
        %v3391 = vunpack.c.l.b16 %v3353
        %v3392 = vunpack.c.l.b16 %v3354
        %v3393 = vunpack.c.l.b16 %v3355
        %v3394 = vunpack.c.l.b16 %v3356
        %v3395 = vunpack.c.l.b16 %v3357
        %v3396 = vunpack.c.l.b16 %v3358
        %v3397 = vunpack.c.l.b16 %v3359
        %v3398 = vunpack.c.l.b16 %v3360
        %v3399 = vunpack.c.l.b16 %v3361
        %v3400 = vunpack.c.l.b16 %v3362
        %v3401 = vunpack.c.l.b16 %v3363
        %v3402 = vunpack.c.l.b16 %v3364
        %v3403 = vunpack.c.l.b16 %v3365
        %v3404 = vunpack.c.l.b16 %v3366
        %v3405 = vunpack.c.l.b16 %v3367
        %v3406 = vunpack.c.l.b16 %v3368
        %v3407 = vpack.c.b16 %v3392, %v3391
        %v3408 = vpack.c.b16 %v3394, %v3393
        %v3409 = vpack.c.b16 %v3396, %v3395
        %v3410 = vpack.c.b16 %v3398, %v3397
        %v3411 = vpack.c.b16 %v3400, %v3399
        %v3412 = vpack.c.b16 %v3402, %v3401
        %v3413 = vpack.c.b16 %v3404, %v3403
        %v3414 = vpack.c.b16 %v3406, %v3405
        %3423 = vmatprep.subr.bf16.mxu0 0
        %3424 = vmatpush1.bf16.msra.mxu0 %v3407
        %3425 = vmatprep.subr.bf16.mxu0 0
        %3426 = vmatpush1.bf16.msra.mxu0 %v3408
        %3427 = vmatprep.subr.bf16.mxu0 0
        %3428 = vmatpush1.bf16.msra.mxu0 %v3409
        %3429 = vmatprep.subr.bf16.mxu0 0
        %3430 = vmatpush1.bf16.msra.mxu0 %v3410
        %3431 = vmatprep.subr.bf16.mxu0 0
        %3432 = vmatpush1.bf16.msra.mxu0 %v3411
        %3433 = vmatprep.subr.bf16.mxu0 0
        %3434 = vmatpush1.bf16.msra.mxu0 %v3412
        %3435 = vmatprep.subr.bf16.mxu0 0
        %3436 = vmatpush1.bf16.msra.mxu0 %v3413
        %3437 = vmatprep.subr.bf16.mxu0 0
        %3438 = vmatpush1.bf16.msra.mxu0 %v3414
        %3439 = vmatprep.subr.bf16.mxu0 0
        %3440 = vmatpush1.bf16.msra.mxu0 0
        %3441 = vmatprep.subr.bf16.mxu0 0
        %3442 = vmatpush1.bf16.msra.mxu0 0
        %3443 = vmatprep.subr.bf16.mxu0 0
        %3444 = vmatpush1.bf16.msra.mxu0 0
        %3445 = vmatprep.subr.bf16.mxu0 0
        %3446 = vmatpush1.bf16.msra.mxu0 0
        %3447 = vmatprep.subr.bf16.mxu0 0
        %3448 = vmatpush1.bf16.msra.mxu0 0
        %3449 = vmatprep.subr.bf16.mxu0 0
        %3450 = vmatpush1.bf16.msra.mxu0 0
        %3451 = vmatprep.subr.bf16.mxu0 0
        %3452 = vmatpush1.bf16.msra.mxu0 0
        %3453 = vmatprep.subr.bf16.mxu0 0
        %3454 = vmatpush1.bf16.msra.mxu0 0
        %3455 = vmatprep.mubr.bf16.mxu0 0
        %3456 = vmatmul.mubr.bf16.gmra.mrb[0].mxu0 %v3345
        %v3457 = vpop.f32.mrb[0].mxu0
        %v3458 = vadd.f32 %v3373, %v3457
        %v3459 = vpop.f32.mrb[0].mxu0
        %v3460 = vpop.f32.mrb[0].mxu0
        %v3461 = vadd.f32 %v3373, %v3460
        %v3462 = vpop.f32.mrb[0].mxu0
        %3463 = vmatprep.mubr.bf16.mxu0 0
        %3464 = vmatmul.mubr.bf16.gmra.mrb[0].mxu0 %v3346
        %v3465 = vpop.f32.mrb[0].mxu0
        %v3466 = vadd.f32 %v3373, %v3465
        %v3467 = vpop.f32.mrb[0].mxu0
        %v3468 = vpop.f32.mrb[0].mxu0
        %v3469 = vadd.f32 %v3373, %v3468
        %v3470 = vpop.f32.mrb[0].mxu0
        %3471 = vmatprep.mubr.bf16.mxu0 0
        %3472 = vmatmul.mubr.bf16.gmra.mrb[0].mxu0 %v3347
        %v3473 = vpop.f32.mrb[0].mxu0
        %v3474 = vadd.f32 %v3373, %v3473
        %v3475 = vpop.f32.mrb[0].mxu0
        %v3476 = vpop.f32.mrb[0].mxu0
        %v3477 = vadd.f32 %v3373, %v3476
        %v3478 = vpop.f32.mrb[0].mxu0
        %3479 = vmatprep.mubr.bf16.mxu0 0
        %3480 = vmatmul.mubr.bf16.gmra.mrb[0].mxu0 %v3348
        %v3481 = vpop.f32.mrb[0].mxu0
        %v3482 = vadd.f32 %v3373, %v3481
        %v3483 = vpop.f32.mrb[0].mxu0
        %v3484 = vpop.f32.mrb[0].mxu0
        %v3485 = vadd.f32 %v3373, %v3484
        %v3486 = vpop.f32.mrb[0].mxu0
        %3487 = vmatprep.mubr.bf16.mxu0 0
        %3488 = vmatmul.mubr.bf16.gmra.mrb[0].mxu0 %v3349
        %v3489 = vpop.f32.mrb[0].mxu0
        %v3490 = vadd.f32 %v3373, %v3489
        %v3491 = vpop.f32.mrb[0].mxu0
        %v3492 = vpop.f32.mrb[0].mxu0
        %v3493 = vadd.f32 %v3373, %v3492
        %v3494 = vpop.f32.mrb[0].mxu0
        %3495 = vmatprep.mubr.bf16.mxu0 0
        %3496 = vmatmul.mubr.bf16.gmra.mrb[0].mxu0 %v3350
        %v3497 = vpop.f32.mrb[0].mxu0
        %v3498 = vadd.f32 %v3373, %v3497
        %v3499 = vpop.f32.mrb[0].mxu0
        %v3500 = vpop.f32.mrb[0].mxu0
        %v3501 = vadd.f32 %v3373, %v3500
        %v3502 = vpop.f32.mrb[0].mxu0
        %3503 = vmatprep.mubr.bf16.mxu0 0
        %3504 = vmatmul.mubr.bf16.gmra.mrb[0].mxu0 %v3351
        %v3505 = vpop.f32.mrb[0].mxu0
        %v3506 = vadd.f32 %v3373, %v3505
        %v3507 = vpop.f32.mrb[0].mxu0
        %v3508 = vpop.f32.mrb[0].mxu0
        %v3509 = vadd.f32 %v3373, %v3508
        %v3510 = vpop.f32.mrb[0].mxu0
        %3511 = vmatprep.mubr.bf16.mxu0 0
        %3512 = vmatmul.mubr.bf16.gmra.mrb[0].mxu0 %v3352
        %v3513 = vpop.f32.mrb[0].mxu0
        %v3514 = vadd.f32 %v3373, %v3513
        %v3515 = vpop.f32.mrb[0].mxu0
        %v3516 = vpop.f32.mrb[0].mxu0
        %v3517 = vadd.f32 %v3373, %v3516
        %v3518 = vpop.f32.mrb[0].mxu0
        %3519 = vdwg.mxu0
        %v3521 = vlaneseq
        %v3522 = vshrl.u32 %v3521, 7
        %v3523 = vsub.s32 0, %v3522
        %v3524 = vrot.slane %v518, %v3523
        %v3526 = vmul.f32 %v3524, %v3458
        %v3527 = vmul.f32 %v3524, %v3461
        %v3528 = vmul.f32 %v3524, %v3466
        %v3529 = vmul.f32 %v3524, %v3469
        %v3530 = vmul.f32 %v3524, %v3474
        %v3531 = vmul.f32 %v3524, %v3477
        %v3532 = vmul.f32 %v3524, %v3482
        %v3533 = vmul.f32 %v3524, %v3485
        %v3534 = vmul.f32 %v3524, %v3490
        %v3535 = vmul.f32 %v3524, %v3493
        %v3536 = vmul.f32 %v3524, %v3498
        %v3537 = vmul.f32 %v3524, %v3501
        %v3538 = vmul.f32 %v3524, %v3506
        %v3539 = vmul.f32 %v3524, %v3509
        %v3540 = vmul.f32 %v3524, %v3514
        %v3541 = vmul.f32 %v3524, %v3517
        %v3542 = vadd.f32 %v1572, %v3526
        %v3543 = vadd.f32 %v1571, %v3527
        %v3544 = vadd.f32 %v1570, %v3528
        %v3545 = vadd.f32 %v1569, %v3529
        %v3546 = vadd.f32 %v1568, %v3530
        %v3547 = vadd.f32 %v1567, %v3531
        %v3548 = vadd.f32 %v1566, %v3532
        %v3549 = vadd.f32 %v1565, %v3533
        %v3550 = vadd.f32 %v1564, %v3534
        %v3551 = vadd.f32 %v1563, %v3535
        %v3552 = vadd.f32 %v1562, %v3536
        %v3553 = vadd.f32 %v1561, %v3537
        %v3554 = vadd.f32 %v1560, %v3538
        %v3555 = vadd.f32 %v1559, %v3539
        %v3556 = vadd.f32 %v1558, %v3540
        %v3557 = vadd.f32 %v1557, %v3541
        %v3558 = vpack.c.bf16 %v3543, %v3542
        %v3559 = vpack.c.bf16 %v3545, %v3544
        %v3560 = vpack.c.bf16 %v3547, %v3546
        %v3561 = vpack.c.bf16 %v3549, %v3548
        %v3562 = vpack.c.bf16 %v3551, %v3550
        %v3563 = vpack.c.bf16 %v3553, %v3552
        %v3564 = vpack.c.bf16 %v3555, %v3554
        %v3565 = vpack.c.bf16 %v3557, %v3556
        %v3566 = vld [vmem:[#allocation10] sm:$0xf]
        %v3567 = vld [vmem:[#allocation10 + $0x4] sm:$0xf]
        %v3568 = vld [vmem:[#allocation10 + $0x8] sm:$0xf]
        %v3569 = vld [vmem:[#allocation10 + $0xc] sm:$0xf]
        %v3570 = vld [vmem:[#allocation10 + $0x10] sm:$0xf]
        %v3571 = vld [vmem:[#allocation10 + $0x14] sm:$0xf]
        %v3572 = vld [vmem:[#allocation10 + $0x18] sm:$0xf]
        %v3573 = vld [vmem:[#allocation10 + $0x1c] sm:$0xf]
        %v3574 = vld [vmem:[#allocation10 + $0x20] sm:$0xf]
        %v3575 = vld [vmem:[#allocation10 + $0x24] sm:$0xf]
        %v3576 = vld [vmem:[#allocation10 + $0x28] sm:$0xf]
        %v3577 = vld [vmem:[#allocation10 + $0x2c] sm:$0xf]
        %v3578 = vld [vmem:[#allocation10 + $0x30] sm:$0xf]
        %v3579 = vld [vmem:[#allocation10 + $0x34] sm:$0xf]
        %v3580 = vld [vmem:[#allocation10 + $0x38] sm:$0xf]
        %v3581 = vld [vmem:[#allocation10 + $0x3c] sm:$0xf]
        %v3583 = vlaneseq
        %v3584 = vshrl.u32 %v3583, 7
        %v3585 = vsub.s32 0, %v3584
        %v3586 = vrot.slane %v519, %v3585
        %v3604 = vunpack.c.l.b16 %v3566
        %v3605 = vunpack.c.l.b16 %v3567
        %v3606 = vunpack.c.l.b16 %v3568
        %v3607 = vunpack.c.l.b16 %v3569
        %v3608 = vunpack.c.l.b16 %v3570
        %v3609 = vunpack.c.l.b16 %v3571
        %v3610 = vunpack.c.l.b16 %v3572
        %v3611 = vunpack.c.l.b16 %v3573
        %v3612 = vunpack.c.l.b16 %v3574
        %v3613 = vunpack.c.l.b16 %v3575
        %v3614 = vunpack.c.l.b16 %v3576
        %v3615 = vunpack.c.l.b16 %v3577
        %v3616 = vunpack.c.l.b16 %v3578
        %v3617 = vunpack.c.l.b16 %v3579
        %v3618 = vunpack.c.l.b16 %v3580
        %v3619 = vunpack.c.l.b16 %v3581
        %v3620 = vpack.c.b16 %v3605, %v3604
        %v3621 = vpack.c.b16 %v3607, %v3606
        %v3622 = vpack.c.b16 %v3609, %v3608
        %v3623 = vpack.c.b16 %v3611, %v3610
        %v3624 = vpack.c.b16 %v3613, %v3612
        %v3625 = vpack.c.b16 %v3615, %v3614
        %v3626 = vpack.c.b16 %v3617, %v3616
        %v3627 = vpack.c.b16 %v3619, %v3618
        %3636 = vmatprep.subr.bf16.mxu0 0
        %3637 = vmatpush1.bf16.msra.mxu0 %v3620
        %3638 = vmatprep.subr.bf16.mxu0 0
        %3639 = vmatpush1.bf16.msra.mxu0 %v3621
        %3640 = vmatprep.subr.bf16.mxu0 0
        %3641 = vmatpush1.bf16.msra.mxu0 %v3622
        %3642 = vmatprep.subr.bf16.mxu0 0
        %3643 = vmatpush1.bf16.msra.mxu0 %v3623
        %3644 = vmatprep.subr.bf16.mxu0 0
        %3645 = vmatpush1.bf16.msra.mxu0 %v3624
        %3646 = vmatprep.subr.bf16.mxu0 0
        %3647 = vmatpush1.bf16.msra.mxu0 %v3625
        %3648 = vmatprep.subr.bf16.mxu0 0
        %3649 = vmatpush1.bf16.msra.mxu0 %v3626
        %3650 = vmatprep.subr.bf16.mxu0 0
        %3651 = vmatpush1.bf16.msra.mxu0 %v3627
        %3652 = vmatprep.subr.bf16.mxu0 0
        %3653 = vmatpush1.bf16.msra.mxu0 0
        %3654 = vmatprep.subr.bf16.mxu0 0
        %3655 = vmatpush1.bf16.msra.mxu0 0
        %3656 = vmatprep.subr.bf16.mxu0 0
        %3657 = vmatpush1.bf16.msra.mxu0 0
        %3658 = vmatprep.subr.bf16.mxu0 0
        %3659 = vmatpush1.bf16.msra.mxu0 0
        %3660 = vmatprep.subr.bf16.mxu0 0
        %3661 = vmatpush1.bf16.msra.mxu0 0
        %3662 = vmatprep.subr.bf16.mxu0 0
        %3663 = vmatpush1.bf16.msra.mxu0 0
        %3664 = vmatprep.subr.bf16.mxu0 0
        %3665 = vmatpush1.bf16.msra.mxu0 0
        %3666 = vmatprep.subr.bf16.mxu0 0
        %3667 = vmatpush1.bf16.msra.mxu0 0
        %3668 = vmatprep.mubr.bf16.mxu0 0
        %3669 = vmatmul.mubr.bf16.gmra.mrb[0].mxu0 %v3558
        %v3670 = vpop.f32.mrb[0].mxu0
        %v3671 = vadd.f32 %v3586, %v3670
        %v3672 = vpop.f32.mrb[0].mxu0
        %v3673 = vpop.f32.mrb[0].mxu0
        %v3674 = vadd.f32 %v3586, %v3673
        %v3675 = vpop.f32.mrb[0].mxu0
        %3676 = vmatprep.mubr.bf16.mxu0 0
        %3677 = vmatmul.mubr.bf16.gmra.mrb[0].mxu0 %v3559
        %v3678 = vpop.f32.mrb[0].mxu0
        %v3679 = vadd.f32 %v3586, %v3678
        %v3680 = vpop.f32.mrb[0].mxu0
        %v3681 = vpop.f32.mrb[0].mxu0
        %v3682 = vadd.f32 %v3586, %v3681
        %v3683 = vpop.f32.mrb[0].mxu0
        %3684 = vmatprep.mubr.bf16.mxu0 0
        %3685 = vmatmul.mubr.bf16.gmra.mrb[0].mxu0 %v3560
        %v3686 = vpop.f32.mrb[0].mxu0
        %v3687 = vadd.f32 %v3586, %v3686
        %v3688 = vpop.f32.mrb[0].mxu0
        %v3689 = vpop.f32.mrb[0].mxu0
        %v3690 = vadd.f32 %v3586, %v3689
        %v3691 = vpop.f32.mrb[0].mxu0
        %3692 = vmatprep.mubr.bf16.mxu0 0
        %3693 = vmatmul.mubr.bf16.gmra.mrb[0].mxu0 %v3561
        %v3694 = vpop.f32.mrb[0].mxu0
        %v3695 = vadd.f32 %v3586, %v3694
        %v3696 = vpop.f32.mrb[0].mxu0
        %v3697 = vpop.f32.mrb[0].mxu0
        %v3698 = vadd.f32 %v3586, %v3697
        %v3699 = vpop.f32.mrb[0].mxu0
        %3700 = vmatprep.mubr.bf16.mxu0 0
        %3701 = vmatmul.mubr.bf16.gmra.mrb[0].mxu0 %v3562
        %v3702 = vpop.f32.mrb[0].mxu0
        %v3703 = vadd.f32 %v3586, %v3702
        %v3704 = vpop.f32.mrb[0].mxu0
        %v3705 = vpop.f32.mrb[0].mxu0
        %v3706 = vadd.f32 %v3586, %v3705
        %v3707 = vpop.f32.mrb[0].mxu0
        %3708 = vmatprep.mubr.bf16.mxu0 0
        %3709 = vmatmul.mubr.bf16.gmra.mrb[0].mxu0 %v3563
        %v3710 = vpop.f32.mrb[0].mxu0
        %v3711 = vadd.f32 %v3586, %v3710
        %v3712 = vpop.f32.mrb[0].mxu0
        %v3713 = vpop.f32.mrb[0].mxu0
        %v3714 = vadd.f32 %v3586, %v3713
        %v3715 = vpop.f32.mrb[0].mxu0
        %3716 = vmatprep.mubr.bf16.mxu0 0
        %3717 = vmatmul.mubr.bf16.gmra.mrb[0].mxu0 %v3564
        %v3718 = vpop.f32.mrb[0].mxu0
        %v3719 = vadd.f32 %v3586, %v3718
        %v3720 = vpop.f32.mrb[0].mxu0
        %v3721 = vpop.f32.mrb[0].mxu0
        %v3722 = vadd.f32 %v3586, %v3721
        %v3723 = vpop.f32.mrb[0].mxu0
        %3724 = vmatprep.mubr.bf16.mxu0 0
        %3725 = vmatmul.mubr.bf16.gmra.mrb[0].mxu0 %v3565
        %v3726 = vpop.f32.mrb[0].mxu0
        %v3727 = vadd.f32 %v3586, %v3726
        %v3728 = vpop.f32.mrb[0].mxu0
        %v3729 = vpop.f32.mrb[0].mxu0
        %v3730 = vadd.f32 %v3586, %v3729
        %v3731 = vpop.f32.mrb[0].mxu0
        %3732 = vdwg.mxu0
        %3733 = vst [vmem:[%s503] sm:$0xff] %v3671
        %3734 = vst [vmem:[%s503 + $0x8] sm:$0xff] %v3674
        %3735 = vst [vmem:[%s503 + $0x10] sm:$0xff] %v3679
        %3736 = vst [vmem:[%s503 + $0x18] sm:$0xff] %v3682
        %3737 = vst [vmem:[%s503 + $0x20] sm:$0xff] %v3687
        %3738 = vst [vmem:[%s503 + $0x28] sm:$0xff] %v3690
        %3739 = vst [vmem:[%s503 + $0x30] sm:$0xff] %v3695
        %3740 = vst [vmem:[%s503 + $0x38] sm:$0xff] %v3698
        %3741 = vst [vmem:[%s503 + $0x40] sm:$0xff] %v3703
        %3742 = vst [vmem:[%s503 + $0x48] sm:$0xff] %v3706
        %3743 = vst [vmem:[%s503 + $0x50] sm:$0xff] %v3711
        %3744 = vst [vmem:[%s503 + $0x58] sm:$0xff] %v3714
        %3745 = vst [vmem:[%s503 + $0x60] sm:$0xff] %v3719
        %3746 = vst [vmem:[%s503 + $0x68] sm:$0xff] %v3722
        %3747 = vst [vmem:[%s503 + $0x70] sm:$0xff] %v3727
        %3748 = vst [vmem:[%s503 + $0x78] sm:$0xff] %v3730
        %s3749 = sand.u32 %s310, 1
        %s3750 = scalar_lea.sflag [#allocation4], %s3749
        %s3751 = sand.u32 %s310, 1
        %s3752 = smul.addr %s3751, 128
        %s3753 = scalar_lea.vmem [#allocation11], %s3752
        // Predicated region
        $region89: #{tpu_custom_call.1} parent=67 // pred_check
          %p3754 = pneg %p320
        $region90: #{tpu_custom_call.1} parent=67 // pred_check_branch
          %3756 = sbr.rel (%p3754) target = $region92
        $region91: #{tpu_custom_call.1} parent=67 // pred_region
          %s3757 = smul.u32 8, %s36
          %s3759 = ssub.s32 2048, 2048
          %3760 = vsyncadd %s3750, %s3759
          %s3761 = smul.addr %s3757, 2
          %s3762 = smul.addr %s35, 32
          %s3763 = sadd.s32 %s3761, %s3762
          %s3764 = smul.addr %s3763, 128
          %s3765 = scalar_lea.hbm %s12, %s3764
          %s3766 = sshll.u32 %s3753, 4
          %s3767 = int_to_ptr.vmem [resolvable:$true] %s3766
          %3772 = dma.vmem_to_hbm [thread:$0]  %s3767, 2048, %s3765, %s3750, 128, 128, 8
        $region92: #{tpu_custom_call.1} parent=67 // pred_fallthru
          _
      $region68: #{tpu_custom_call.1} parent=5 // pred_fallthru
        _
      %p3773 = scmp.le.s32.totalorder 2, %s26
      // Predicated region
      $region93: #{tpu_custom_call.1} parent=5 // pred_check
        %p3774 = pneg %p3773
      $region94: #{tpu_custom_call.1} parent=5 // pred_check_branch
        %3776 = sbr.rel (%p3774) target = $region96
      $region95: #{tpu_custom_call.1} parent=5 // pred_region
        %s3777 = ssub.s32 %s26, 2
        // Predicated region
        $region97: #{tpu_custom_call.1} parent=95 // pred_check
          %p3778 = pneg %p326
        $region98: #{tpu_custom_call.1} parent=95 // pred_check_branch
          %3780 = sbr.rel (%p3778) target = $region100
        $region99: #{tpu_custom_call.1} parent=95 // pred_region
          %s3781 = sand.u32 %s311, 1
          %s3782 = scalar_lea.sflag [#allocation4], %s3781
          %s3783 = sand.u32 %s311, 1
          %s3784 = smul.addr %s3783, 128
          %s3785 = scalar_lea.vmem [#allocation11], %s3784
          %3786 = dma.done %s3782, 2048
        $region100: #{tpu_custom_call.1} parent=95 // pred_fallthru
          _
      $region96: #{tpu_custom_call.1} parent=5 // pred_fallthru
        _
    $region6: #{tpu_custom_call.1} parent=1 // loop_footer
      %s30 = sadd.s32 1, %s26
    $region7: #{tpu_custom_call.1} parent=1 // loop_footer_branch
      %25 = sbr.rel target = $region3
    $region8: #{tpu_custom_call.1} parent=1 // loop_exit
      _
    %3787 = vsyncpa [#allocation3], 1
    %s3788 = scalar_lea.sflag [#allocation3], 1
    %3789 = vsyncpa %s3788, 1
    %3790 = vsyncpa [#allocation6], 1
    %3791 = vsyncpa [#allocation9], 1
    %3792 = vsyncpa [#allocation4], 1
    %s3793 = scalar_lea.sflag [#allocation4], 1
    %3794 = vsyncpa %s3793, 1

</llo_original>
